<compile_context>
chip_gen: v6e
topology: v6e:2x2x1
jax: 0.10.0
libtpu: 0.0.40
codegen_flags: <defaults>
</compile_context>

<pallas_src>
import functools

import jax
import jax.numpy as jnp
from jax.experimental import pallas as pl
from jax.experimental.pallas import tpu as pltpu


# ----------------------------- in-kernel helpers -----------------------------

def _layer_norm(x, gamma, beta, eps=1e-5):
    # x: (T, D) f32; gamma/beta: (1, D) f32  -- matches torch.nn.LayerNorm(d_model)
    mu = jnp.mean(x, axis=-1, keepdims=True)
    xc = x - mu
    var = jnp.mean(xc * xc, axis=-1, keepdims=True)
    return xc * jax.lax.rsqrt(var + eps) * gamma + beta


def _split_heads(x, num_heads, head_dim):
    # (T, H*hd) -> (H, T, hd): lane slices stacked along a new leading (major) axis.
    return jnp.stack(
        [x[:, h * head_dim:(h + 1) * head_dim] for h in range(num_heads)], axis=0)


def _merge_heads(x):
    # (H, T, hd) -> (T, H*hd)
    return jnp.concatenate([x[h] for h in range(x.shape[0])], axis=-1)


def _mha_rpe(x_q, x_kv, bias, wq, wk, wv, wo, bq, bk, bv, bo,
             rk_t, rv, q_off, num_heads, max_rpe):
    """Head-batched Shaw-style relative-position attention.

    x_q : (Tq, D) f32   queries (a tile of the target sequence)
    x_kv: (Tk, D) f32   keys/values source (full target or encoder sequence)
    bias: (Tq, Tk) f32  additive mask bias (0 keep / -1e9 masked), shared by all heads
    w*  : (D, D) bf16 projection weights;  b*: (1, D) f32 biases
    rk_t: (hd, 2R+1) bf16 relative-key table (pre-transposed); rv: (2R+1, hd) bf16
    q_off: int32 scalar absolute position of the first query row of this tile
    """
    tq, d = x_q.shape
    tk = x_kv.shape[0]
    hd = d // num_heads
    r21 = 2 * max_rpe + 1
    inv_scale = jnp.float32(1.0 / (hd ** 0.5))

    # projections: bf16 matmuls on the MXU, f32 accumulation + f32 bias
    q = jnp.dot(x_q.astype(jnp.bfloat16), wq, preferred_element_type=jnp.float32) + bq
    k = jnp.dot(x_kv.astype(jnp.bfloat16), wk, preferred_element_type=jnp.float32) + bk
    v = jnp.dot(x_kv.astype(jnp.bfloat16), wv, preferred_element_type=jnp.float32) + bv
    q = q * inv_scale                      # fold 1/sqrt(hd) into q once

    qh = _split_heads(q.astype(jnp.bfloat16), num_heads, hd)   # (H, Tq, hd)
    kh = _split_heads(k.astype(jnp.bfloat16), num_heads, hd)   # (H, Tk, hd)
    vh = _split_heads(v.astype(jnp.bfloat16), num_heads, hd)   # (H, Tk, hd)

    # content logits, batched over heads (MXU)
    energy = jnp.einsum('hqd,hkd->hqk', qh, kh,
                        preferred_element_type=jnp.float32)    # (H, Tq, Tk) f32

    # relative-key logits: head_dim contraction against the small table on the MXU ...
    rk_b = jnp.broadcast_to(rk_t[None], (num_heads, hd, r21))
    relq = jnp.einsum('hqd,hdr->hqr', qh, rk_b,
                      preferred_element_type=jnp.float32)      # (H, Tq, 2R+1) f32

    # ... then a static bucket -> key-position expansion (2R+1 cheap select-adds)
    rows = jax.lax.broadcasted_iota(jnp.int32, (tq, tk), 0) + q_off
    cols = jax.lax.broadcasted_iota(jnp.int32, (tq, tk), 1)
    bucket = jnp.clip(cols - rows, -max_rpe, max_rpe) + max_rpe   # (Tq, Tk) int32
    sels = [bucket == r for r in range(r21)]
    for r in range(r21):
        energy = energy + jnp.where(sels[r][None], relq[:, :, r:r + 1],
                                    jnp.float32(0.0))

    # mask bias computed once outside, broadcast over heads here
    energy = energy + bias[None]

    # softmax in f32; reciprocal on the EUP slot
    m = jnp.max(energy, axis=-1, keepdims=True)
    p = jnp.exp(energy - m)
    attn = p * pl.reciprocal(jnp.sum(p, axis=-1, keepdims=True), approx=True)

    # weighted values, batched over heads (MXU)
    out = jnp.einsum('hqk,hkd->hqd', attn.astype(jnp.bfloat16), vh,
                     preferred_element_type=jnp.float32)       # (H, Tq, hd) f32

    # relative-value term: per-bucket attention mass, spread over the tiny table rows.
    # (K = 2R+1 is too small to feed the MXU usefully; the old O(Tq*Tk*hd) temporary
    #  and cross-sublane axis=1 reduction are gone.)
    rv_f32 = rv.astype(jnp.float32)
    for r in range(r21):
        ab = jnp.sum(jnp.where(sels[r][None], attn, jnp.float32(0.0)),
                     axis=-1, keepdims=True)                   # (H, Tq, 1)
        out = out + ab * rv_f32[r:r + 1, :][None]              # (H, Tq, hd)

    out = _merge_heads(out)                                    # (Tq, D) f32
    return jnp.dot(out.astype(jnp.bfloat16), wo,
                   preferred_element_type=jnp.float32) + bo


# --------------------------------- kernel ------------------------------------

def _decoder_layer_kernel(num_heads, max_rpe, *refs):
    (tq_ref, tkv_ref, enc_ref, tmask_ref, smask_ref,
     sa_rkt_ref, sa_rv_ref, ca_rkt_ref, ca_rv_ref,
     sa_wq_ref, sa_wk_ref, sa_wv_ref, sa_wo_ref,
     ca_wq_ref, ca_wk_ref, ca_wv_ref, ca_wo_ref,
     ff_w1_ref, ff_w2_ref,
     vec_ref, ffb1_ref,
     out_ref) = refs

    q_tile = tq_ref.shape[1]
    q_off = pl.program_id(1) * q_tile

    x = tq_ref[0]            # (TQ, D) f32 residual stream (this query tile)
    x_kv = tkv_ref[0]        # (T_tgt, D) full target sequence (self-attn K/V)
    enc = enc_ref[0]         # (T_src, D) encoder memory

    # mask -> additive bias, computed once per attention (not per head)
    t_bias = jnp.where(tmask_ref[0] > 0, jnp.float32(0.0), jnp.float32(-1e9))
    s_bias = jnp.where(smask_ref[0] > 0, jnp.float32(0.0), jnp.float32(-1e9))

    vecs = vec_ref[...]      # (16, D) f32 packed biases / LayerNorm params

    def vrow(i):
        return vecs[i:i + 1, :]

    # ---- self-attention sublayer (+ residual, LayerNorm); dropout = identity ----
    sa = _mha_rpe(x, x_kv, t_bias,
                  sa_wq_ref[...], sa_wk_ref[...], sa_wv_ref[...], sa_wo_ref[...],
                  vrow(0), vrow(1), vrow(2), vrow(3),
                  sa_rkt_ref[...], sa_rv_ref[...],
                  q_off, num_heads, max_rpe)
    x = _layer_norm(x + sa, vrow(9), vrow(10))

    # ---- encoder (cross) attention sublayer ----
    ca = _mha_rpe(x, enc, s_bias,
                  ca_wq_ref[...], ca_wk_ref[...], ca_wv_ref[...], ca_wo_ref[...],
                  vrow(4), vrow(5), vrow(6), vrow(7),
                  ca_rkt_ref[...], ca_rv_ref[...],
                  q_off, num_heads, max_rpe)
    x = _layer_norm(x + ca, vrow(11), vrow(12))

    # ---- position-wise feed-forward sublayer ----
    h = jnp.dot(x.astype(jnp.bfloat16), ff_w1_ref[...],
                preferred_element_type=jnp.float32) + ffb1_ref[...]
    h = jnp.maximum(h, jnp.float32(0.0))
    ff = jnp.dot(h.astype(jnp.bfloat16), ff_w2_ref[...],
                 preferred_element_type=jnp.float32) + vrow(8)
    x = _layer_norm(x + ff, vrow(13), vrow(14))

    out_ref[0] = x


# -------------------------------- wrapper -------------------------------------

def decoder_layer(tgt, enc, tgt_mask, src_mask, params, *, num_heads, max_rpe,
                  q_tile=None):
    B, t_tgt, d = tgt.shape
    t_src = enc.shape[1]
    if q_tile is None:
        q_tile = t_tgt if t_tgt <= 128 else 128
    assert t_tgt % q_tile == 0, "q_tile must divide T_tgt"

    bf16 = jnp.bfloat16

    # relative-position tables (shared across heads): only (2R+1, hd) goes to the kernel.
    sa_rk_t = params["sa_rel_k"].T.astype(bf16)      # (hd, 2R+1)
    sa_rv = params["sa_rel_v"].astype(bf16)          # (2R+1, hd)
    ca_rk_t = params["ca_rel_k"].T.astype(bf16)
    ca_rv = params["ca_rel_v"].astype(bf16)

    w_mats = [params[k].astype(bf16) for k in
              ("sa_Wq", "sa_Wk", "sa_Wv", "sa_Wo",
               "ca_Wq", "ca_Wk", "ca_Wv", "ca_Wo",
               "ff_W1", "ff_W2")]

    # pack the 15 (1, d_model) bias / LayerNorm vectors into one (16, d_model) block
    vecs = jnp.concatenate([
        params["sa_bq"], params["sa_bk"], params["sa_bv"], params["sa_bo"],
        params["ca_bq"], params["ca_bk"], params["ca_bv"], params["ca_bo"],
        params["ff_b2"],
        params["ln1_g"], params["ln1_b"],
        params["ln2_g"], params["ln2_b"],
        params["ln3_g"], params["ln3_b"],
        jnp.zeros((1, d), jnp.float32),
    ], axis=0).astype(jnp.float32)                   # (16, d_model)
    ff_b1 = params["ff_b1"].astype(jnp.float32)      # (1, d_ff)

    resident = [sa_rk_t, sa_rv, ca_rk_t, ca_rv] + w_mats + [vecs, ff_b1]

    def resident_spec(a):
        return pl.BlockSpec(a.shape, lambda b, qi, n=a.ndim: (0,) * n)

    in_specs = [
        pl.BlockSpec((1, q_tile, d), lambda b, qi: (b, qi, 0)),      # tgt query tile
        pl.BlockSpec((1, t_tgt, d), lambda b, qi: (b, 0, 0)),        # tgt full (K/V)
        pl.BlockSpec((1, t_src, d), lambda b, qi: (b, 0, 0)),        # encoder memory
        pl.BlockSpec((1, q_tile, t_tgt), lambda b, qi: (b, qi, 0)),  # tgt_mask tile
        pl.BlockSpec((1, q_tile, t_src), lambda b, qi: (b, qi, 0)),  # src_mask tile
    ] + [resident_spec(a) for a in resident]

    kernel = functools.partial(_decoder_layer_kernel, num_heads, max_rpe)

    return pl.pallas_call(
        kernel,
        out_shape=jax.ShapeDtypeStruct((B, t_tgt, d), jnp.float32),
        grid_spec=pltpu.PrefetchScalarGridSpec(
            num_scalar_prefetch=0,
            grid=(B, t_tgt // q_tile),
            in_specs=in_specs,
            out_specs=pl.BlockSpec((1, q_tile, d), lambda b, qi: (b, qi, 0)),
        ),
        compiler_params=pltpu.CompilerParams(
            dimension_semantics=("parallel", "parallel"),
            vmem_limit_bytes=64 * 1024 * 1024,
        ),
    )(tgt, tgt, enc, tgt_mask, src_mask, *resident)


# --------------------------- pure-JAX reference -------------------------------

def _reference(tgt, enc, tgt_mask, src_mask, params, *, num_heads, max_rpe):
    def gather(table, tq, tk):
        qi = jnp.arange(tq)[:, None]
        ki = jnp.arange(tk)[None, :]
        rel = jnp.clip(ki - qi, -max_rpe, max_rpe) + max_rpe
        return table[rel]                                  # (tq, tk, hd)

    def mha(x_q, x_kv, mask, pre):
        b, tq, d = x_q.shape
        tk = x_kv.shape[1]
        h = num_heads
        hd = d // h
        rk = gather(params[f"{pre}_rel_k"], tq, tk)
        rv = gather(params[f"{pre}_rel_v"], tq, tk)
        q = x_q @ params[f"{pre}_Wq"] + params[f"{pre}_bq"]
        k = x_kv @ params[f"{pre}_Wk"] + params[f"{pre}_bk"]
        v = x_kv @ params[f"{pre}_Wv"] + params[f"{pre}_bv"]
        q = q.reshape(b, tq, h, hd).transpose(0, 2, 1, 3)
        k = k.reshape(b, tk, h, hd).transpose(0, 2, 1, 3)
        v = v.reshape(b, tk, h, hd).transpose(0, 2, 1, 3)
        e = jnp.einsum('bhqd,bhkd->bhqk', q, k)
        e = e + jnp.einsum('bhqd,qkd->bhqk', q, rk)
        e = e / jnp.sqrt(jnp.float32(hd))
        e = jnp.where(mask[:, None] > 0, e, jnp.float32(-1e9))
        a = jax.nn.softmax(e, axis=-1)
        o = jnp.einsum('bhqk,bhkd->bhqd', a, v)
        o = o + jnp.einsum('bhqk,qkd->bhqd', a, rv)
        o = o.transpose(0, 2, 1, 3).reshape(b, tq, d)
        return o @ params[f"{pre}_Wo"] + params[f"{pre}_bo"]

    def ln(x, g, bta):
        mu = x.mean(-1, keepdims=True)
        var = ((x - mu) ** 2).mean(-1, keepdims=True)
        return (x - mu) * jax.lax.rsqrt(var + 1e-5) * g + bta

    x = ln(tgt + mha(tgt, tgt, tgt_mask, "sa"), params["ln1_g"], params["ln1_b"])
    x = ln(x + mha(x, enc, src_mask, "ca"), params["ln2_g"], params["ln2_b"])
    ff = (jnp.maximum(x @ params["ff_W1"] + params["ff_b1"], 0.0)
          @ params["ff_W2"] + params["ff_b2"])
    return ln(x + ff, params["ln3_g"], params["ln3_b"])


# ----------------------------------- main --------------------------------------

def _init_params(key, d_model, num_heads, d_ff, max_rpe):
    hd = d_model // num_heads
    ks = jax.random.split(key, 32)
    s = 0.02
    p = {}
    i = 0
    for pre in ("sa", "ca"):
        for name in ("Wq", "Wk", "Wv", "Wo"):
            p[f"{pre}_{name}"] = s * jax.random.normal(
                ks[i], (d_model, d_model), jnp.float32); i += 1
        for name in ("bq", "bk", "bv", "bo"):
            p[f"{pre}_{name}"] = jnp.zeros((1, d_model), jnp.float32)
        p[f"{pre}_rel_k"] = s * jax.random.normal(
            ks[i], (2 * max_rpe + 1, hd), jnp.float32); i += 1
        p[f"{pre}_rel_v"] = s * jax.random.normal(
            ks[i], (2 * max_rpe + 1, hd), jnp.float32); i += 1
    p["ff_W1"] = s * jax.random.normal(ks[i], (d_model, d_ff), jnp.float32); i += 1
    p["ff_b1"] = jnp.zeros((1, d_ff), jnp.float32)
    p["ff_W2"] = s * jax.random.normal(ks[i], (d_ff, d_model), jnp.float32); i += 1
    p["ff_b2"] = jnp.zeros((1, d_model), jnp.float32)
    for ln in ("ln1", "ln2", "ln3"):
        p[f"{ln}_g"] = jnp.ones((1, d_model), jnp.float32)
        p[f"{ln}_b"] = jnp.zeros((1, d_model), jnp.float32)
    return p


if __name__ == "__main__":
    B, T_TGT, T_SRC = 2, 16, 16
    D_MODEL, NUM_HEADS, D_FF, MAX_RPE = 64, 4, 128, 4

    key = jax.random.PRNGKey(0)
    k_tgt, k_enc, k_par = jax.random.split(key, 3)

    tgt = jax.random.normal(k_tgt, (B, T_TGT, D_MODEL), jnp.float32)
    enc = jax.random.normal(k_enc, (B, T_SRC, D_MODEL), jnp.float32)

    # causal mask for self-attention, padding-style mask for cross-attention
    tgt_mask = jnp.broadcast_to(
        jnp.tril(jnp.ones((T_TGT, T_TGT), jnp.float32)), (B, T_TGT, T_TGT))
    src_valid = jnp.stack([
        jnp.ones((T_SRC,), jnp.float32),
        jnp.concatenate([jnp.ones((T_SRC - 3,), jnp.float32),
                         jnp.zeros((3,), jnp.float32)]),
    ])
    src_mask = jnp.broadcast_to(src_valid[:, None, :], (B, T_TGT, T_SRC))

    params = _init_params(k_par, D_MODEL, NUM_HEADS, D_FF, MAX_RPE)

    out = decoder_layer(tgt, enc, tgt_mask, src_mask, params,
                        num_heads=NUM_HEADS, max_rpe=MAX_RPE, q_tile=8)
    jax.block_until_ready(out)
    assert out.shape == (B, T_TGT, D_MODEL)

    ref = _reference(tgt, enc, tgt_mask, src_mask, params,
                     num_heads=NUM_HEADS, max_rpe=MAX_RPE)
    err = float(jnp.max(jnp.abs(out - ref)))
    assert err < 7.5e-2, f"max |kernel - reference| too large: {err}"
    print("KERNEL_OK")
</pallas_src>

<mosaic_0001>
module attributes {stable_mosaic.version = 11 : i64} {
  func.func @_decoder_layer_kernel(%arg0: i32, %arg1: i32, %arg2: memref<1x8x64xf32, #tpu.memory_space<vmem>>, %arg3: memref<1x16x64xf32, #tpu.memory_space<vmem>>, %arg4: memref<1x16x64xf32, #tpu.memory_space<vmem>>, %arg5: memref<1x8x16xf32, #tpu.memory_space<vmem>>, %arg6: memref<1x8x16xf32, #tpu.memory_space<vmem>>, %arg7: memref<16x9xbf16, #tpu.memory_space<vmem>>, %arg8: memref<9x16xbf16, #tpu.memory_space<vmem>>, %arg9: memref<16x9xbf16, #tpu.memory_space<vmem>>, %arg10: memref<9x16xbf16, #tpu.memory_space<vmem>>, %arg11: memref<64x64xbf16, #tpu.memory_space<vmem>>, %arg12: memref<64x64xbf16, #tpu.memory_space<vmem>>, %arg13: memref<64x64xbf16, #tpu.memory_space<vmem>>, %arg14: memref<64x64xbf16, #tpu.memory_space<vmem>>, %arg15: memref<64x64xbf16, #tpu.memory_space<vmem>>, %arg16: memref<64x64xbf16, #tpu.memory_space<vmem>>, %arg17: memref<64x64xbf16, #tpu.memory_space<vmem>>, %arg18: memref<64x64xbf16, #tpu.memory_space<vmem>>, %arg19: memref<64x128xbf16, #tpu.memory_space<vmem>>, %arg20: memref<128x64xbf16, #tpu.memory_space<vmem>>, %arg21: memref<16x64xf32, #tpu.memory_space<vmem>>, %arg22: memref<1x128xf32, #tpu.memory_space<vmem>>, %arg23: memref<1x8x64xf32, #tpu.memory_space<vmem>>) attributes {dimension_semantics = [#tpu.dimension_semantics<parallel>, #tpu.dimension_semantics<parallel>], iteration_bounds = array<i64: 2, 2>, scalar_prefetch = 0 : i64, scratch_operands = 0 : i64, tpu.core_type = #tpu.core_type<tc>, window_params = [{transform_indices = @transform_0, window_bounds = array<i64: 1, 8, 64>}, {transform_indices = @transform_1, window_bounds = array<i64: 1, 16, 64>}, {transform_indices = @transform_2, window_bounds = array<i64: 1, 16, 64>}, {transform_indices = @transform_3, window_bounds = array<i64: 1, 8, 16>}, {transform_indices = @transform_4, window_bounds = array<i64: 1, 8, 16>}, {pipeline_mode = #tpu.pipeline_mode<synchronous>, transform_indices = @transform_5, window_bounds = array<i64: 16, 9>}, {pipeline_mode = #tpu.pipeline_mode<synchronous>, transform_indices = @transform_6, window_bounds = array<i64: 9, 16>}, {pipeline_mode = #tpu.pipeline_mode<synchronous>, transform_indices = @transform_7, window_bounds = array<i64: 16, 9>}, {pipeline_mode = #tpu.pipeline_mode<synchronous>, transform_indices = @transform_8, window_bounds = array<i64: 9, 16>}, {pipeline_mode = #tpu.pipeline_mode<synchronous>, transform_indices = @transform_9, window_bounds = array<i64: 64, 64>}, {pipeline_mode = #tpu.pipeline_mode<synchronous>, transform_indices = @transform_10, window_bounds = array<i64: 64, 64>}, {pipeline_mode = #tpu.pipeline_mode<synchronous>, transform_indices = @transform_11, window_bounds = array<i64: 64, 64>}, {pipeline_mode = #tpu.pipeline_mode<synchronous>, transform_indices = @transform_12, window_bounds = array<i64: 64, 64>}, {pipeline_mode = #tpu.pipeline_mode<synchronous>, transform_indices = @transform_13, window_bounds = array<i64: 64, 64>}, {pipeline_mode = #tpu.pipeline_mode<synchronous>, transform_indices = @transform_14, window_bounds = array<i64: 64, 64>}, {pipeline_mode = #tpu.pipeline_mode<synchronous>, transform_indices = @transform_15, window_bounds = array<i64: 64, 64>}, {pipeline_mode = #tpu.pipeline_mode<synchronous>, transform_indices = @transform_16, window_bounds = array<i64: 64, 64>}, {pipeline_mode = #tpu.pipeline_mode<synchronous>, transform_indices = @transform_17, window_bounds = array<i64: 64, 128>}, {pipeline_mode = #tpu.pipeline_mode<synchronous>, transform_indices = @transform_18, window_bounds = array<i64: 128, 64>}, {pipeline_mode = #tpu.pipeline_mode<synchronous>, transform_indices = @transform_19, window_bounds = array<i64: 16, 64>}, {pipeline_mode = #tpu.pipeline_mode<synchronous>, transform_indices = @transform_20, window_bounds = array<i64: 1, 128>}, {transform_indices = @transform_21, window_bounds = array<i64: 1, 8, 64>}]} {
    %c8_i32 = arith.constant 8 : i32
    %0 = arith.muli %arg1, %c8_i32 : i32
    %c0 = arith.constant 0 : index
    %c0_0 = arith.constant 0 : index
    %c0_1 = arith.constant 0 : index
    %1 = vector.load %arg2[%c0, %c0_0, %c0_1] : memref<1x8x64xf32, #tpu.memory_space<vmem>>, vector<1x8x64xf32>
    %2 = vector.shape_cast %1 : vector<1x8x64xf32> to vector<8x64xf32>
    %c0_2 = arith.constant 0 : index
    %c0_3 = arith.constant 0 : index
    %c0_4 = arith.constant 0 : index
    %3 = vector.load %arg3[%c0_2, %c0_3, %c0_4] : memref<1x16x64xf32, #tpu.memory_space<vmem>>, vector<1x16x64xf32>
    %4 = vector.shape_cast %3 : vector<1x16x64xf32> to vector<16x64xf32>
    %c0_5 = arith.constant 0 : index
    %c0_6 = arith.constant 0 : index
    %c0_7 = arith.constant 0 : index
    %5 = vector.load %arg4[%c0_5, %c0_6, %c0_7] : memref<1x16x64xf32, #tpu.memory_space<vmem>>, vector<1x16x64xf32>
    %6 = vector.shape_cast %5 : vector<1x16x64xf32> to vector<16x64xf32>
    %c0_8 = arith.constant 0 : index
    %c0_9 = arith.constant 0 : index
    %c0_10 = arith.constant 0 : index
    %7 = vector.load %arg5[%c0_8, %c0_9, %c0_10] : memref<1x8x16xf32, #tpu.memory_space<vmem>>, vector<1x8x16xf32>
    %8 = vector.shape_cast %7 : vector<1x8x16xf32> to vector<8x16xf32>
    %cst = arith.constant 0.000000e+00 : f32
    %9 = vector.broadcast %cst : f32 to vector<8x16xf32>
    %10 = arith.cmpf ogt, %8, %9 : vector<8x16xf32>
    %cst_11 = arith.constant 0.000000e+00 : f32
    %cst_12 = arith.constant -1.000000e+09 : f32
    %11 = vector.broadcast %cst_11 : f32 to vector<8x16xf32>
    %12 = vector.broadcast %cst_12 : f32 to vector<8x16xf32>
    %13 = arith.select %10, %11, %12 : vector<8x16xi1>, vector<8x16xf32>
    %c0_13 = arith.constant 0 : index
    %c0_14 = arith.constant 0 : index
    %c0_15 = arith.constant 0 : index
    %14 = vector.load %arg6[%c0_13, %c0_14, %c0_15] : memref<1x8x16xf32, #tpu.memory_space<vmem>>, vector<1x8x16xf32>
    %15 = vector.shape_cast %14 : vector<1x8x16xf32> to vector<8x16xf32>
    %cst_16 = arith.constant 0.000000e+00 : f32
    %16 = vector.broadcast %cst_16 : f32 to vector<8x16xf32>
    %17 = arith.cmpf ogt, %15, %16 : vector<8x16xf32>
    %cst_17 = arith.constant 0.000000e+00 : f32
    %cst_18 = arith.constant -1.000000e+09 : f32
    %18 = vector.broadcast %cst_17 : f32 to vector<8x16xf32>
    %19 = vector.broadcast %cst_18 : f32 to vector<8x16xf32>
    %20 = arith.select %17, %18, %19 : vector<8x16xi1>, vector<8x16xf32>
    %c0_19 = arith.constant 0 : index
    %c0_20 = arith.constant 0 : index
    %21 = vector.load %arg21[%c0_19, %c0_20] : memref<16x64xf32, #tpu.memory_space<vmem>>, vector<16x64xf32>
    %c0_21 = arith.constant 0 : index
    %c0_22 = arith.constant 0 : index
    %22 = vector.load %arg11[%c0_21, %c0_22] : memref<64x64xbf16, #tpu.memory_space<vmem>>, vector<64x64xbf16>
    %c0_23 = arith.constant 0 : index
    %c0_24 = arith.constant 0 : index
    %23 = vector.load %arg12[%c0_23, %c0_24] : memref<64x64xbf16, #tpu.memory_space<vmem>>, vector<64x64xbf16>
    %c0_25 = arith.constant 0 : index
    %c0_26 = arith.constant 0 : index
    %24 = vector.load %arg13[%c0_25, %c0_26] : memref<64x64xbf16, #tpu.memory_space<vmem>>, vector<64x64xbf16>
    %c0_27 = arith.constant 0 : index
    %c0_28 = arith.constant 0 : index
    %25 = vector.load %arg14[%c0_27, %c0_28] : memref<64x64xbf16, #tpu.memory_space<vmem>>, vector<64x64xbf16>
    %26 = vector.extract_strided_slice %21 {offsets = [0, 0], sizes = [1, 64], strides = [1, 1]} : vector<16x64xf32> to vector<1x64xf32>
    %27 = vector.extract_strided_slice %21 {offsets = [1, 0], sizes = [1, 64], strides = [1, 1]} : vector<16x64xf32> to vector<1x64xf32>
    %28 = vector.extract_strided_slice %21 {offsets = [2, 0], sizes = [1, 64], strides = [1, 1]} : vector<16x64xf32> to vector<1x64xf32>
    %29 = vector.extract_strided_slice %21 {offsets = [3, 0], sizes = [1, 64], strides = [1, 1]} : vector<16x64xf32> to vector<1x64xf32>
    %c0_29 = arith.constant 0 : index
    %c0_30 = arith.constant 0 : index
    %30 = vector.load %arg7[%c0_29, %c0_30] : memref<16x9xbf16, #tpu.memory_space<vmem>>, vector<16x9xbf16>
    %c0_31 = arith.constant 0 : index
    %c0_32 = arith.constant 0 : index
    %31 = vector.load %arg8[%c0_31, %c0_32] : memref<9x16xbf16, #tpu.memory_space<vmem>>, vector<9x16xbf16>
    %32 = arith.truncf %2 : vector<8x64xf32> to vector<8x64xbf16>
    %cst_33 = arith.constant dense<0.000000e+00> : vector<8x64xf32>
    %33 = tpu.matmul %32, %22, %cst_33 {dimension_numbers = #tpu.dot_dimension_numbers<[1], [0], [0], [1], [0, 0, 1, 1], [], []>} : vector<8x64xbf16>, vector<64x64xbf16>, vector<8x64xf32> -> vector<8x64xf32>
    %34 = vector.broadcast %26 : vector<1x64xf32> to vector<8x64xf32>
    %35 = arith.addf %33, %34 : vector<8x64xf32>
    %36 = arith.truncf %4 : vector<16x64xf32> to vector<16x64xbf16>
    %cst_34 = arith.constant dense<0.000000e+00> : vector<16x64xf32>
    %37 = tpu.matmul %36, %23, %cst_34 {dimension_numbers = #tpu.dot_dimension_numbers<[1], [0], [0], [1], [0, 0, 1, 1], [], []>} : vector<16x64xbf16>, vector<64x64xbf16>, vector<16x64xf32> -> vector<16x64xf32>
    %38 = vector.broadcast %27 : vector<1x64xf32> to vector<16x64xf32>
    %39 = arith.addf %37, %38 : vector<16x64xf32>
    %40 = arith.truncf %4 : vector<16x64xf32> to vector<16x64xbf16>
    %cst_35 = arith.constant dense<0.000000e+00> : vector<16x64xf32>
    %41 = tpu.matmul %40, %24, %cst_35 {dimension_numbers = #tpu.dot_dimension_numbers<[1], [0], [0], [1], [0, 0, 1, 1], [], []>} : vector<16x64xbf16>, vector<64x64xbf16>, vector<16x64xf32> -> vector<16x64xf32>
    %42 = vector.broadcast %28 : vector<1x64xf32> to vector<16x64xf32>
    %43 = arith.addf %41, %42 : vector<16x64xf32>
    %cst_36 = arith.constant 2.500000e-01 : f32
    %44 = vector.broadcast %cst_36 : f32 to vector<8x64xf32>
    %45 = arith.mulf %35, %44 : vector<8x64xf32>
    %46 = arith.truncf %45 : vector<8x64xf32> to vector<8x64xbf16>
    %47 = vector.extract_strided_slice %46 {offsets = [0, 0], sizes = [8, 16], strides = [1, 1]} : vector<8x64xbf16> to vector<8x16xbf16>
    %48 = vector.extract_strided_slice %46 {offsets = [0, 16], sizes = [8, 16], strides = [1, 1]} : vector<8x64xbf16> to vector<8x16xbf16>
    %49 = vector.extract_strided_slice %46 {offsets = [0, 32], sizes = [8, 16], strides = [1, 1]} : vector<8x64xbf16> to vector<8x16xbf16>
    %50 = vector.extract_strided_slice %46 {offsets = [0, 48], sizes = [8, 16], strides = [1, 1]} : vector<8x64xbf16> to vector<8x16xbf16>
    %51 = vector.shape_cast %47 : vector<8x16xbf16> to vector<1x8x16xbf16>
    %52 = vector.shape_cast %48 : vector<8x16xbf16> to vector<1x8x16xbf16>
    %53 = vector.shape_cast %49 : vector<8x16xbf16> to vector<1x8x16xbf16>
    %54 = vector.shape_cast %50 : vector<8x16xbf16> to vector<1x8x16xbf16>
    %55 = tpu.concatenate %51, %52, %53, %54 in 0 : vector<1x8x16xbf16>, vector<1x8x16xbf16>, vector<1x8x16xbf16>, vector<1x8x16xbf16> -> vector<4x8x16xbf16>
    %56 = arith.truncf %39 : vector<16x64xf32> to vector<16x64xbf16>
    %57 = vector.extract_strided_slice %56 {offsets = [0, 0], sizes = [16, 16], strides = [1, 1]} : vector<16x64xbf16> to vector<16x16xbf16>
    %58 = vector.extract_strided_slice %56 {offsets = [0, 16], sizes = [16, 16], strides = [1, 1]} : vector<16x64xbf16> to vector<16x16xbf16>
    %59 = vector.extract_strided_slice %56 {offsets = [0, 32], sizes = [16, 16], strides = [1, 1]} : vector<16x64xbf16> to vector<16x16xbf16>
    %60 = vector.extract_strided_slice %56 {offsets = [0, 48], sizes = [16, 16], strides = [1, 1]} : vector<16x64xbf16> to vector<16x16xbf16>
    %61 = vector.shape_cast %57 : vector<16x16xbf16> to vector<1x16x16xbf16>
    %62 = vector.shape_cast %58 : vector<16x16xbf16> to vector<1x16x16xbf16>
    %63 = vector.shape_cast %59 : vector<16x16xbf16> to vector<1x16x16xbf16>
    %64 = vector.shape_cast %60 : vector<16x16xbf16> to vector<1x16x16xbf16>
    %65 = tpu.concatenate %61, %62, %63, %64 in 0 : vector<1x16x16xbf16>, vector<1x16x16xbf16>, vector<1x16x16xbf16>, vector<1x16x16xbf16> -> vector<4x16x16xbf16>
    %66 = arith.truncf %43 : vector<16x64xf32> to vector<16x64xbf16>
    %67 = vector.extract_strided_slice %66 {offsets = [0, 0], sizes = [16, 16], strides = [1, 1]} : vector<16x64xbf16> to vector<16x16xbf16>
    %68 = vector.extract_strided_slice %66 {offsets = [0, 16], sizes = [16, 16], strides = [1, 1]} : vector<16x64xbf16> to vector<16x16xbf16>
    %69 = vector.extract_strided_slice %66 {offsets = [0, 32], sizes = [16, 16], strides = [1, 1]} : vector<16x64xbf16> to vector<16x16xbf16>
    %70 = vector.extract_strided_slice %66 {offsets = [0, 48], sizes = [16, 16], strides = [1, 1]} : vector<16x64xbf16> to vector<16x16xbf16>
    %71 = vector.shape_cast %67 : vector<16x16xbf16> to vector<1x16x16xbf16>
    %72 = vector.shape_cast %68 : vector<16x16xbf16> to vector<1x16x16xbf16>
    %73 = vector.shape_cast %69 : vector<16x16xbf16> to vector<1x16x16xbf16>
    %74 = vector.shape_cast %70 : vector<16x16xbf16> to vector<1x16x16xbf16>
    %75 = tpu.concatenate %71, %72, %73, %74 in 0 : vector<1x16x16xbf16>, vector<1x16x16xbf16>, vector<1x16x16xbf16>, vector<1x16x16xbf16> -> vector<4x16x16xbf16>
    "tpu.trace_start"() <{level = 10 : i32, message = "hqd,hkd->hqk"}> : () -> ()
    %cst_37 = arith.constant dense<0.000000e+00> : vector<4x8x16xf32>
    %76 = tpu.matmul %55, %65, %cst_37 {dimension_numbers = #tpu.dot_dimension_numbers<[2], [2], [1], [1], [0, 0, 0, 1, 1, 1], [0], [0]>} : vector<4x8x16xbf16>, vector<4x16x16xbf16>, vector<4x8x16xf32> -> vector<4x8x16xf32>
    "tpu.trace_stop"() : () -> ()
    %77 = vector.shape_cast %30 : vector<16x9xbf16> to vector<1x16x9xbf16>
    %78 = vector.shape_cast %77 : vector<1x16x9xbf16> to vector<1x16x9xbf16>
    %79 = vector.broadcast %78 : vector<1x16x9xbf16> to vector<4x16x9xbf16>
    "tpu.trace_start"() <{level = 10 : i32, message = "hqd,hdr->hqr"}> : () -> ()
    %cst_38 = arith.constant dense<0.000000e+00> : vector<4x8x9xf32>
    %80 = tpu.matmul %55, %79, %cst_38 {dimension_numbers = #tpu.dot_dimension_numbers<[2], [1], [1], [2], [0, 0, 0, 1, 1, 2], [0], [0]>} : vector<4x8x16xbf16>, vector<4x16x9xbf16>, vector<4x8x9xf32> -> vector<4x8x9xf32>
    "tpu.trace_stop"() : () -> ()
    %81 = tpu.iota {dimensions = array<i32: 0>} : vector<8x16xi32>
    %82 = vector.broadcast %0 : i32 to vector<8x16xi32>
    %83 = arith.addi %81, %82 : vector<8x16xi32>
    %84 = tpu.iota {dimensions = array<i32: 1>} : vector<8x16xi32>
    %85 = arith.subi %84, %83 : vector<8x16xi32>
    %c-4_i32 = arith.constant -4 : i32
    %c4_i32 = arith.constant 4 : i32
    %86 = vector.broadcast %c-4_i32 : i32 to vector<8x16xi32>
    %87 = arith.maxsi %86, %85 : vector<8x16xi32>
    %88 = vector.broadcast %c4_i32 : i32 to vector<8x16xi32>
    %89 = arith.minsi %88, %87 : vector<8x16xi32>
    %c4_i32_39 = arith.constant 4 : i32
    %90 = vector.broadcast %c4_i32_39 : i32 to vector<8x16xi32>
    %91 = arith.addi %89, %90 : vector<8x16xi32>
    %c0_i32 = arith.constant 0 : i32
    %92 = vector.broadcast %c0_i32 : i32 to vector<8x16xi32>
    %93 = arith.cmpi eq, %91, %92 : vector<8x16xi32>
    %c1_i32 = arith.constant 1 : i32
    %94 = vector.broadcast %c1_i32 : i32 to vector<8x16xi32>
    %95 = arith.cmpi eq, %91, %94 : vector<8x16xi32>
    %c2_i32 = arith.constant 2 : i32
    %96 = vector.broadcast %c2_i32 : i32 to vector<8x16xi32>
    %97 = arith.cmpi eq, %91, %96 : vector<8x16xi32>
    %c3_i32 = arith.constant 3 : i32
    %98 = vector.broadcast %c3_i32 : i32 to vector<8x16xi32>
    %99 = arith.cmpi eq, %91, %98 : vector<8x16xi32>
    %c4_i32_40 = arith.constant 4 : i32
    %100 = vector.broadcast %c4_i32_40 : i32 to vector<8x16xi32>
    %101 = arith.cmpi eq, %91, %100 : vector<8x16xi32>
    %c5_i32 = arith.constant 5 : i32
    %102 = vector.broadcast %c5_i32 : i32 to vector<8x16xi32>
    %103 = arith.cmpi eq, %91, %102 : vector<8x16xi32>
    %c6_i32 = arith.constant 6 : i32
    %104 = vector.broadcast %c6_i32 : i32 to vector<8x16xi32>
    %105 = arith.cmpi eq, %91, %104 : vector<8x16xi32>
    %c7_i32 = arith.constant 7 : i32
    %106 = vector.broadcast %c7_i32 : i32 to vector<8x16xi32>
    %107 = arith.cmpi eq, %91, %106 : vector<8x16xi32>
    %c8_i32_41 = arith.constant 8 : i32
    %108 = vector.broadcast %c8_i32_41 : i32 to vector<8x16xi32>
    %109 = arith.cmpi eq, %91, %108 : vector<8x16xi32>
    %110 = vector.shape_cast %93 : vector<8x16xi1> to vector<1x8x16xi1>
    %111 = vector.extract_strided_slice %80 {offsets = [0, 0, 0], sizes = [4, 8, 1], strides = [1, 1, 1]} : vector<4x8x9xf32> to vector<4x8x1xf32>
    %cst_42 = arith.constant 0.000000e+00 : f32
    %112 = vector.shape_cast %110 : vector<1x8x16xi1> to vector<1x8x16xi1>
    %113 = vector.broadcast %112 : vector<1x8x16xi1> to vector<4x8x16xi1>
    %114 = vector.shape_cast %111 : vector<4x8x1xf32> to vector<4x8x1xf32>
    %115 = vector.broadcast %114 : vector<4x8x1xf32> to vector<4x8x16xf32>
    %116 = vector.broadcast %cst_42 : f32 to vector<4x8x16xf32>
    %117 = arith.select %113, %115, %116 : vector<4x8x16xi1>, vector<4x8x16xf32>
    %118 = arith.addf %76, %117 : vector<4x8x16xf32>
    %119 = vector.shape_cast %95 : vector<8x16xi1> to vector<1x8x16xi1>
    %120 = vector.extract_strided_slice %80 {offsets = [0, 0, 1], sizes = [4, 8, 1], strides = [1, 1, 1]} : vector<4x8x9xf32> to vector<4x8x1xf32>
    %cst_43 = arith.constant 0.000000e+00 : f32
    %121 = vector.shape_cast %119 : vector<1x8x16xi1> to vector<1x8x16xi1>
    %122 = vector.broadcast %121 : vector<1x8x16xi1> to vector<4x8x16xi1>
    %123 = vector.shape_cast %120 : vector<4x8x1xf32> to vector<4x8x1xf32>
    %124 = vector.broadcast %123 : vector<4x8x1xf32> to vector<4x8x16xf32>
    %125 = vector.broadcast %cst_43 : f32 to vector<4x8x16xf32>
    %126 = arith.select %122, %124, %125 : vector<4x8x16xi1>, vector<4x8x16xf32>
    %127 = arith.addf %118, %126 : vector<4x8x16xf32>
    %128 = vector.shape_cast %97 : vector<8x16xi1> to vector<1x8x16xi1>
    %129 = vector.extract_strided_slice %80 {offsets = [0, 0, 2], sizes = [4, 8, 1], strides = [1, 1, 1]} : vector<4x8x9xf32> to vector<4x8x1xf32>
    %cst_44 = arith.constant 0.000000e+00 : f32
    %130 = vector.shape_cast %128 : vector<1x8x16xi1> to vector<1x8x16xi1>
    %131 = vector.broadcast %130 : vector<1x8x16xi1> to vector<4x8x16xi1>
    %132 = vector.shape_cast %129 : vector<4x8x1xf32> to vector<4x8x1xf32>
    %133 = vector.broadcast %132 : vector<4x8x1xf32> to vector<4x8x16xf32>
    %134 = vector.broadcast %cst_44 : f32 to vector<4x8x16xf32>
    %135 = arith.select %131, %133, %134 : vector<4x8x16xi1>, vector<4x8x16xf32>
    %136 = arith.addf %127, %135 : vector<4x8x16xf32>
    %137 = vector.shape_cast %99 : vector<8x16xi1> to vector<1x8x16xi1>
    %138 = vector.extract_strided_slice %80 {offsets = [0, 0, 3], sizes = [4, 8, 1], strides = [1, 1, 1]} : vector<4x8x9xf32> to vector<4x8x1xf32>
    %cst_45 = arith.constant 0.000000e+00 : f32
    %139 = vector.shape_cast %137 : vector<1x8x16xi1> to vector<1x8x16xi1>
    %140 = vector.broadcast %139 : vector<1x8x16xi1> to vector<4x8x16xi1>
    %141 = vector.shape_cast %138 : vector<4x8x1xf32> to vector<4x8x1xf32>
    %142 = vector.broadcast %141 : vector<4x8x1xf32> to vector<4x8x16xf32>
    %143 = vector.broadcast %cst_45 : f32 to vector<4x8x16xf32>
    %144 = arith.select %140, %142, %143 : vector<4x8x16xi1>, vector<4x8x16xf32>
    %145 = arith.addf %136, %144 : vector<4x8x16xf32>
    %146 = vector.shape_cast %101 : vector<8x16xi1> to vector<1x8x16xi1>
    %147 = vector.extract_strided_slice %80 {offsets = [0, 0, 4], sizes = [4, 8, 1], strides = [1, 1, 1]} : vector<4x8x9xf32> to vector<4x8x1xf32>
    %cst_46 = arith.constant 0.000000e+00 : f32
    %148 = vector.shape_cast %146 : vector<1x8x16xi1> to vector<1x8x16xi1>
    %149 = vector.broadcast %148 : vector<1x8x16xi1> to vector<4x8x16xi1>
    %150 = vector.shape_cast %147 : vector<4x8x1xf32> to vector<4x8x1xf32>
    %151 = vector.broadcast %150 : vector<4x8x1xf32> to vector<4x8x16xf32>
    %152 = vector.broadcast %cst_46 : f32 to vector<4x8x16xf32>
    %153 = arith.select %149, %151, %152 : vector<4x8x16xi1>, vector<4x8x16xf32>
    %154 = arith.addf %145, %153 : vector<4x8x16xf32>
    %155 = vector.shape_cast %103 : vector<8x16xi1> to vector<1x8x16xi1>
    %156 = vector.extract_strided_slice %80 {offsets = [0, 0, 5], sizes = [4, 8, 1], strides = [1, 1, 1]} : vector<4x8x9xf32> to vector<4x8x1xf32>
    %cst_47 = arith.constant 0.000000e+00 : f32
    %157 = vector.shape_cast %155 : vector<1x8x16xi1> to vector<1x8x16xi1>
    %158 = vector.broadcast %157 : vector<1x8x16xi1> to vector<4x8x16xi1>
    %159 = vector.shape_cast %156 : vector<4x8x1xf32> to vector<4x8x1xf32>
    %160 = vector.broadcast %159 : vector<4x8x1xf32> to vector<4x8x16xf32>
    %161 = vector.broadcast %cst_47 : f32 to vector<4x8x16xf32>
    %162 = arith.select %158, %160, %161 : vector<4x8x16xi1>, vector<4x8x16xf32>
    %163 = arith.addf %154, %162 : vector<4x8x16xf32>
    %164 = vector.shape_cast %105 : vector<8x16xi1> to vector<1x8x16xi1>
    %165 = vector.extract_strided_slice %80 {offsets = [0, 0, 6], sizes = [4, 8, 1], strides = [1, 1, 1]} : vector<4x8x9xf32> to vector<4x8x1xf32>
    %cst_48 = arith.constant 0.000000e+00 : f32
    %166 = vector.shape_cast %164 : vector<1x8x16xi1> to vector<1x8x16xi1>
    %167 = vector.broadcast %166 : vector<1x8x16xi1> to vector<4x8x16xi1>
    %168 = vector.shape_cast %165 : vector<4x8x1xf32> to vector<4x8x1xf32>
    %169 = vector.broadcast %168 : vector<4x8x1xf32> to vector<4x8x16xf32>
    %170 = vector.broadcast %cst_48 : f32 to vector<4x8x16xf32>
    %171 = arith.select %167, %169, %170 : vector<4x8x16xi1>, vector<4x8x16xf32>
    %172 = arith.addf %163, %171 : vector<4x8x16xf32>
    %173 = vector.shape_cast %107 : vector<8x16xi1> to vector<1x8x16xi1>
    %174 = vector.extract_strided_slice %80 {offsets = [0, 0, 7], sizes = [4, 8, 1], strides = [1, 1, 1]} : vector<4x8x9xf32> to vector<4x8x1xf32>
    %cst_49 = arith.constant 0.000000e+00 : f32
    %175 = vector.shape_cast %173 : vector<1x8x16xi1> to vector<1x8x16xi1>
    %176 = vector.broadcast %175 : vector<1x8x16xi1> to vector<4x8x16xi1>
    %177 = vector.shape_cast %174 : vector<4x8x1xf32> to vector<4x8x1xf32>
    %178 = vector.broadcast %177 : vector<4x8x1xf32> to vector<4x8x16xf32>
    %179 = vector.broadcast %cst_49 : f32 to vector<4x8x16xf32>
    %180 = arith.select %176, %178, %179 : vector<4x8x16xi1>, vector<4x8x16xf32>
    %181 = arith.addf %172, %180 : vector<4x8x16xf32>
    %182 = vector.shape_cast %109 : vector<8x16xi1> to vector<1x8x16xi1>
    %183 = vector.extract_strided_slice %80 {offsets = [0, 0, 8], sizes = [4, 8, 1], strides = [1, 1, 1]} : vector<4x8x9xf32> to vector<4x8x1xf32>
    %cst_50 = arith.constant 0.000000e+00 : f32
    %184 = vector.shape_cast %182 : vector<1x8x16xi1> to vector<1x8x16xi1>
    %185 = vector.broadcast %184 : vector<1x8x16xi1> to vector<4x8x16xi1>
    %186 = vector.shape_cast %183 : vector<4x8x1xf32> to vector<4x8x1xf32>
    %187 = vector.broadcast %186 : vector<4x8x1xf32> to vector<4x8x16xf32>
    %188 = vector.broadcast %cst_50 : f32 to vector<4x8x16xf32>
    %189 = arith.select %185, %187, %188 : vector<4x8x16xi1>, vector<4x8x16xf32>
    %190 = arith.addf %181, %189 : vector<4x8x16xf32>
    %191 = vector.shape_cast %13 : vector<8x16xf32> to vector<1x8x16xf32>
    %192 = vector.broadcast %191 : vector<1x8x16xf32> to vector<4x8x16xf32>
    %193 = arith.addf %190, %192 : vector<4x8x16xf32>
    %cst_51 = arith.constant dense<0xFF800000> : vector<4x8xf32>
    %194 = vector.multi_reduction <maximumf>, %193, %cst_51 [2] : vector<4x8x16xf32> to vector<4x8xf32>
    %195 = vector.shape_cast %194 : vector<4x8xf32> to vector<4x8x1xf32>
    %196 = vector.broadcast %195 : vector<4x8x1xf32> to vector<4x8x16xf32>
    %197 = arith.subf %193, %196 : vector<4x8x16xf32>
    %198 = math.exp %197 : vector<4x8x16xf32>
    %cst_52 = arith.constant dense<0.000000e+00> : vector<4x8xf32>
    %199 = vector.multi_reduction <add>, %198, %cst_52 [2] : vector<4x8x16xf32> to vector<4x8xf32>
    %200 = vector.shape_cast %199 : vector<4x8xf32> to vector<4x8x1xf32>
    %201 = tpu.reciprocal %200 {approx = true} : vector<4x8x1xf32> -> vector<4x8x1xf32>
    %202 = vector.broadcast %201 : vector<4x8x1xf32> to vector<4x8x16xf32>
    %203 = arith.mulf %198, %202 : vector<4x8x16xf32>
    %204 = arith.truncf %203 : vector<4x8x16xf32> to vector<4x8x16xbf16>
    "tpu.trace_start"() <{level = 10 : i32, message = "hqk,hkd->hqd"}> : () -> ()
    %cst_53 = arith.constant dense<0.000000e+00> : vector<4x8x16xf32>
    %205 = tpu.matmul %204, %75, %cst_53 {dimension_numbers = #tpu.dot_dimension_numbers<[2], [1], [1], [2], [0, 0, 0, 1, 1, 2], [0], [0]>} : vector<4x8x16xbf16>, vector<4x16x16xbf16>, vector<4x8x16xf32> -> vector<4x8x16xf32>
    "tpu.trace_stop"() : () -> ()
    %206 = arith.extf %31 : vector<9x16xbf16> to vector<9x16xf32>
    %207 = vector.shape_cast %93 : vector<8x16xi1> to vector<1x8x16xi1>
    %cst_54 = arith.constant 0.000000e+00 : f32
    %208 = vector.shape_cast %207 : vector<1x8x16xi1> to vector<1x8x16xi1>
    %209 = vector.broadcast %208 : vector<1x8x16xi1> to vector<4x8x16xi1>
    %210 = vector.broadcast %cst_54 : f32 to vector<4x8x16xf32>
    %211 = arith.select %209, %203, %210 : vector<4x8x16xi1>, vector<4x8x16xf32>
    %cst_55 = arith.constant dense<0.000000e+00> : vector<4x8xf32>
    %212 = vector.multi_reduction <add>, %211, %cst_55 [2] : vector<4x8x16xf32> to vector<4x8xf32>
    %213 = vector.shape_cast %212 : vector<4x8xf32> to vector<4x8x1xf32>
    %214 = vector.extract_strided_slice %206 {offsets = [0, 0], sizes = [1, 16], strides = [1, 1]} : vector<9x16xf32> to vector<1x16xf32>
    %215 = vector.shape_cast %214 : vector<1x16xf32> to vector<1x1x16xf32>
    %216 = vector.broadcast %213 : vector<4x8x1xf32> to vector<4x8x16xf32>
    %217 = vector.broadcast %215 : vector<1x1x16xf32> to vector<4x8x16xf32>
    %218 = arith.mulf %216, %217 : vector<4x8x16xf32>
    %219 = arith.addf %205, %218 : vector<4x8x16xf32>
    %220 = vector.shape_cast %95 : vector<8x16xi1> to vector<1x8x16xi1>
    %cst_56 = arith.constant 0.000000e+00 : f32
    %221 = vector.shape_cast %220 : vector<1x8x16xi1> to vector<1x8x16xi1>
    %222 = vector.broadcast %221 : vector<1x8x16xi1> to vector<4x8x16xi1>
    %223 = vector.broadcast %cst_56 : f32 to vector<4x8x16xf32>
    %224 = arith.select %222, %203, %223 : vector<4x8x16xi1>, vector<4x8x16xf32>
    %cst_57 = arith.constant dense<0.000000e+00> : vector<4x8xf32>
    %225 = vector.multi_reduction <add>, %224, %cst_57 [2] : vector<4x8x16xf32> to vector<4x8xf32>
    %226 = vector.shape_cast %225 : vector<4x8xf32> to vector<4x8x1xf32>
    %227 = vector.extract_strided_slice %206 {offsets = [1, 0], sizes = [1, 16], strides = [1, 1]} : vector<9x16xf32> to vector<1x16xf32>
    %228 = vector.shape_cast %227 : vector<1x16xf32> to vector<1x1x16xf32>
    %229 = vector.broadcast %226 : vector<4x8x1xf32> to vector<4x8x16xf32>
    %230 = vector.broadcast %228 : vector<1x1x16xf32> to vector<4x8x16xf32>
    %231 = arith.mulf %229, %230 : vector<4x8x16xf32>
    %232 = arith.addf %219, %231 : vector<4x8x16xf32>
    %233 = vector.shape_cast %97 : vector<8x16xi1> to vector<1x8x16xi1>
    %cst_58 = arith.constant 0.000000e+00 : f32
    %234 = vector.shape_cast %233 : vector<1x8x16xi1> to vector<1x8x16xi1>
    %235 = vector.broadcast %234 : vector<1x8x16xi1> to vector<4x8x16xi1>
    %236 = vector.broadcast %cst_58 : f32 to vector<4x8x16xf32>
    %237 = arith.select %235, %203, %236 : vector<4x8x16xi1>, vector<4x8x16xf32>
    %cst_59 = arith.constant dense<0.000000e+00> : vector<4x8xf32>
    %238 = vector.multi_reduction <add>, %237, %cst_59 [2] : vector<4x8x16xf32> to vector<4x8xf32>
    %239 = vector.shape_cast %238 : vector<4x8xf32> to vector<4x8x1xf32>
    %240 = vector.extract_strided_slice %206 {offsets = [2, 0], sizes = [1, 16], strides = [1, 1]} : vector<9x16xf32> to vector<1x16xf32>
    %241 = vector.shape_cast %240 : vector<1x16xf32> to vector<1x1x16xf32>
    %242 = vector.broadcast %239 : vector<4x8x1xf32> to vector<4x8x16xf32>
    %243 = vector.broadcast %241 : vector<1x1x16xf32> to vector<4x8x16xf32>
    %244 = arith.mulf %242, %243 : vector<4x8x16xf32>
    %245 = arith.addf %232, %244 : vector<4x8x16xf32>
    %246 = vector.shape_cast %99 : vector<8x16xi1> to vector<1x8x16xi1>
    %cst_60 = arith.constant 0.000000e+00 : f32
    %247 = vector.shape_cast %246 : vector<1x8x16xi1> to vector<1x8x16xi1>
    %248 = vector.broadcast %247 : vector<1x8x16xi1> to vector<4x8x16xi1>
    %249 = vector.broadcast %cst_60 : f32 to vector<4x8x16xf32>
    %250 = arith.select %248, %203, %249 : vector<4x8x16xi1>, vector<4x8x16xf32>
    %cst_61 = arith.constant dense<0.000000e+00> : vector<4x8xf32>
    %251 = vector.multi_reduction <add>, %250, %cst_61 [2] : vector<4x8x16xf32> to vector<4x8xf32>
    %252 = vector.shape_cast %251 : vector<4x8xf32> to vector<4x8x1xf32>
    %253 = vector.extract_strided_slice %206 {offsets = [3, 0], sizes = [1, 16], strides = [1, 1]} : vector<9x16xf32> to vector<1x16xf32>
    %254 = vector.shape_cast %253 : vector<1x16xf32> to vector<1x1x16xf32>
    %255 = vector.broadcast %252 : vector<4x8x1xf32> to vector<4x8x16xf32>
    %256 = vector.broadcast %254 : vector<1x1x16xf32> to vector<4x8x16xf32>
    %257 = arith.mulf %255, %256 : vector<4x8x16xf32>
    %258 = arith.addf %245, %257 : vector<4x8x16xf32>
    %259 = vector.shape_cast %101 : vector<8x16xi1> to vector<1x8x16xi1>
    %cst_62 = arith.constant 0.000000e+00 : f32
    %260 = vector.shape_cast %259 : vector<1x8x16xi1> to vector<1x8x16xi1>
    %261 = vector.broadcast %260 : vector<1x8x16xi1> to vector<4x8x16xi1>
    %262 = vector.broadcast %cst_62 : f32 to vector<4x8x16xf32>
    %263 = arith.select %261, %203, %262 : vector<4x8x16xi1>, vector<4x8x16xf32>
    %cst_63 = arith.constant dense<0.000000e+00> : vector<4x8xf32>
    %264 = vector.multi_reduction <add>, %263, %cst_63 [2] : vector<4x8x16xf32> to vector<4x8xf32>
    %265 = vector.shape_cast %264 : vector<4x8xf32> to vector<4x8x1xf32>
    %266 = vector.extract_strided_slice %206 {offsets = [4, 0], sizes = [1, 16], strides = [1, 1]} : vector<9x16xf32> to vector<1x16xf32>
    %267 = vector.shape_cast %266 : vector<1x16xf32> to vector<1x1x16xf32>
    %268 = vector.broadcast %265 : vector<4x8x1xf32> to vector<4x8x16xf32>
    %269 = vector.broadcast %267 : vector<1x1x16xf32> to vector<4x8x16xf32>
    %270 = arith.mulf %268, %269 : vector<4x8x16xf32>
    %271 = arith.addf %258, %270 : vector<4x8x16xf32>
    %272 = vector.shape_cast %103 : vector<8x16xi1> to vector<1x8x16xi1>
    %cst_64 = arith.constant 0.000000e+00 : f32
    %273 = vector.shape_cast %272 : vector<1x8x16xi1> to vector<1x8x16xi1>
    %274 = vector.broadcast %273 : vector<1x8x16xi1> to vector<4x8x16xi1>
    %275 = vector.broadcast %cst_64 : f32 to vector<4x8x16xf32>
    %276 = arith.select %274, %203, %275 : vector<4x8x16xi1>, vector<4x8x16xf32>
    %cst_65 = arith.constant dense<0.000000e+00> : vector<4x8xf32>
    %277 = vector.multi_reduction <add>, %276, %cst_65 [2] : vector<4x8x16xf32> to vector<4x8xf32>
    %278 = vector.shape_cast %277 : vector<4x8xf32> to vector<4x8x1xf32>
    %279 = vector.extract_strided_slice %206 {offsets = [5, 0], sizes = [1, 16], strides = [1, 1]} : vector<9x16xf32> to vector<1x16xf32>
    %280 = vector.shape_cast %279 : vector<1x16xf32> to vector<1x1x16xf32>
    %281 = vector.broadcast %278 : vector<4x8x1xf32> to vector<4x8x16xf32>
    %282 = vector.broadcast %280 : vector<1x1x16xf32> to vector<4x8x16xf32>
    %283 = arith.mulf %281, %282 : vector<4x8x16xf32>
    %284 = arith.addf %271, %283 : vector<4x8x16xf32>
    %285 = vector.shape_cast %105 : vector<8x16xi1> to vector<1x8x16xi1>
    %cst_66 = arith.constant 0.000000e+00 : f32
    %286 = vector.shape_cast %285 : vector<1x8x16xi1> to vector<1x8x16xi1>
    %287 = vector.broadcast %286 : vector<1x8x16xi1> to vector<4x8x16xi1>
    %288 = vector.broadcast %cst_66 : f32 to vector<4x8x16xf32>
    %289 = arith.select %287, %203, %288 : vector<4x8x16xi1>, vector<4x8x16xf32>
    %cst_67 = arith.constant dense<0.000000e+00> : vector<4x8xf32>
    %290 = vector.multi_reduction <add>, %289, %cst_67 [2] : vector<4x8x16xf32> to vector<4x8xf32>
    %291 = vector.shape_cast %290 : vector<4x8xf32> to vector<4x8x1xf32>
    %292 = vector.extract_strided_slice %206 {offsets = [6, 0], sizes = [1, 16], strides = [1, 1]} : vector<9x16xf32> to vector<1x16xf32>
    %293 = vector.shape_cast %292 : vector<1x16xf32> to vector<1x1x16xf32>
    %294 = vector.broadcast %291 : vector<4x8x1xf32> to vector<4x8x16xf32>
    %295 = vector.broadcast %293 : vector<1x1x16xf32> to vector<4x8x16xf32>
    %296 = arith.mulf %294, %295 : vector<4x8x16xf32>
    %297 = arith.addf %284, %296 : vector<4x8x16xf32>
    %298 = vector.shape_cast %107 : vector<8x16xi1> to vector<1x8x16xi1>
    %cst_68 = arith.constant 0.000000e+00 : f32
    %299 = vector.shape_cast %298 : vector<1x8x16xi1> to vector<1x8x16xi1>
    %300 = vector.broadcast %299 : vector<1x8x16xi1> to vector<4x8x16xi1>
    %301 = vector.broadcast %cst_68 : f32 to vector<4x8x16xf32>
    %302 = arith.select %300, %203, %301 : vector<4x8x16xi1>, vector<4x8x16xf32>
    %cst_69 = arith.constant dense<0.000000e+00> : vector<4x8xf32>
    %303 = vector.multi_reduction <add>, %302, %cst_69 [2] : vector<4x8x16xf32> to vector<4x8xf32>
    %304 = vector.shape_cast %303 : vector<4x8xf32> to vector<4x8x1xf32>
    %305 = vector.extract_strided_slice %206 {offsets = [7, 0], sizes = [1, 16], strides = [1, 1]} : vector<9x16xf32> to vector<1x16xf32>
    %306 = vector.shape_cast %305 : vector<1x16xf32> to vector<1x1x16xf32>
    %307 = vector.broadcast %304 : vector<4x8x1xf32> to vector<4x8x16xf32>
    %308 = vector.broadcast %306 : vector<1x1x16xf32> to vector<4x8x16xf32>
    %309 = arith.mulf %307, %308 : vector<4x8x16xf32>
    %310 = arith.addf %297, %309 : vector<4x8x16xf32>
    %311 = vector.shape_cast %109 : vector<8x16xi1> to vector<1x8x16xi1>
    %cst_70 = arith.constant 0.000000e+00 : f32
    %312 = vector.shape_cast %311 : vector<1x8x16xi1> to vector<1x8x16xi1>
    %313 = vector.broadcast %312 : vector<1x8x16xi1> to vector<4x8x16xi1>
    %314 = vector.broadcast %cst_70 : f32 to vector<4x8x16xf32>
    %315 = arith.select %313, %203, %314 : vector<4x8x16xi1>, vector<4x8x16xf32>
    %cst_71 = arith.constant dense<0.000000e+00> : vector<4x8xf32>
    %316 = vector.multi_reduction <add>, %315, %cst_71 [2] : vector<4x8x16xf32> to vector<4x8xf32>
    %317 = vector.shape_cast %316 : vector<4x8xf32> to vector<4x8x1xf32>
    %318 = vector.extract_strided_slice %206 {offsets = [8, 0], sizes = [1, 16], strides = [1, 1]} : vector<9x16xf32> to vector<1x16xf32>
    %319 = vector.shape_cast %318 : vector<1x16xf32> to vector<1x1x16xf32>
    %320 = vector.broadcast %317 : vector<4x8x1xf32> to vector<4x8x16xf32>
    %321 = vector.broadcast %319 : vector<1x1x16xf32> to vector<4x8x16xf32>
    %322 = arith.mulf %320, %321 : vector<4x8x16xf32>
    %323 = arith.addf %310, %322 : vector<4x8x16xf32>
    %324 = vector.extract_strided_slice %323 {offsets = [0, 0, 0], sizes = [1, 8, 16], strides = [1, 1, 1]} : vector<4x8x16xf32> to vector<1x8x16xf32>
    %325 = vector.shape_cast %324 : vector<1x8x16xf32> to vector<8x16xf32>
    %326 = vector.extract_strided_slice %323 {offsets = [1, 0, 0], sizes = [1, 8, 16], strides = [1, 1, 1]} : vector<4x8x16xf32> to vector<1x8x16xf32>
    %327 = vector.shape_cast %326 : vector<1x8x16xf32> to vector<8x16xf32>
    %328 = vector.extract_strided_slice %323 {offsets = [2, 0, 0], sizes = [1, 8, 16], strides = [1, 1, 1]} : vector<4x8x16xf32> to vector<1x8x16xf32>
    %329 = vector.shape_cast %328 : vector<1x8x16xf32> to vector<8x16xf32>
    %330 = vector.extract_strided_slice %323 {offsets = [3, 0, 0], sizes = [1, 8, 16], strides = [1, 1, 1]} : vector<4x8x16xf32> to vector<1x8x16xf32>
    %331 = vector.shape_cast %330 : vector<1x8x16xf32> to vector<8x16xf32>
    %332 = tpu.concatenate %325, %327, %329, %331 in 1 : vector<8x16xf32>, vector<8x16xf32>, vector<8x16xf32>, vector<8x16xf32> -> vector<8x64xf32>
    %333 = arith.truncf %332 : vector<8x64xf32> to vector<8x64xbf16>
    %cst_72 = arith.constant dense<0.000000e+00> : vector<8x64xf32>
    %334 = tpu.matmul %333, %25, %cst_72 {dimension_numbers = #tpu.dot_dimension_numbers<[1], [0], [0], [1], [0, 0, 1, 1], [], []>} : vector<8x64xbf16>, vector<64x64xbf16>, vector<8x64xf32> -> vector<8x64xf32>
    %335 = vector.broadcast %29 : vector<1x64xf32> to vector<8x64xf32>
    %336 = arith.addf %334, %335 : vector<8x64xf32>
    %337 = arith.addf %2, %336 : vector<8x64xf32>
    %338 = vector.extract_strided_slice %21 {offsets = [9, 0], sizes = [1, 64], strides = [1, 1]} : vector<16x64xf32> to vector<1x64xf32>
    %339 = vector.extract_strided_slice %21 {offsets = [10, 0], sizes = [1, 64], strides = [1, 1]} : vector<16x64xf32> to vector<1x64xf32>
    %cst_73 = arith.constant dense<0.000000e+00> : vector<8xf32>
    %340 = vector.multi_reduction <add>, %337, %cst_73 [1] : vector<8x64xf32> to vector<8xf32>
    %341 = vector.shape_cast %340 : vector<8xf32> to vector<8x1xf32>
    %cst_74 = arith.constant 6.400000e+01 : f32
    %342 = vector.broadcast %cst_74 : f32 to vector<8x1xf32>
    %343 = arith.divf %341, %342 : vector<8x1xf32>
    %344 = vector.broadcast %343 : vector<8x1xf32> to vector<8x64xf32>
    %345 = arith.subf %337, %344 : vector<8x64xf32>
    %346 = arith.mulf %345, %345 : vector<8x64xf32>
    %cst_75 = arith.constant dense<0.000000e+00> : vector<8xf32>
    %347 = vector.multi_reduction <add>, %346, %cst_75 [1] : vector<8x64xf32> to vector<8xf32>
    %348 = vector.shape_cast %347 : vector<8xf32> to vector<8x1xf32>
    %cst_76 = arith.constant 6.400000e+01 : f32
    %349 = vector.broadcast %cst_76 : f32 to vector<8x1xf32>
    %350 = arith.divf %348, %349 : vector<8x1xf32>
    %cst_77 = arith.constant 9.99999974E-6 : f32
    %351 = vector.broadcast %cst_77 : f32 to vector<8x1xf32>
    %352 = arith.addf %350, %351 : vector<8x1xf32>
    %353 = math.rsqrt %352 : vector<8x1xf32>
    %354 = vector.broadcast %353 : vector<8x1xf32> to vector<8x64xf32>
    %355 = arith.mulf %345, %354 : vector<8x64xf32>
    %356 = vector.broadcast %338 : vector<1x64xf32> to vector<8x64xf32>
    %357 = arith.mulf %355, %356 : vector<8x64xf32>
    %358 = vector.broadcast %339 : vector<1x64xf32> to vector<8x64xf32>
    %359 = arith.addf %357, %358 : vector<8x64xf32>
    %c0_78 = arith.constant 0 : index
    %c0_79 = arith.constant 0 : index
    %360 = vector.load %arg15[%c0_78, %c0_79] : memref<64x64xbf16, #tpu.memory_space<vmem>>, vector<64x64xbf16>
    %c0_80 = arith.constant 0 : index
    %c0_81 = arith.constant 0 : index
    %361 = vector.load %arg16[%c0_80, %c0_81] : memref<64x64xbf16, #tpu.memory_space<vmem>>, vector<64x64xbf16>
    %c0_82 = arith.constant 0 : index
    %c0_83 = arith.constant 0 : index
    %362 = vector.load %arg17[%c0_82, %c0_83] : memref<64x64xbf16, #tpu.memory_space<vmem>>, vector<64x64xbf16>
    %c0_84 = arith.constant 0 : index
    %c0_85 = arith.constant 0 : index
    %363 = vector.load %arg18[%c0_84, %c0_85] : memref<64x64xbf16, #tpu.memory_space<vmem>>, vector<64x64xbf16>
    %364 = vector.extract_strided_slice %21 {offsets = [4, 0], sizes = [1, 64], strides = [1, 1]} : vector<16x64xf32> to vector<1x64xf32>
    %365 = vector.extract_strided_slice %21 {offsets = [5, 0], sizes = [1, 64], strides = [1, 1]} : vector<16x64xf32> to vector<1x64xf32>
    %366 = vector.extract_strided_slice %21 {offsets = [6, 0], sizes = [1, 64], strides = [1, 1]} : vector<16x64xf32> to vector<1x64xf32>
    %367 = vector.extract_strided_slice %21 {offsets = [7, 0], sizes = [1, 64], strides = [1, 1]} : vector<16x64xf32> to vector<1x64xf32>
    %c0_86 = arith.constant 0 : index
    %c0_87 = arith.constant 0 : index
    %368 = vector.load %arg9[%c0_86, %c0_87] : memref<16x9xbf16, #tpu.memory_space<vmem>>, vector<16x9xbf16>
    %c0_88 = arith.constant 0 : index
    %c0_89 = arith.constant 0 : index
    %369 = vector.load %arg10[%c0_88, %c0_89] : memref<9x16xbf16, #tpu.memory_space<vmem>>, vector<9x16xbf16>
    %370 = arith.truncf %359 : vector<8x64xf32> to vector<8x64xbf16>
    %cst_90 = arith.constant dense<0.000000e+00> : vector<8x64xf32>
    %371 = tpu.matmul %370, %360, %cst_90 {dimension_numbers = #tpu.dot_dimension_numbers<[1], [0], [0], [1], [0, 0, 1, 1], [], []>} : vector<8x64xbf16>, vector<64x64xbf16>, vector<8x64xf32> -> vector<8x64xf32>
    %372 = vector.broadcast %364 : vector<1x64xf32> to vector<8x64xf32>
    %373 = arith.addf %371, %372 : vector<8x64xf32>
    %374 = arith.truncf %6 : vector<16x64xf32> to vector<16x64xbf16>
    %cst_91 = arith.constant dense<0.000000e+00> : vector<16x64xf32>
    %375 = tpu.matmul %374, %361, %cst_91 {dimension_numbers = #tpu.dot_dimension_numbers<[1], [0], [0], [1], [0, 0, 1, 1], [], []>} : vector<16x64xbf16>, vector<64x64xbf16>, vector<16x64xf32> -> vector<16x64xf32>
    %376 = vector.broadcast %365 : vector<1x64xf32> to vector<16x64xf32>
    %377 = arith.addf %375, %376 : vector<16x64xf32>
    %378 = arith.truncf %6 : vector<16x64xf32> to vector<16x64xbf16>
    %cst_92 = arith.constant dense<0.000000e+00> : vector<16x64xf32>
    %379 = tpu.matmul %378, %362, %cst_92 {dimension_numbers = #tpu.dot_dimension_numbers<[1], [0], [0], [1], [0, 0, 1, 1], [], []>} : vector<16x64xbf16>, vector<64x64xbf16>, vector<16x64xf32> -> vector<16x64xf32>
    %380 = vector.broadcast %366 : vector<1x64xf32> to vector<16x64xf32>
    %381 = arith.addf %379, %380 : vector<16x64xf32>
    %cst_93 = arith.constant 2.500000e-01 : f32
    %382 = vector.broadcast %cst_93 : f32 to vector<8x64xf32>
    %383 = arith.mulf %373, %382 : vector<8x64xf32>
    %384 = arith.truncf %383 : vector<8x64xf32> to vector<8x64xbf16>
    %385 = vector.extract_strided_slice %384 {offsets = [0, 0], sizes = [8, 16], strides = [1, 1]} : vector<8x64xbf16> to vector<8x16xbf16>
    %386 = vector.extract_strided_slice %384 {offsets = [0, 16], sizes = [8, 16], strides = [1, 1]} : vector<8x64xbf16> to vector<8x16xbf16>
    %387 = vector.extract_strided_slice %384 {offsets = [0, 32], sizes = [8, 16], strides = [1, 1]} : vector<8x64xbf16> to vector<8x16xbf16>
    %388 = vector.extract_strided_slice %384 {offsets = [0, 48], sizes = [8, 16], strides = [1, 1]} : vector<8x64xbf16> to vector<8x16xbf16>
    %389 = vector.shape_cast %385 : vector<8x16xbf16> to vector<1x8x16xbf16>
    %390 = vector.shape_cast %386 : vector<8x16xbf16> to vector<1x8x16xbf16>
    %391 = vector.shape_cast %387 : vector<8x16xbf16> to vector<1x8x16xbf16>
    %392 = vector.shape_cast %388 : vector<8x16xbf16> to vector<1x8x16xbf16>
    %393 = tpu.concatenate %389, %390, %391, %392 in 0 : vector<1x8x16xbf16>, vector<1x8x16xbf16>, vector<1x8x16xbf16>, vector<1x8x16xbf16> -> vector<4x8x16xbf16>
    %394 = arith.truncf %377 : vector<16x64xf32> to vector<16x64xbf16>
    %395 = vector.extract_strided_slice %394 {offsets = [0, 0], sizes = [16, 16], strides = [1, 1]} : vector<16x64xbf16> to vector<16x16xbf16>
    %396 = vector.extract_strided_slice %394 {offsets = [0, 16], sizes = [16, 16], strides = [1, 1]} : vector<16x64xbf16> to vector<16x16xbf16>
    %397 = vector.extract_strided_slice %394 {offsets = [0, 32], sizes = [16, 16], strides = [1, 1]} : vector<16x64xbf16> to vector<16x16xbf16>
    %398 = vector.extract_strided_slice %394 {offsets = [0, 48], sizes = [16, 16], strides = [1, 1]} : vector<16x64xbf16> to vector<16x16xbf16>
    %399 = vector.shape_cast %395 : vector<16x16xbf16> to vector<1x16x16xbf16>
    %400 = vector.shape_cast %396 : vector<16x16xbf16> to vector<1x16x16xbf16>
    %401 = vector.shape_cast %397 : vector<16x16xbf16> to vector<1x16x16xbf16>
    %402 = vector.shape_cast %398 : vector<16x16xbf16> to vector<1x16x16xbf16>
    %403 = tpu.concatenate %399, %400, %401, %402 in 0 : vector<1x16x16xbf16>, vector<1x16x16xbf16>, vector<1x16x16xbf16>, vector<1x16x16xbf16> -> vector<4x16x16xbf16>
    %404 = arith.truncf %381 : vector<16x64xf32> to vector<16x64xbf16>
    %405 = vector.extract_strided_slice %404 {offsets = [0, 0], sizes = [16, 16], strides = [1, 1]} : vector<16x64xbf16> to vector<16x16xbf16>
    %406 = vector.extract_strided_slice %404 {offsets = [0, 16], sizes = [16, 16], strides = [1, 1]} : vector<16x64xbf16> to vector<16x16xbf16>
    %407 = vector.extract_strided_slice %404 {offsets = [0, 32], sizes = [16, 16], strides = [1, 1]} : vector<16x64xbf16> to vector<16x16xbf16>
    %408 = vector.extract_strided_slice %404 {offsets = [0, 48], sizes = [16, 16], strides = [1, 1]} : vector<16x64xbf16> to vector<16x16xbf16>
    %409 = vector.shape_cast %405 : vector<16x16xbf16> to vector<1x16x16xbf16>
    %410 = vector.shape_cast %406 : vector<16x16xbf16> to vector<1x16x16xbf16>
    %411 = vector.shape_cast %407 : vector<16x16xbf16> to vector<1x16x16xbf16>
    %412 = vector.shape_cast %408 : vector<16x16xbf16> to vector<1x16x16xbf16>
    %413 = tpu.concatenate %409, %410, %411, %412 in 0 : vector<1x16x16xbf16>, vector<1x16x16xbf16>, vector<1x16x16xbf16>, vector<1x16x16xbf16> -> vector<4x16x16xbf16>
    "tpu.trace_start"() <{level = 10 : i32, message = "hqd,hkd->hqk"}> : () -> ()
    %cst_94 = arith.constant dense<0.000000e+00> : vector<4x8x16xf32>
    %414 = tpu.matmul %393, %403, %cst_94 {dimension_numbers = #tpu.dot_dimension_numbers<[2], [2], [1], [1], [0, 0, 0, 1, 1, 1], [0], [0]>} : vector<4x8x16xbf16>, vector<4x16x16xbf16>, vector<4x8x16xf32> -> vector<4x8x16xf32>
    "tpu.trace_stop"() : () -> ()
    %415 = vector.shape_cast %368 : vector<16x9xbf16> to vector<1x16x9xbf16>
    %416 = vector.shape_cast %415 : vector<1x16x9xbf16> to vector<1x16x9xbf16>
    %417 = vector.broadcast %416 : vector<1x16x9xbf16> to vector<4x16x9xbf16>
    "tpu.trace_start"() <{level = 10 : i32, message = "hqd,hdr->hqr"}> : () -> ()
    %cst_95 = arith.constant dense<0.000000e+00> : vector<4x8x9xf32>
    %418 = tpu.matmul %393, %417, %cst_95 {dimension_numbers = #tpu.dot_dimension_numbers<[2], [1], [1], [2], [0, 0, 0, 1, 1, 2], [0], [0]>} : vector<4x8x16xbf16>, vector<4x16x9xbf16>, vector<4x8x9xf32> -> vector<4x8x9xf32>
    "tpu.trace_stop"() : () -> ()
    %419 = tpu.iota {dimensions = array<i32: 0>} : vector<8x16xi32>
    %420 = vector.broadcast %0 : i32 to vector<8x16xi32>
    %421 = arith.addi %419, %420 : vector<8x16xi32>
    %422 = tpu.iota {dimensions = array<i32: 1>} : vector<8x16xi32>
    %423 = arith.subi %422, %421 : vector<8x16xi32>
    %c-4_i32_96 = arith.constant -4 : i32
    %c4_i32_97 = arith.constant 4 : i32
    %424 = vector.broadcast %c-4_i32_96 : i32 to vector<8x16xi32>
    %425 = arith.maxsi %424, %423 : vector<8x16xi32>
    %426 = vector.broadcast %c4_i32_97 : i32 to vector<8x16xi32>
    %427 = arith.minsi %426, %425 : vector<8x16xi32>
    %c4_i32_98 = arith.constant 4 : i32
    %428 = vector.broadcast %c4_i32_98 : i32 to vector<8x16xi32>
    %429 = arith.addi %427, %428 : vector<8x16xi32>
    %c0_i32_99 = arith.constant 0 : i32
    %430 = vector.broadcast %c0_i32_99 : i32 to vector<8x16xi32>
    %431 = arith.cmpi eq, %429, %430 : vector<8x16xi32>
    %c1_i32_100 = arith.constant 1 : i32
    %432 = vector.broadcast %c1_i32_100 : i32 to vector<8x16xi32>
    %433 = arith.cmpi eq, %429, %432 : vector<8x16xi32>
    %c2_i32_101 = arith.constant 2 : i32
    %434 = vector.broadcast %c2_i32_101 : i32 to vector<8x16xi32>
    %435 = arith.cmpi eq, %429, %434 : vector<8x16xi32>
    %c3_i32_102 = arith.constant 3 : i32
    %436 = vector.broadcast %c3_i32_102 : i32 to vector<8x16xi32>
    %437 = arith.cmpi eq, %429, %436 : vector<8x16xi32>
    %c4_i32_103 = arith.constant 4 : i32
    %438 = vector.broadcast %c4_i32_103 : i32 to vector<8x16xi32>
    %439 = arith.cmpi eq, %429, %438 : vector<8x16xi32>
    %c5_i32_104 = arith.constant 5 : i32
    %440 = vector.broadcast %c5_i32_104 : i32 to vector<8x16xi32>
    %441 = arith.cmpi eq, %429, %440 : vector<8x16xi32>
    %c6_i32_105 = arith.constant 6 : i32
    %442 = vector.broadcast %c6_i32_105 : i32 to vector<8x16xi32>
    %443 = arith.cmpi eq, %429, %442 : vector<8x16xi32>
    %c7_i32_106 = arith.constant 7 : i32
    %444 = vector.broadcast %c7_i32_106 : i32 to vector<8x16xi32>
    %445 = arith.cmpi eq, %429, %444 : vector<8x16xi32>
    %c8_i32_107 = arith.constant 8 : i32
    %446 = vector.broadcast %c8_i32_107 : i32 to vector<8x16xi32>
    %447 = arith.cmpi eq, %429, %446 : vector<8x16xi32>
    %448 = vector.shape_cast %431 : vector<8x16xi1> to vector<1x8x16xi1>
    %449 = vector.extract_strided_slice %418 {offsets = [0, 0, 0], sizes = [4, 8, 1], strides = [1, 1, 1]} : vector<4x8x9xf32> to vector<4x8x1xf32>
    %cst_108 = arith.constant 0.000000e+00 : f32
    %450 = vector.shape_cast %448 : vector<1x8x16xi1> to vector<1x8x16xi1>
    %451 = vector.broadcast %450 : vector<1x8x16xi1> to vector<4x8x16xi1>
    %452 = vector.shape_cast %449 : vector<4x8x1xf32> to vector<4x8x1xf32>
    %453 = vector.broadcast %452 : vector<4x8x1xf32> to vector<4x8x16xf32>
    %454 = vector.broadcast %cst_108 : f32 to vector<4x8x16xf32>
    %455 = arith.select %451, %453, %454 : vector<4x8x16xi1>, vector<4x8x16xf32>
    %456 = arith.addf %414, %455 : vector<4x8x16xf32>
    %457 = vector.shape_cast %433 : vector<8x16xi1> to vector<1x8x16xi1>
    %458 = vector.extract_strided_slice %418 {offsets = [0, 0, 1], sizes = [4, 8, 1], strides = [1, 1, 1]} : vector<4x8x9xf32> to vector<4x8x1xf32>
    %cst_109 = arith.constant 0.000000e+00 : f32
    %459 = vector.shape_cast %457 : vector<1x8x16xi1> to vector<1x8x16xi1>
    %460 = vector.broadcast %459 : vector<1x8x16xi1> to vector<4x8x16xi1>
    %461 = vector.shape_cast %458 : vector<4x8x1xf32> to vector<4x8x1xf32>
    %462 = vector.broadcast %461 : vector<4x8x1xf32> to vector<4x8x16xf32>
    %463 = vector.broadcast %cst_109 : f32 to vector<4x8x16xf32>
    %464 = arith.select %460, %462, %463 : vector<4x8x16xi1>, vector<4x8x16xf32>
    %465 = arith.addf %456, %464 : vector<4x8x16xf32>
    %466 = vector.shape_cast %435 : vector<8x16xi1> to vector<1x8x16xi1>
    %467 = vector.extract_strided_slice %418 {offsets = [0, 0, 2], sizes = [4, 8, 1], strides = [1, 1, 1]} : vector<4x8x9xf32> to vector<4x8x1xf32>
    %cst_110 = arith.constant 0.000000e+00 : f32
    %468 = vector.shape_cast %466 : vector<1x8x16xi1> to vector<1x8x16xi1>
    %469 = vector.broadcast %468 : vector<1x8x16xi1> to vector<4x8x16xi1>
    %470 = vector.shape_cast %467 : vector<4x8x1xf32> to vector<4x8x1xf32>
    %471 = vector.broadcast %470 : vector<4x8x1xf32> to vector<4x8x16xf32>
    %472 = vector.broadcast %cst_110 : f32 to vector<4x8x16xf32>
    %473 = arith.select %469, %471, %472 : vector<4x8x16xi1>, vector<4x8x16xf32>
    %474 = arith.addf %465, %473 : vector<4x8x16xf32>
    %475 = vector.shape_cast %437 : vector<8x16xi1> to vector<1x8x16xi1>
    %476 = vector.extract_strided_slice %418 {offsets = [0, 0, 3], sizes = [4, 8, 1], strides = [1, 1, 1]} : vector<4x8x9xf32> to vector<4x8x1xf32>
    %cst_111 = arith.constant 0.000000e+00 : f32
    %477 = vector.shape_cast %475 : vector<1x8x16xi1> to vector<1x8x16xi1>
    %478 = vector.broadcast %477 : vector<1x8x16xi1> to vector<4x8x16xi1>
    %479 = vector.shape_cast %476 : vector<4x8x1xf32> to vector<4x8x1xf32>
    %480 = vector.broadcast %479 : vector<4x8x1xf32> to vector<4x8x16xf32>
    %481 = vector.broadcast %cst_111 : f32 to vector<4x8x16xf32>
    %482 = arith.select %478, %480, %481 : vector<4x8x16xi1>, vector<4x8x16xf32>
    %483 = arith.addf %474, %482 : vector<4x8x16xf32>
    %484 = vector.shape_cast %439 : vector<8x16xi1> to vector<1x8x16xi1>
    %485 = vector.extract_strided_slice %418 {offsets = [0, 0, 4], sizes = [4, 8, 1], strides = [1, 1, 1]} : vector<4x8x9xf32> to vector<4x8x1xf32>
    %cst_112 = arith.constant 0.000000e+00 : f32
    %486 = vector.shape_cast %484 : vector<1x8x16xi1> to vector<1x8x16xi1>
    %487 = vector.broadcast %486 : vector<1x8x16xi1> to vector<4x8x16xi1>
    %488 = vector.shape_cast %485 : vector<4x8x1xf32> to vector<4x8x1xf32>
    %489 = vector.broadcast %488 : vector<4x8x1xf32> to vector<4x8x16xf32>
    %490 = vector.broadcast %cst_112 : f32 to vector<4x8x16xf32>
    %491 = arith.select %487, %489, %490 : vector<4x8x16xi1>, vector<4x8x16xf32>
    %492 = arith.addf %483, %491 : vector<4x8x16xf32>
    %493 = vector.shape_cast %441 : vector<8x16xi1> to vector<1x8x16xi1>
    %494 = vector.extract_strided_slice %418 {offsets = [0, 0, 5], sizes = [4, 8, 1], strides = [1, 1, 1]} : vector<4x8x9xf32> to vector<4x8x1xf32>
    %cst_113 = arith.constant 0.000000e+00 : f32
    %495 = vector.shape_cast %493 : vector<1x8x16xi1> to vector<1x8x16xi1>
    %496 = vector.broadcast %495 : vector<1x8x16xi1> to vector<4x8x16xi1>
    %497 = vector.shape_cast %494 : vector<4x8x1xf32> to vector<4x8x1xf32>
    %498 = vector.broadcast %497 : vector<4x8x1xf32> to vector<4x8x16xf32>
    %499 = vector.broadcast %cst_113 : f32 to vector<4x8x16xf32>
    %500 = arith.select %496, %498, %499 : vector<4x8x16xi1>, vector<4x8x16xf32>
    %501 = arith.addf %492, %500 : vector<4x8x16xf32>
    %502 = vector.shape_cast %443 : vector<8x16xi1> to vector<1x8x16xi1>
    %503 = vector.extract_strided_slice %418 {offsets = [0, 0, 6], sizes = [4, 8, 1], strides = [1, 1, 1]} : vector<4x8x9xf32> to vector<4x8x1xf32>
    %cst_114 = arith.constant 0.000000e+00 : f32
    %504 = vector.shape_cast %502 : vector<1x8x16xi1> to vector<1x8x16xi1>
    %505 = vector.broadcast %504 : vector<1x8x16xi1> to vector<4x8x16xi1>
    %506 = vector.shape_cast %503 : vector<4x8x1xf32> to vector<4x8x1xf32>
    %507 = vector.broadcast %506 : vector<4x8x1xf32> to vector<4x8x16xf32>
    %508 = vector.broadcast %cst_114 : f32 to vector<4x8x16xf32>
    %509 = arith.select %505, %507, %508 : vector<4x8x16xi1>, vector<4x8x16xf32>
    %510 = arith.addf %501, %509 : vector<4x8x16xf32>
    %511 = vector.shape_cast %445 : vector<8x16xi1> to vector<1x8x16xi1>
    %512 = vector.extract_strided_slice %418 {offsets = [0, 0, 7], sizes = [4, 8, 1], strides = [1, 1, 1]} : vector<4x8x9xf32> to vector<4x8x1xf32>
    %cst_115 = arith.constant 0.000000e+00 : f32
    %513 = vector.shape_cast %511 : vector<1x8x16xi1> to vector<1x8x16xi1>
    %514 = vector.broadcast %513 : vector<1x8x16xi1> to vector<4x8x16xi1>
    %515 = vector.shape_cast %512 : vector<4x8x1xf32> to vector<4x8x1xf32>
    %516 = vector.broadcast %515 : vector<4x8x1xf32> to vector<4x8x16xf32>
    %517 = vector.broadcast %cst_115 : f32 to vector<4x8x16xf32>
    %518 = arith.select %514, %516, %517 : vector<4x8x16xi1>, vector<4x8x16xf32>
    %519 = arith.addf %510, %518 : vector<4x8x16xf32>
    %520 = vector.shape_cast %447 : vector<8x16xi1> to vector<1x8x16xi1>
    %521 = vector.extract_strided_slice %418 {offsets = [0, 0, 8], sizes = [4, 8, 1], strides = [1, 1, 1]} : vector<4x8x9xf32> to vector<4x8x1xf32>
    %cst_116 = arith.constant 0.000000e+00 : f32
    %522 = vector.shape_cast %520 : vector<1x8x16xi1> to vector<1x8x16xi1>
    %523 = vector.broadcast %522 : vector<1x8x16xi1> to vector<4x8x16xi1>
    %524 = vector.shape_cast %521 : vector<4x8x1xf32> to vector<4x8x1xf32>
    %525 = vector.broadcast %524 : vector<4x8x1xf32> to vector<4x8x16xf32>
    %526 = vector.broadcast %cst_116 : f32 to vector<4x8x16xf32>
    %527 = arith.select %523, %525, %526 : vector<4x8x16xi1>, vector<4x8x16xf32>
    %528 = arith.addf %519, %527 : vector<4x8x16xf32>
    %529 = vector.shape_cast %20 : vector<8x16xf32> to vector<1x8x16xf32>
    %530 = vector.broadcast %529 : vector<1x8x16xf32> to vector<4x8x16xf32>
    %531 = arith.addf %528, %530 : vector<4x8x16xf32>
    %cst_117 = arith.constant dense<0xFF800000> : vector<4x8xf32>
    %532 = vector.multi_reduction <maximumf>, %531, %cst_117 [2] : vector<4x8x16xf32> to vector<4x8xf32>
    %533 = vector.shape_cast %532 : vector<4x8xf32> to vector<4x8x1xf32>
    %534 = vector.broadcast %533 : vector<4x8x1xf32> to vector<4x8x16xf32>
    %535 = arith.subf %531, %534 : vector<4x8x16xf32>
    %536 = math.exp %535 : vector<4x8x16xf32>
    %cst_118 = arith.constant dense<0.000000e+00> : vector<4x8xf32>
    %537 = vector.multi_reduction <add>, %536, %cst_118 [2] : vector<4x8x16xf32> to vector<4x8xf32>
    %538 = vector.shape_cast %537 : vector<4x8xf32> to vector<4x8x1xf32>
    %539 = tpu.reciprocal %538 {approx = true} : vector<4x8x1xf32> -> vector<4x8x1xf32>
    %540 = vector.broadcast %539 : vector<4x8x1xf32> to vector<4x8x16xf32>
    %541 = arith.mulf %536, %540 : vector<4x8x16xf32>
    %542 = arith.truncf %541 : vector<4x8x16xf32> to vector<4x8x16xbf16>
    "tpu.trace_start"() <{level = 10 : i32, message = "hqk,hkd->hqd"}> : () -> ()
    %cst_119 = arith.constant dense<0.000000e+00> : vector<4x8x16xf32>
    %543 = tpu.matmul %542, %413, %cst_119 {dimension_numbers = #tpu.dot_dimension_numbers<[2], [1], [1], [2], [0, 0, 0, 1, 1, 2], [0], [0]>} : vector<4x8x16xbf16>, vector<4x16x16xbf16>, vector<4x8x16xf32> -> vector<4x8x16xf32>
    "tpu.trace_stop"() : () -> ()
    %544 = arith.extf %369 : vector<9x16xbf16> to vector<9x16xf32>
    %545 = vector.shape_cast %431 : vector<8x16xi1> to vector<1x8x16xi1>
    %cst_120 = arith.constant 0.000000e+00 : f32
    %546 = vector.shape_cast %545 : vector<1x8x16xi1> to vector<1x8x16xi1>
    %547 = vector.broadcast %546 : vector<1x8x16xi1> to vector<4x8x16xi1>
    %548 = vector.broadcast %cst_120 : f32 to vector<4x8x16xf32>
    %549 = arith.select %547, %541, %548 : vector<4x8x16xi1>, vector<4x8x16xf32>
    %cst_121 = arith.constant dense<0.000000e+00> : vector<4x8xf32>
    %550 = vector.multi_reduction <add>, %549, %cst_121 [2] : vector<4x8x16xf32> to vector<4x8xf32>
    %551 = vector.shape_cast %550 : vector<4x8xf32> to vector<4x8x1xf32>
    %552 = vector.extract_strided_slice %544 {offsets = [0, 0], sizes = [1, 16], strides = [1, 1]} : vector<9x16xf32> to vector<1x16xf32>
    %553 = vector.shape_cast %552 : vector<1x16xf32> to vector<1x1x16xf32>
    %554 = vector.broadcast %551 : vector<4x8x1xf32> to vector<4x8x16xf32>
    %555 = vector.broadcast %553 : vector<1x1x16xf32> to vector<4x8x16xf32>
    %556 = arith.mulf %554, %555 : vector<4x8x16xf32>
    %557 = arith.addf %543, %556 : vector<4x8x16xf32>
    %558 = vector.shape_cast %433 : vector<8x16xi1> to vector<1x8x16xi1>
    %cst_122 = arith.constant 0.000000e+00 : f32
    %559 = vector.shape_cast %558 : vector<1x8x16xi1> to vector<1x8x16xi1>
    %560 = vector.broadcast %559 : vector<1x8x16xi1> to vector<4x8x16xi1>
    %561 = vector.broadcast %cst_122 : f32 to vector<4x8x16xf32>
    %562 = arith.select %560, %541, %561 : vector<4x8x16xi1>, vector<4x8x16xf32>
    %cst_123 = arith.constant dense<0.000000e+00> : vector<4x8xf32>
    %563 = vector.multi_reduction <add>, %562, %cst_123 [2] : vector<4x8x16xf32> to vector<4x8xf32>
    %564 = vector.shape_cast %563 : vector<4x8xf32> to vector<4x8x1xf32>
    %565 = vector.extract_strided_slice %544 {offsets = [1, 0], sizes = [1, 16], strides = [1, 1]} : vector<9x16xf32> to vector<1x16xf32>
    %566 = vector.shape_cast %565 : vector<1x16xf32> to vector<1x1x16xf32>
    %567 = vector.broadcast %564 : vector<4x8x1xf32> to vector<4x8x16xf32>
    %568 = vector.broadcast %566 : vector<1x1x16xf32> to vector<4x8x16xf32>
    %569 = arith.mulf %567, %568 : vector<4x8x16xf32>
    %570 = arith.addf %557, %569 : vector<4x8x16xf32>
    %571 = vector.shape_cast %435 : vector<8x16xi1> to vector<1x8x16xi1>
    %cst_124 = arith.constant 0.000000e+00 : f32
    %572 = vector.shape_cast %571 : vector<1x8x16xi1> to vector<1x8x16xi1>
    %573 = vector.broadcast %572 : vector<1x8x16xi1> to vector<4x8x16xi1>
    %574 = vector.broadcast %cst_124 : f32 to vector<4x8x16xf32>
    %575 = arith.select %573, %541, %574 : vector<4x8x16xi1>, vector<4x8x16xf32>
    %cst_125 = arith.constant dense<0.000000e+00> : vector<4x8xf32>
    %576 = vector.multi_reduction <add>, %575, %cst_125 [2] : vector<4x8x16xf32> to vector<4x8xf32>
    %577 = vector.shape_cast %576 : vector<4x8xf32> to vector<4x8x1xf32>
    %578 = vector.extract_strided_slice %544 {offsets = [2, 0], sizes = [1, 16], strides = [1, 1]} : vector<9x16xf32> to vector<1x16xf32>
    %579 = vector.shape_cast %578 : vector<1x16xf32> to vector<1x1x16xf32>
    %580 = vector.broadcast %577 : vector<4x8x1xf32> to vector<4x8x16xf32>
    %581 = vector.broadcast %579 : vector<1x1x16xf32> to vector<4x8x16xf32>
    %582 = arith.mulf %580, %581 : vector<4x8x16xf32>
    %583 = arith.addf %570, %582 : vector<4x8x16xf32>
    %584 = vector.shape_cast %437 : vector<8x16xi1> to vector<1x8x16xi1>
    %cst_126 = arith.constant 0.000000e+00 : f32
    %585 = vector.shape_cast %584 : vector<1x8x16xi1> to vector<1x8x16xi1>
    %586 = vector.broadcast %585 : vector<1x8x16xi1> to vector<4x8x16xi1>
    %587 = vector.broadcast %cst_126 : f32 to vector<4x8x16xf32>
    %588 = arith.select %586, %541, %587 : vector<4x8x16xi1>, vector<4x8x16xf32>
    %cst_127 = arith.constant dense<0.000000e+00> : vector<4x8xf32>
    %589 = vector.multi_reduction <add>, %588, %cst_127 [2] : vector<4x8x16xf32> to vector<4x8xf32>
    %590 = vector.shape_cast %589 : vector<4x8xf32> to vector<4x8x1xf32>
    %591 = vector.extract_strided_slice %544 {offsets = [3, 0], sizes = [1, 16], strides = [1, 1]} : vector<9x16xf32> to vector<1x16xf32>
    %592 = vector.shape_cast %591 : vector<1x16xf32> to vector<1x1x16xf32>
    %593 = vector.broadcast %590 : vector<4x8x1xf32> to vector<4x8x16xf32>
    %594 = vector.broadcast %592 : vector<1x1x16xf32> to vector<4x8x16xf32>
    %595 = arith.mulf %593, %594 : vector<4x8x16xf32>
    %596 = arith.addf %583, %595 : vector<4x8x16xf32>
    %597 = vector.shape_cast %439 : vector<8x16xi1> to vector<1x8x16xi1>
    %cst_128 = arith.constant 0.000000e+00 : f32
    %598 = vector.shape_cast %597 : vector<1x8x16xi1> to vector<1x8x16xi1>
    %599 = vector.broadcast %598 : vector<1x8x16xi1> to vector<4x8x16xi1>
    %600 = vector.broadcast %cst_128 : f32 to vector<4x8x16xf32>
    %601 = arith.select %599, %541, %600 : vector<4x8x16xi1>, vector<4x8x16xf32>
    %cst_129 = arith.constant dense<0.000000e+00> : vector<4x8xf32>
    %602 = vector.multi_reduction <add>, %601, %cst_129 [2] : vector<4x8x16xf32> to vector<4x8xf32>
    %603 = vector.shape_cast %602 : vector<4x8xf32> to vector<4x8x1xf32>
    %604 = vector.extract_strided_slice %544 {offsets = [4, 0], sizes = [1, 16], strides = [1, 1]} : vector<9x16xf32> to vector<1x16xf32>
    %605 = vector.shape_cast %604 : vector<1x16xf32> to vector<1x1x16xf32>
    %606 = vector.broadcast %603 : vector<4x8x1xf32> to vector<4x8x16xf32>
    %607 = vector.broadcast %605 : vector<1x1x16xf32> to vector<4x8x16xf32>
    %608 = arith.mulf %606, %607 : vector<4x8x16xf32>
    %609 = arith.addf %596, %608 : vector<4x8x16xf32>
    %610 = vector.shape_cast %441 : vector<8x16xi1> to vector<1x8x16xi1>
    %cst_130 = arith.constant 0.000000e+00 : f32
    %611 = vector.shape_cast %610 : vector<1x8x16xi1> to vector<1x8x16xi1>
    %612 = vector.broadcast %611 : vector<1x8x16xi1> to vector<4x8x16xi1>
    %613 = vector.broadcast %cst_130 : f32 to vector<4x8x16xf32>
    %614 = arith.select %612, %541, %613 : vector<4x8x16xi1>, vector<4x8x16xf32>
    %cst_131 = arith.constant dense<0.000000e+00> : vector<4x8xf32>
    %615 = vector.multi_reduction <add>, %614, %cst_131 [2] : vector<4x8x16xf32> to vector<4x8xf32>
    %616 = vector.shape_cast %615 : vector<4x8xf32> to vector<4x8x1xf32>
    %617 = vector.extract_strided_slice %544 {offsets = [5, 0], sizes = [1, 16], strides = [1, 1]} : vector<9x16xf32> to vector<1x16xf32>
    %618 = vector.shape_cast %617 : vector<1x16xf32> to vector<1x1x16xf32>
    %619 = vector.broadcast %616 : vector<4x8x1xf32> to vector<4x8x16xf32>
    %620 = vector.broadcast %618 : vector<1x1x16xf32> to vector<4x8x16xf32>
    %621 = arith.mulf %619, %620 : vector<4x8x16xf32>
    %622 = arith.addf %609, %621 : vector<4x8x16xf32>
    %623 = vector.shape_cast %443 : vector<8x16xi1> to vector<1x8x16xi1>
    %cst_132 = arith.constant 0.000000e+00 : f32
    %624 = vector.shape_cast %623 : vector<1x8x16xi1> to vector<1x8x16xi1>
    %625 = vector.broadcast %624 : vector<1x8x16xi1> to vector<4x8x16xi1>
    %626 = vector.broadcast %cst_132 : f32 to vector<4x8x16xf32>
    %627 = arith.select %625, %541, %626 : vector<4x8x16xi1>, vector<4x8x16xf32>
    %cst_133 = arith.constant dense<0.000000e+00> : vector<4x8xf32>
    %628 = vector.multi_reduction <add>, %627, %cst_133 [2] : vector<4x8x16xf32> to vector<4x8xf32>
    %629 = vector.shape_cast %628 : vector<4x8xf32> to vector<4x8x1xf32>
    %630 = vector.extract_strided_slice %544 {offsets = [6, 0], sizes = [1, 16], strides = [1, 1]} : vector<9x16xf32> to vector<1x16xf32>
    %631 = vector.shape_cast %630 : vector<1x16xf32> to vector<1x1x16xf32>
    %632 = vector.broadcast %629 : vector<4x8x1xf32> to vector<4x8x16xf32>
    %633 = vector.broadcast %631 : vector<1x1x16xf32> to vector<4x8x16xf32>
    %634 = arith.mulf %632, %633 : vector<4x8x16xf32>
    %635 = arith.addf %622, %634 : vector<4x8x16xf32>
    %636 = vector.shape_cast %445 : vector<8x16xi1> to vector<1x8x16xi1>
    %cst_134 = arith.constant 0.000000e+00 : f32
    %637 = vector.shape_cast %636 : vector<1x8x16xi1> to vector<1x8x16xi1>
    %638 = vector.broadcast %637 : vector<1x8x16xi1> to vector<4x8x16xi1>
    %639 = vector.broadcast %cst_134 : f32 to vector<4x8x16xf32>
    %640 = arith.select %638, %541, %639 : vector<4x8x16xi1>, vector<4x8x16xf32>
    %cst_135 = arith.constant dense<0.000000e+00> : vector<4x8xf32>
    %641 = vector.multi_reduction <add>, %640, %cst_135 [2] : vector<4x8x16xf32> to vector<4x8xf32>
    %642 = vector.shape_cast %641 : vector<4x8xf32> to vector<4x8x1xf32>
    %643 = vector.extract_strided_slice %544 {offsets = [7, 0], sizes = [1, 16], strides = [1, 1]} : vector<9x16xf32> to vector<1x16xf32>
    %644 = vector.shape_cast %643 : vector<1x16xf32> to vector<1x1x16xf32>
    %645 = vector.broadcast %642 : vector<4x8x1xf32> to vector<4x8x16xf32>
    %646 = vector.broadcast %644 : vector<1x1x16xf32> to vector<4x8x16xf32>
    %647 = arith.mulf %645, %646 : vector<4x8x16xf32>
    %648 = arith.addf %635, %647 : vector<4x8x16xf32>
    %649 = vector.shape_cast %447 : vector<8x16xi1> to vector<1x8x16xi1>
    %cst_136 = arith.constant 0.000000e+00 : f32
    %650 = vector.shape_cast %649 : vector<1x8x16xi1> to vector<1x8x16xi1>
    %651 = vector.broadcast %650 : vector<1x8x16xi1> to vector<4x8x16xi1>
    %652 = vector.broadcast %cst_136 : f32 to vector<4x8x16xf32>
    %653 = arith.select %651, %541, %652 : vector<4x8x16xi1>, vector<4x8x16xf32>
    %cst_137 = arith.constant dense<0.000000e+00> : vector<4x8xf32>
    %654 = vector.multi_reduction <add>, %653, %cst_137 [2] : vector<4x8x16xf32> to vector<4x8xf32>
    %655 = vector.shape_cast %654 : vector<4x8xf32> to vector<4x8x1xf32>
    %656 = vector.extract_strided_slice %544 {offsets = [8, 0], sizes = [1, 16], strides = [1, 1]} : vector<9x16xf32> to vector<1x16xf32>
    %657 = vector.shape_cast %656 : vector<1x16xf32> to vector<1x1x16xf32>
    %658 = vector.broadcast %655 : vector<4x8x1xf32> to vector<4x8x16xf32>
    %659 = vector.broadcast %657 : vector<1x1x16xf32> to vector<4x8x16xf32>
    %660 = arith.mulf %658, %659 : vector<4x8x16xf32>
    %661 = arith.addf %648, %660 : vector<4x8x16xf32>
    %662 = vector.extract_strided_slice %661 {offsets = [0, 0, 0], sizes = [1, 8, 16], strides = [1, 1, 1]} : vector<4x8x16xf32> to vector<1x8x16xf32>
    %663 = vector.shape_cast %662 : vector<1x8x16xf32> to vector<8x16xf32>
    %664 = vector.extract_strided_slice %661 {offsets = [1, 0, 0], sizes = [1, 8, 16], strides = [1, 1, 1]} : vector<4x8x16xf32> to vector<1x8x16xf32>
    %665 = vector.shape_cast %664 : vector<1x8x16xf32> to vector<8x16xf32>
    %666 = vector.extract_strided_slice %661 {offsets = [2, 0, 0], sizes = [1, 8, 16], strides = [1, 1, 1]} : vector<4x8x16xf32> to vector<1x8x16xf32>
    %667 = vector.shape_cast %666 : vector<1x8x16xf32> to vector<8x16xf32>
    %668 = vector.extract_strided_slice %661 {offsets = [3, 0, 0], sizes = [1, 8, 16], strides = [1, 1, 1]} : vector<4x8x16xf32> to vector<1x8x16xf32>
    %669 = vector.shape_cast %668 : vector<1x8x16xf32> to vector<8x16xf32>
    %670 = tpu.concatenate %663, %665, %667, %669 in 1 : vector<8x16xf32>, vector<8x16xf32>, vector<8x16xf32>, vector<8x16xf32> -> vector<8x64xf32>
    %671 = arith.truncf %670 : vector<8x64xf32> to vector<8x64xbf16>
    %cst_138 = arith.constant dense<0.000000e+00> : vector<8x64xf32>
    %672 = tpu.matmul %671, %363, %cst_138 {dimension_numbers = #tpu.dot_dimension_numbers<[1], [0], [0], [1], [0, 0, 1, 1], [], []>} : vector<8x64xbf16>, vector<64x64xbf16>, vector<8x64xf32> -> vector<8x64xf32>
    %673 = vector.broadcast %367 : vector<1x64xf32> to vector<8x64xf32>
    %674 = arith.addf %672, %673 : vector<8x64xf32>
    %675 = arith.addf %359, %674 : vector<8x64xf32>
    %676 = vector.extract_strided_slice %21 {offsets = [11, 0], sizes = [1, 64], strides = [1, 1]} : vector<16x64xf32> to vector<1x64xf32>
    %677 = vector.extract_strided_slice %21 {offsets = [12, 0], sizes = [1, 64], strides = [1, 1]} : vector<16x64xf32> to vector<1x64xf32>
    %cst_139 = arith.constant dense<0.000000e+00> : vector<8xf32>
    %678 = vector.multi_reduction <add>, %675, %cst_139 [1] : vector<8x64xf32> to vector<8xf32>
    %679 = vector.shape_cast %678 : vector<8xf32> to vector<8x1xf32>
    %cst_140 = arith.constant 6.400000e+01 : f32
    %680 = vector.broadcast %cst_140 : f32 to vector<8x1xf32>
    %681 = arith.divf %679, %680 : vector<8x1xf32>
    %682 = vector.broadcast %681 : vector<8x1xf32> to vector<8x64xf32>
    %683 = arith.subf %675, %682 : vector<8x64xf32>
    %684 = arith.mulf %683, %683 : vector<8x64xf32>
    %cst_141 = arith.constant dense<0.000000e+00> : vector<8xf32>
    %685 = vector.multi_reduction <add>, %684, %cst_141 [1] : vector<8x64xf32> to vector<8xf32>
    %686 = vector.shape_cast %685 : vector<8xf32> to vector<8x1xf32>
    %cst_142 = arith.constant 6.400000e+01 : f32
    %687 = vector.broadcast %cst_142 : f32 to vector<8x1xf32>
    %688 = arith.divf %686, %687 : vector<8x1xf32>
    %cst_143 = arith.constant 9.99999974E-6 : f32
    %689 = vector.broadcast %cst_143 : f32 to vector<8x1xf32>
    %690 = arith.addf %688, %689 : vector<8x1xf32>
    %691 = math.rsqrt %690 : vector<8x1xf32>
    %692 = vector.broadcast %691 : vector<8x1xf32> to vector<8x64xf32>
    %693 = arith.mulf %683, %692 : vector<8x64xf32>
    %694 = vector.broadcast %676 : vector<1x64xf32> to vector<8x64xf32>
    %695 = arith.mulf %693, %694 : vector<8x64xf32>
    %696 = vector.broadcast %677 : vector<1x64xf32> to vector<8x64xf32>
    %697 = arith.addf %695, %696 : vector<8x64xf32>
    %698 = arith.truncf %697 : vector<8x64xf32> to vector<8x64xbf16>
    %c0_144 = arith.constant 0 : index
    %c0_145 = arith.constant 0 : index
    %699 = vector.load %arg19[%c0_144, %c0_145] : memref<64x128xbf16, #tpu.memory_space<vmem>>, vector<64x128xbf16>
    %cst_146 = arith.constant dense<0.000000e+00> : vector<8x128xf32>
    %700 = tpu.matmul %698, %699, %cst_146 {dimension_numbers = #tpu.dot_dimension_numbers<[1], [0], [0], [1], [0, 0, 1, 1], [], []>} : vector<8x64xbf16>, vector<64x128xbf16>, vector<8x128xf32> -> vector<8x128xf32>
    %c0_147 = arith.constant 0 : index
    %c0_148 = arith.constant 0 : index
    %701 = vector.load %arg22[%c0_147, %c0_148] : memref<1x128xf32, #tpu.memory_space<vmem>>, vector<1x128xf32>
    %702 = vector.broadcast %701 : vector<1x128xf32> to vector<8x128xf32>
    %703 = arith.addf %700, %702 : vector<8x128xf32>
    %cst_149 = arith.constant 0.000000e+00 : f32
    %704 = vector.broadcast %cst_149 : f32 to vector<8x128xf32>
    %705 = arith.maximumf %703, %704 : vector<8x128xf32>
    %706 = arith.truncf %705 : vector<8x128xf32> to vector<8x128xbf16>
    %c0_150 = arith.constant 0 : index
    %c0_151 = arith.constant 0 : index
    %707 = vector.load %arg20[%c0_150, %c0_151] : memref<128x64xbf16, #tpu.memory_space<vmem>>, vector<128x64xbf16>
    %cst_152 = arith.constant dense<0.000000e+00> : vector<8x64xf32>
    %708 = tpu.matmul %706, %707, %cst_152 {dimension_numbers = #tpu.dot_dimension_numbers<[1], [0], [0], [1], [0, 0, 1, 1], [], []>} : vector<8x128xbf16>, vector<128x64xbf16>, vector<8x64xf32> -> vector<8x64xf32>
    %709 = vector.extract_strided_slice %21 {offsets = [8, 0], sizes = [1, 64], strides = [1, 1]} : vector<16x64xf32> to vector<1x64xf32>
    %710 = vector.broadcast %709 : vector<1x64xf32> to vector<8x64xf32>
    %711 = arith.addf %708, %710 : vector<8x64xf32>
    %712 = arith.addf %697, %711 : vector<8x64xf32>
    %713 = vector.extract_strided_slice %21 {offsets = [13, 0], sizes = [1, 64], strides = [1, 1]} : vector<16x64xf32> to vector<1x64xf32>
    %714 = vector.extract_strided_slice %21 {offsets = [14, 0], sizes = [1, 64], strides = [1, 1]} : vector<16x64xf32> to vector<1x64xf32>
    %cst_153 = arith.constant dense<0.000000e+00> : vector<8xf32>
    %715 = vector.multi_reduction <add>, %712, %cst_153 [1] : vector<8x64xf32> to vector<8xf32>
    %716 = vector.shape_cast %715 : vector<8xf32> to vector<8x1xf32>
    %cst_154 = arith.constant 6.400000e+01 : f32
    %717 = vector.broadcast %cst_154 : f32 to vector<8x1xf32>
    %718 = arith.divf %716, %717 : vector<8x1xf32>
    %719 = vector.broadcast %718 : vector<8x1xf32> to vector<8x64xf32>
    %720 = arith.subf %712, %719 : vector<8x64xf32>
    %721 = arith.mulf %720, %720 : vector<8x64xf32>
    %cst_155 = arith.constant dense<0.000000e+00> : vector<8xf32>
    %722 = vector.multi_reduction <add>, %721, %cst_155 [1] : vector<8x64xf32> to vector<8xf32>
    %723 = vector.shape_cast %722 : vector<8xf32> to vector<8x1xf32>
    %cst_156 = arith.constant 6.400000e+01 : f32
    %724 = vector.broadcast %cst_156 : f32 to vector<8x1xf32>
    %725 = arith.divf %723, %724 : vector<8x1xf32>
    %cst_157 = arith.constant 9.99999974E-6 : f32
    %726 = vector.broadcast %cst_157 : f32 to vector<8x1xf32>
    %727 = arith.addf %725, %726 : vector<8x1xf32>
    %728 = math.rsqrt %727 : vector<8x1xf32>
    %729 = vector.broadcast %728 : vector<8x1xf32> to vector<8x64xf32>
    %730 = arith.mulf %720, %729 : vector<8x64xf32>
    %731 = vector.broadcast %713 : vector<1x64xf32> to vector<8x64xf32>
    %732 = arith.mulf %730, %731 : vector<8x64xf32>
    %733 = vector.broadcast %714 : vector<1x64xf32> to vector<8x64xf32>
    %734 = arith.addf %732, %733 : vector<8x64xf32>
    %c0_158 = arith.constant 0 : index
    %c0_159 = arith.constant 0 : index
    %c0_160 = arith.constant 0 : index
    %735 = vector.load %arg23[%c0_158, %c0_159, %c0_160] : memref<1x8x64xf32, #tpu.memory_space<vmem>>, vector<1x8x64xf32>
    %736 = vector.shape_cast %735 : vector<1x8x64xf32> to vector<8x64xf32>
    %737 = vector.shape_cast %734 : vector<8x64xf32> to vector<1x8x64xf32>
    tpu.vector_store %arg23[%c0_158, %c0_159, %c0_160], %737 {strides = array<i32>} : memref<1x8x64xf32, #tpu.memory_space<vmem>>, vector<1x8x64xf32>,
    return
  }
  func.func @transform_0(%arg0: i32, %arg1: i32) -> (i32, i32, i32) {
    %c0_i32 = arith.constant 0 : i32
    %c0_i32_0 = arith.constant 0 : i32
    return %arg0, %arg1, %c0_i32 : i32, i32, i32
  }
  func.func @transform_1(%arg0: i32, %arg1: i32) -> (i32, i32, i32) {
    %c0_i32 = arith.constant 0 : i32
    %c0_i32_0 = arith.constant 0 : i32
    %c0_i32_1 = arith.constant 0 : i32
    return %arg0, %c0_i32, %c0_i32_0 : i32, i32, i32
  }
  func.func @transform_2(%arg0: i32, %arg1: i32) -> (i32, i32, i32) {
    %c0_i32 = arith.constant 0 : i32
    %c0_i32_0 = arith.constant 0 : i32
    %c0_i32_1 = arith.constant 0 : i32
    return %arg0, %c0_i32, %c0_i32_0 : i32, i32, i32
  }
  func.func @transform_3(%arg0: i32, %arg1: i32) -> (i32, i32, i32) {
    %c0_i32 = arith.constant 0 : i32
    %c0_i32_0 = arith.constant 0 : i32
    return %arg0, %arg1, %c0_i32 : i32, i32, i32
  }
  func.func @transform_4(%arg0: i32, %arg1: i32) -> (i32, i32, i32) {
    %c0_i32 = arith.constant 0 : i32
    %c0_i32_0 = arith.constant 0 : i32
    return %arg0, %arg1, %c0_i32 : i32, i32, i32
  }
  func.func @transform_5(%arg0: i32, %arg1: i32) -> (i32, i32) {
    %c0_i32 = arith.constant 0 : i32
    %c0_i32_0 = arith.constant 0 : i32
    %c0_i32_1 = arith.constant 0 : i32
    return %c0_i32, %c0_i32_0 : i32, i32
  }
  func.func @transform_6(%arg0: i32, %arg1: i32) -> (i32, i32) {
    %c0_i32 = arith.constant 0 : i32
    %c0_i32_0 = arith.constant 0 : i32
    %c0_i32_1 = arith.constant 0 : i32
    return %c0_i32, %c0_i32_0 : i32, i32
  }
  func.func @transform_7(%arg0: i32, %arg1: i32) -> (i32, i32) {
    %c0_i32 = arith.constant 0 : i32
    %c0_i32_0 = arith.constant 0 : i32
    %c0_i32_1 = arith.constant 0 : i32
    return %c0_i32, %c0_i32_0 : i32, i32
  }
  func.func @transform_8(%arg0: i32, %arg1: i32) -> (i32, i32) {
    %c0_i32 = arith.constant 0 : i32
    %c0_i32_0 = arith.constant 0 : i32
    %c0_i32_1 = arith.constant 0 : i32
    return %c0_i32, %c0_i32_0 : i32, i32
  }
  func.func @transform_9(%arg0: i32, %arg1: i32) -> (i32, i32) {
    %c0_i32 = arith.constant 0 : i32
    %c0_i32_0 = arith.constant 0 : i32
    %c0_i32_1 = arith.constant 0 : i32
    return %c0_i32, %c0_i32_0 : i32, i32
  }
  func.func @transform_10(%arg0: i32, %arg1: i32) -> (i32, i32) {
    %c0_i32 = arith.constant 0 : i32
    %c0_i32_0 = arith.constant 0 : i32
    %c0_i32_1 = arith.constant 0 : i32
    return %c0_i32, %c0_i32_0 : i32, i32
  }
  func.func @transform_11(%arg0: i32, %arg1: i32) -> (i32, i32) {
    %c0_i32 = arith.constant 0 : i32
    %c0_i32_0 = arith.constant 0 : i32
    %c0_i32_1 = arith.constant 0 : i32
    return %c0_i32, %c0_i32_0 : i32, i32
  }
  func.func @transform_12(%arg0: i32, %arg1: i32) -> (i32, i32) {
    %c0_i32 = arith.constant 0 : i32
    %c0_i32_0 = arith.constant 0 : i32
    %c0_i32_1 = arith.constant 0 : i32
    return %c0_i32, %c0_i32_0 : i32, i32
  }
  func.func @transform_13(%arg0: i32, %arg1: i32) -> (i32, i32) {
    %c0_i32 = arith.constant 0 : i32
    %c0_i32_0 = arith.constant 0 : i32
    %c0_i32_1 = arith.constant 0 : i32
    return %c0_i32, %c0_i32_0 : i32, i32
  }
  func.func @transform_14(%arg0: i32, %arg1: i32) -> (i32, i32) {
    %c0_i32 = arith.constant 0 : i32
    %c0_i32_0 = arith.constant 0 : i32
    %c0_i32_1 = arith.constant 0 : i32
    return %c0_i32, %c0_i32_0 : i32, i32
  }
  func.func @transform_15(%arg0: i32, %arg1: i32) -> (i32, i32) {
    %c0_i32 = arith.constant 0 : i32
    %c0_i32_0 = arith.constant 0 : i32
    %c0_i32_1 = arith.constant 0 : i32
    return %c0_i32, %c0_i32_0 : i32, i32
  }
  func.func @transform_16(%arg0: i32, %arg1: i32) -> (i32, i32) {
    %c0_i32 = arith.constant 0 : i32
    %c0_i32_0 = arith.constant 0 : i32
    %c0_i32_1 = arith.constant 0 : i32
    return %c0_i32, %c0_i32_0 : i32, i32
  }
  func.func @transform_17(%arg0: i32, %arg1: i32) -> (i32, i32) {
    %c0_i32 = arith.constant 0 : i32
    %c0_i32_0 = arith.constant 0 : i32
    %c0_i32_1 = arith.constant 0 : i32
    return %c0_i32, %c0_i32_0 : i32, i32
  }
  func.func @transform_18(%arg0: i32, %arg1: i32) -> (i32, i32) {
    %c0_i32 = arith.constant 0 : i32
    %c0_i32_0 = arith.constant 0 : i32
    %c0_i32_1 = arith.constant 0 : i32
    return %c0_i32, %c0_i32_0 : i32, i32
  }
  func.func @transform_19(%arg0: i32, %arg1: i32) -> (i32, i32) {
    %c0_i32 = arith.constant 0 : i32
    %c0_i32_0 = arith.constant 0 : i32
    %c0_i32_1 = arith.constant 0 : i32
    return %c0_i32, %c0_i32_0 : i32, i32
  }
  func.func @transform_20(%arg0: i32, %arg1: i32) -> (i32, i32) {
    %c0_i32 = arith.constant 0 : i32
    %c0_i32_0 = arith.constant 0 : i32
    %c0_i32_1 = arith.constant 0 : i32
    return %c0_i32, %c0_i32_0 : i32, i32
  }
  func.func @transform_21(%arg0: i32, %arg1: i32) -> (i32, i32, i32) {
    %c0_i32 = arith.constant 0 : i32
    %c0_i32_0 = arith.constant 0 : i32
    return %arg0, %arg1, %c0_i32 : i32, i32, i32
  }
}

</mosaic_0001>

<llo_original>
// kernel: tpu_custom_call.1
$region0: #{tpu_custom_call.1}
  #allocation0 [shape = 'u32[]', space=smem, size = 0x4, offset = 0x4, fixed_abs, tag = 'smem constant byte address 0x4 - core index']
  #allocation1 [shape = 'u32[144,128]{1,0:T(1,128)}', space=vmem, size = 0x12000, scoped, tag = 'internal scratch']
  %s0 = inlined_call_operand.vmem [shape: f32[2,16,64], index: 0, kind: input, shape index: {}]
  %s1 = inlined_call_operand.vmem [shape: f32[2,16,64], index: 1, kind: input, shape index: {}]
  %s2 = inlined_call_operand.vmem [shape: f32[2,16,64], index: 2, kind: input, shape index: {}]
  %s3 = inlined_call_operand.hbm [shape: f32[2,16,16], index: 3, kind: input, shape index: {}]
  %s4 = inlined_call_operand.hbm [shape: f32[2,16,16], index: 4, kind: input, shape index: {}]
  %s5 = inlined_call_operand.hbm [shape: bf16[16,9], index: 5, kind: input, shape index: {}]
  %s6 = inlined_call_operand.hbm [shape: bf16[9,16], index: 6, kind: input, shape index: {}]
  %s7 = inlined_call_operand.hbm [shape: bf16[16,9], index: 7, kind: input, shape index: {}]
  %s8 = inlined_call_operand.hbm [shape: bf16[9,16], index: 8, kind: input, shape index: {}]
  %s9 = inlined_call_operand.hbm [shape: bf16[64,64], index: 9, kind: input, shape index: {}]
  %s10 = inlined_call_operand.hbm [shape: bf16[64,64], index: 10, kind: input, shape index: {}]
  %s11 = inlined_call_operand.hbm [shape: bf16[64,64], index: 11, kind: input, shape index: {}]
  %s12 = inlined_call_operand.hbm [shape: bf16[64,64], index: 12, kind: input, shape index: {}]
  %s13 = inlined_call_operand.hbm [shape: bf16[64,64], index: 13, kind: input, shape index: {}]
  %s14 = inlined_call_operand.hbm [shape: bf16[64,64], index: 14, kind: input, shape index: {}]
  %s15 = inlined_call_operand.hbm [shape: bf16[64,64], index: 15, kind: input, shape index: {}]
  %s16 = inlined_call_operand.hbm [shape: bf16[64,64], index: 16, kind: input, shape index: {}]
  %s17 = inlined_call_operand.hbm [shape: bf16[64,128], index: 17, kind: input, shape index: {}]
  %s18 = inlined_call_operand.vmem [shape: bf16[128,64], index: 18, kind: input, shape index: {}]
  %s19 = inlined_call_operand.hbm [shape: f32[16,64], index: 19, kind: input, shape index: {}]
  %s20 = inlined_call_operand.vmem [shape: f32[1,128], index: 20, kind: input, shape index: {}]
  %s21 = inlined_call_operand.hbm [shape: f32[2,16,64], index: 21, kind: output, shape index: {}]
  %s22 = sld [smem:[#allocation0]]
  $region181: #{tpu_custom_call.1} parent=0
    _
  %s24 = ssub.s32 1, %s22
  %s25 = scalar_select 0, %s24, %s22
  $region1: #{tpu_custom_call.1} parent=0
    #allocation2 [shape = 'u8[8192]{0}', space=vmem, size = 0x2000, scoped, tag = 'input window, operand 3']
    #allocation3 [shape = 's32[2]{0}', space=sflag, size = 0x8, scoped, tag = 'scoped memory for tpu_custom_call.1']
    #allocation4 [shape = 's32[2]{0}', space=sflag, size = 0x8, scoped, tag = 'scoped memory for tpu_custom_call.1']
    #allocation5 [shape = 'u8[8192]{0}', space=vmem, size = 0x2000, scoped, tag = 'input window, operand 4']
    #allocation6 [shape = 's32[2]{0}', space=sflag, size = 0x8, scoped, tag = 'scoped memory for tpu_custom_call.1']
    #allocation7 [shape = 'u8[4096]{0}', space=vmem, size = 0x1000, scoped, tag = 'input window, operand 5, single buffered']
    #allocation8 [shape = 'u8[4096]{0}', space=vmem, size = 0x1000, scoped, tag = 'input window, operand 6, single buffered']
    #allocation9 [shape = 's32[1]{0}', space=sflag, size = 0x4, scoped, tag = 'scoped memory for tpu_custom_call.1']
    #allocation10 [shape = 'u8[4096]{0}', space=vmem, size = 0x1000, scoped, tag = 'input window, operand 7, single buffered']
    #allocation11 [shape = 'u8[4096]{0}', space=vmem, size = 0x1000, scoped, tag = 'input window, operand 8, single buffered']
    #allocation12 [shape = 's32[1]{0}', space=sflag, size = 0x4, scoped, tag = 'scoped memory for tpu_custom_call.1']
    #allocation13 [shape = 'u8[16384]{0}', space=vmem, size = 0x4000, scoped, tag = 'input window, operand 9, single buffered']
    #allocation14 [shape = 'u8[16384]{0}', space=vmem, size = 0x4000, scoped, tag = 'input window, operand 10, single buffered']
    #allocation15 [shape = 's32[1]{0}', space=sflag, size = 0x4, scoped, tag = 'scoped memory for tpu_custom_call.1']
    #allocation16 [shape = 'u8[16384]{0}', space=vmem, size = 0x4000, scoped, tag = 'input window, operand 11, single buffered']
    #allocation17 [shape = 'u8[16384]{0}', space=vmem, size = 0x4000, scoped, tag = 'input window, operand 12, single buffered']
    #allocation18 [shape = 's32[1]{0}', space=sflag, size = 0x4, scoped, tag = 'scoped memory for tpu_custom_call.1']
    #allocation19 [shape = 'u8[16384]{0}', space=vmem, size = 0x4000, scoped, tag = 'input window, operand 13, single buffered']
    #allocation20 [shape = 'u8[16384]{0}', space=vmem, size = 0x4000, scoped, tag = 'input window, operand 14, single buffered']
    #allocation21 [shape = 's32[1]{0}', space=sflag, size = 0x4, scoped, tag = 'scoped memory for tpu_custom_call.1']
    #allocation22 [shape = 'u8[16384]{0}', space=vmem, size = 0x4000, scoped, tag = 'input window, operand 15, single buffered']
    #allocation23 [shape = 'u8[16384]{0}', space=vmem, size = 0x4000, scoped, tag = 'input window, operand 16, single buffered']
    #allocation24 [shape = 's32[1]{0}', space=sflag, size = 0x4, scoped, tag = 'scoped memory for tpu_custom_call.1']
    #allocation25 [shape = 'u8[16384]{0}', space=vmem, size = 0x4000, scoped, tag = 'input window, operand 17, single buffered']
    #allocation26 [shape = 'u8[8192]{0}', space=vmem, size = 0x2000, scoped, tag = 'input window, operand 19, single buffered']
    #allocation27 [shape = 's32[1]{0}', space=sflag, size = 0x4, scoped, tag = 'scoped memory for tpu_custom_call.1']
    #allocation28 [shape = 'u8[8192]{0}', space=vmem, size = 0x2000, scoped, tag = 'output window, operand 0']
    %26 = vsyncpa [#allocation3], 0
    %s27 = scalar_lea.sflag [#allocation3], 1
    %28 = vsyncpa %s27, 0
    %29 = vsyncpa [#allocation6], 0
    %s30 = scalar_lea.sflag [#allocation6], 1
    %31 = vsyncpa %s30, 0
    %32 = vsyncpa [#allocation9], 0
    %33 = vsyncpa [#allocation12], 0
    %34 = vsyncpa [#allocation15], 0
    %35 = vsyncpa [#allocation18], 0
    %36 = vsyncpa [#allocation21], 0
    %37 = vsyncpa [#allocation24], 0
    %38 = vsyncpa [#allocation27], 0
    %39 = vsyncpa [#allocation4], 0
    %s40 = scalar_lea.sflag [#allocation4], 1
    %41 = vsyncpa %s40, 0
    loop: start=0, step=1, limit=6
    $region2: #{tpu_custom_call.1} parent=1 // loop_pre_header
      _
    $region3: #{tpu_custom_call.1} parent=1 // loop_header
      %s43 = sphi 0, %s47
      %p44 = scmp.ge.s32.totalorder %s43, 6
      %s50 = sphi 0, %s62
      %s51 = sphi 0, %s58
      %s52 = sphi 0, %s50
      %s53 = sphi 0, %s51
      %s54 = sphi 0, %s52
      %s55 = sphi 0, %s53
      %s67 = sphi 0, %s69
      %s70 = sphi 0, %s67
      %s71 = sphi 0, %s70
      %s87 = sphi 0, %s71
      %s93 = sphi 0, %s95
      %s96 = sphi 0, %s93
      %s97 = sphi 0, %s96
      %s113 = sphi 0, %s97
      %s119 = sphi 0, %s121
      %s122 = sphi 0, %s119
      %s123 = sphi 0, %s122
      %s139 = sphi 0, %s123
      %s147 = sphi 0, %s149
      %s150 = sphi 0, %s147
      %s151 = sphi 0, %s150
      %s167 = sphi 0, %s151
      %s175 = sphi 0, %s177
      %s178 = sphi 0, %s175
      %s179 = sphi 0, %s178
      %s195 = sphi 0, %s179
      %s199 = sphi 0, %s199
      %s201 = sphi 0, %s199
      %s202 = sphi 0, %s201
      %s216 = sphi 0, %s202
      %s220 = sphi 0, %s220
      %s222 = sphi 0, %s220
      %s223 = sphi 0, %s222
      %s237 = sphi 0, %s223
      %s241 = sphi 0, %s241
      %s243 = sphi 0, %s241
      %s244 = sphi 0, %s243
      %s258 = sphi 0, %s244
      %s262 = sphi 0, %s262
      %s264 = sphi 0, %s262
      %s265 = sphi 0, %s264
      %s279 = sphi 0, %s265
      %s283 = sphi 0, %s283
      %s285 = sphi 0, %s283
      %s286 = sphi 0, %s285
      %s300 = sphi 0, %s286
      %s304 = sphi 0, %s304
      %s306 = sphi 0, %s304
      %s307 = sphi 0, %s306
      %s321 = sphi 0, %s307
      %s325 = sphi 0, %s325
      %s327 = sphi 0, %s325
      %s328 = sphi 0, %s327
      %s342 = sphi 0, %s328
      %s346 = sphi 0, %s346
      %s348 = sphi 0, %s346
      %s349 = sphi 0, %s348
      %s363 = sphi 0, %s349
      %s367 = sphi 0, %s367
      %s369 = sphi 0, %s367
      %s370 = sphi 0, %s369
      %s384 = sphi 0, %s370
      %s388 = sphi 0, %s388
      %s390 = sphi 0, %s388
      %s391 = sphi 0, %s390
      %s405 = sphi 0, %s391
      %s409 = sphi 0, %s409
      %s411 = sphi 0, %s409
      %s412 = sphi 0, %s411
      %s426 = sphi 0, %s412
      %s430 = sphi 0, %s430
      %s432 = sphi 0, %s430
      %s433 = sphi 0, %s432
      %s447 = sphi 0, %s433
      %s451 = sphi 0, %s451
      %s453 = sphi 0, %s451
      %s454 = sphi 0, %s453
      %s468 = sphi 0, %s454
      %s472 = sphi 0, %s472
      %s474 = sphi 0, %s472
      %s475 = sphi 0, %s474
      %s489 = sphi 0, %s475
      %s493 = sphi 0, %s493
      %s495 = sphi 0, %s493
      %s496 = sphi 0, %s495
      %s510 = sphi 0, %s496
      %s514 = sphi 0, %s514
      %s516 = sphi 0, %s514
      %s517 = sphi 0, %s516
      %s531 = sphi 0, %s517
      %s539 = sphi 0, %s541
      %s542 = sphi 0, %s539
      %s543 = sphi 0, %s542
      %s559 = sphi 0, %s543
    $region4: #{tpu_custom_call.1} parent=1 // loop_header_branch
      %46 = sbr.rel (%p44) target = $region8
    $region5: #{tpu_custom_call.1} parent=1 // loop_body
      %s48 = ssub.s32 %s43, 1
      %s49 = ssub.s32 %s43, 2
      %s56 = sadd.s32 1, %s51
      %p57 = scmp.ge.s32.totalorder %s56, 2
      %s58 = scalar_select %p57, 0, %s56
      %s59 = sadd.s32 1, %s50
      %s60 = scalar_select %p57, %s59, %s50
      %p61 = scmp.ge.s32.totalorder %s60, 2
      %s62 = scalar_select %p61, 0, %s60
      %s63 = ssub.s32 %s50, %s62
      %s64 = ssub.s32 %s51, %s58
      %s65 = sor.u32 %s63, %s64
      %p66 = scmp.eq.s32.totalorder %s65, 0
      %s68 = sadd.s32 %s67, 1
      %s69 = scalar_select %p66, %s67, %s68
      %p72 = pneg %p66
      %p73 = scmp.eq.s32.totalorder %s43, 3
      %p74 = por %p72, %p73
      %p75 = scmp.ne.s32.totalorder %s67, %s70
      %p76 = scmp.eq.s32.totalorder %s43, 0
      %p77 = por %p75, %p76
      %p78 = scmp.ne.s32.totalorder %s67, %s70
      %p79 = scmp.eq.s32.totalorder %s48, 3
      %p80 = por %p78, %p79
      %p81 = scmp.ne.s32.totalorder %s70, %s71
      %p82 = scmp.eq.s32.totalorder %s48, 0
      %p83 = por %p81, %p82
      %p84 = scmp.ne.s32.totalorder %s70, %s71
      %p85 = scmp.eq.s32.totalorder %s49, 3
      %p86 = por %p84, %p85
      %p88 = scmp.ne.s32.totalorder %s71, %s87
      %p89 = scmp.eq.s32.totalorder %s49, 0
      %p90 = por %p88, %p89
      %s91 = ssub.s32 %s50, %s62
      %p92 = scmp.eq.s32.totalorder %s91, 0
      %s94 = sadd.s32 %s93, 1
      %s95 = scalar_select %p92, %s93, %s94
      %p98 = pneg %p92
      %p99 = scmp.eq.s32.totalorder %s43, 3
      %p100 = por %p98, %p99
      %p101 = scmp.ne.s32.totalorder %s93, %s96
      %p102 = scmp.eq.s32.totalorder %s43, 0
      %p103 = por %p101, %p102
      %p104 = scmp.ne.s32.totalorder %s93, %s96
      %p105 = scmp.eq.s32.totalorder %s48, 3
      %p106 = por %p104, %p105
      %p107 = scmp.ne.s32.totalorder %s96, %s97
      %p108 = scmp.eq.s32.totalorder %s48, 0
      %p109 = por %p107, %p108
      %p110 = scmp.ne.s32.totalorder %s96, %s97
      %p111 = scmp.eq.s32.totalorder %s49, 3
      %p112 = por %p110, %p111
      %p114 = scmp.ne.s32.totalorder %s97, %s113
      %p115 = scmp.eq.s32.totalorder %s49, 0
      %p116 = por %p114, %p115
      %s117 = ssub.s32 %s50, %s62
      %p118 = scmp.eq.s32.totalorder %s117, 0
      %s120 = sadd.s32 %s119, 1
      %s121 = scalar_select %p118, %s119, %s120
      %p124 = pneg %p118
      %p125 = scmp.eq.s32.totalorder %s43, 3
      %p126 = por %p124, %p125
      %p127 = scmp.ne.s32.totalorder %s119, %s122
      %p128 = scmp.eq.s32.totalorder %s43, 0
      %p129 = por %p127, %p128
      %p130 = scmp.ne.s32.totalorder %s119, %s122
      %p131 = scmp.eq.s32.totalorder %s48, 3
      %p132 = por %p130, %p131
      %p133 = scmp.ne.s32.totalorder %s122, %s123
      %p134 = scmp.eq.s32.totalorder %s48, 0
      %p135 = por %p133, %p134
      %p136 = scmp.ne.s32.totalorder %s122, %s123
      %p137 = scmp.eq.s32.totalorder %s49, 3
      %p138 = por %p136, %p137
      %p140 = scmp.ne.s32.totalorder %s123, %s139
      %p141 = scmp.eq.s32.totalorder %s49, 0
      %p142 = por %p140, %p141
      %s143 = ssub.s32 %s50, %s62
      %s144 = ssub.s32 %s51, %s58
      %s145 = sor.u32 %s143, %s144
      %p146 = scmp.eq.s32.totalorder %s145, 0
      %s148 = sadd.s32 %s147, 1
      %s149 = scalar_select %p146, %s147, %s148
      %p152 = pneg %p146
      %p153 = scmp.eq.s32.totalorder %s43, 3
      %p154 = por %p152, %p153
      %p155 = scmp.ne.s32.totalorder %s147, %s150
      %p156 = scmp.eq.s32.totalorder %s43, 0
      %p157 = por %p155, %p156
      %p158 = scmp.ne.s32.totalorder %s147, %s150
      %p159 = scmp.eq.s32.totalorder %s48, 3
      %p160 = por %p158, %p159
      %p161 = scmp.ne.s32.totalorder %s150, %s151
      %p162 = scmp.eq.s32.totalorder %s48, 0
      %p163 = por %p161, %p162
      %p164 = scmp.ne.s32.totalorder %s150, %s151
      %p165 = scmp.eq.s32.totalorder %s49, 3
      %p166 = por %p164, %p165
      %p168 = scmp.ne.s32.totalorder %s151, %s167
      %p169 = scmp.eq.s32.totalorder %s49, 0
      %p170 = por %p168, %p169
      %s171 = ssub.s32 %s50, %s62
      %s172 = ssub.s32 %s51, %s58
      %s173 = sor.u32 %s171, %s172
      %p174 = scmp.eq.s32.totalorder %s173, 0
      %s176 = sadd.s32 %s175, 1
      %s177 = scalar_select %p174, %s175, %s176
      %p180 = pneg %p174
      %p181 = scmp.eq.s32.totalorder %s43, 3
      %p182 = por %p180, %p181
      %p183 = scmp.ne.s32.totalorder %s175, %s178
      %p184 = scmp.eq.s32.totalorder %s43, 0
      %p185 = por %p183, %p184
      %p186 = scmp.ne.s32.totalorder %s175, %s178
      %p187 = scmp.eq.s32.totalorder %s48, 3
      %p188 = por %p186, %p187
      %p189 = scmp.ne.s32.totalorder %s178, %s179
      %p190 = scmp.eq.s32.totalorder %s48, 0
      %p191 = por %p189, %p190
      %p192 = scmp.ne.s32.totalorder %s178, %s179
      %p193 = scmp.eq.s32.totalorder %s49, 3
      %p194 = por %p192, %p193
      %p196 = scmp.ne.s32.totalorder %s179, %s195
      %p197 = scmp.eq.s32.totalorder %s49, 0
      %p198 = por %p196, %p197
      %s200 = sadd.s32 %s199, 1
      %p203 = scmp.eq.s32.totalorder %s43, 3
      %p204 = scmp.ne.s32.totalorder %s199, %s201
      %p205 = scmp.eq.s32.totalorder %s43, 0
      %p206 = por %p204, %p205
      %p207 = scmp.ne.s32.totalorder %s199, %s201
      %p208 = scmp.eq.s32.totalorder %s48, 3
      %p209 = por %p207, %p208
      %p210 = scmp.ne.s32.totalorder %s201, %s202
      %p211 = scmp.eq.s32.totalorder %s48, 0
      %p212 = por %p210, %p211
      %p213 = scmp.ne.s32.totalorder %s201, %s202
      %p214 = scmp.eq.s32.totalorder %s49, 3
      %p215 = por %p213, %p214
      %p217 = scmp.ne.s32.totalorder %s202, %s216
      %p218 = scmp.eq.s32.totalorder %s49, 0
      %p219 = por %p217, %p218
      %s221 = sadd.s32 %s220, 1
      %p224 = scmp.eq.s32.totalorder %s43, 3
      %p225 = scmp.ne.s32.totalorder %s220, %s222
      %p226 = scmp.eq.s32.totalorder %s43, 0
      %p227 = por %p225, %p226
      %p228 = scmp.ne.s32.totalorder %s220, %s222
      %p229 = scmp.eq.s32.totalorder %s48, 3
      %p230 = por %p228, %p229
      %p231 = scmp.ne.s32.totalorder %s222, %s223
      %p232 = scmp.eq.s32.totalorder %s48, 0
      %p233 = por %p231, %p232
      %p234 = scmp.ne.s32.totalorder %s222, %s223
      %p235 = scmp.eq.s32.totalorder %s49, 3
      %p236 = por %p234, %p235
      %p238 = scmp.ne.s32.totalorder %s223, %s237
      %p239 = scmp.eq.s32.totalorder %s49, 0
      %p240 = por %p238, %p239
      %s242 = sadd.s32 %s241, 1
      %p245 = scmp.eq.s32.totalorder %s43, 3
      %p246 = scmp.ne.s32.totalorder %s241, %s243
      %p247 = scmp.eq.s32.totalorder %s43, 0
      %p248 = por %p246, %p247
      %p249 = scmp.ne.s32.totalorder %s241, %s243
      %p250 = scmp.eq.s32.totalorder %s48, 3
      %p251 = por %p249, %p250
      %p252 = scmp.ne.s32.totalorder %s243, %s244
      %p253 = scmp.eq.s32.totalorder %s48, 0
      %p254 = por %p252, %p253
      %p255 = scmp.ne.s32.totalorder %s243, %s244
      %p256 = scmp.eq.s32.totalorder %s49, 3
      %p257 = por %p255, %p256
      %p259 = scmp.ne.s32.totalorder %s244, %s258
      %p260 = scmp.eq.s32.totalorder %s49, 0
      %p261 = por %p259, %p260
      %s263 = sadd.s32 %s262, 1
      %p266 = scmp.eq.s32.totalorder %s43, 3
      %p267 = scmp.ne.s32.totalorder %s262, %s264
      %p268 = scmp.eq.s32.totalorder %s43, 0
      %p269 = por %p267, %p268
      %p270 = scmp.ne.s32.totalorder %s262, %s264
      %p271 = scmp.eq.s32.totalorder %s48, 3
      %p272 = por %p270, %p271
      %p273 = scmp.ne.s32.totalorder %s264, %s265
      %p274 = scmp.eq.s32.totalorder %s48, 0
      %p275 = por %p273, %p274
      %p276 = scmp.ne.s32.totalorder %s264, %s265
      %p277 = scmp.eq.s32.totalorder %s49, 3
      %p278 = por %p276, %p277
      %p280 = scmp.ne.s32.totalorder %s265, %s279
      %p281 = scmp.eq.s32.totalorder %s49, 0
      %p282 = por %p280, %p281
      %s284 = sadd.s32 %s283, 1
      %p287 = scmp.eq.s32.totalorder %s43, 3
      %p288 = scmp.ne.s32.totalorder %s283, %s285
      %p289 = scmp.eq.s32.totalorder %s43, 0
      %p290 = por %p288, %p289
      %p291 = scmp.ne.s32.totalorder %s283, %s285
      %p292 = scmp.eq.s32.totalorder %s48, 3
      %p293 = por %p291, %p292
      %p294 = scmp.ne.s32.totalorder %s285, %s286
      %p295 = scmp.eq.s32.totalorder %s48, 0
      %p296 = por %p294, %p295
      %p297 = scmp.ne.s32.totalorder %s285, %s286
      %p298 = scmp.eq.s32.totalorder %s49, 3
      %p299 = por %p297, %p298
      %p301 = scmp.ne.s32.totalorder %s286, %s300
      %p302 = scmp.eq.s32.totalorder %s49, 0
      %p303 = por %p301, %p302
      %s305 = sadd.s32 %s304, 1
      %p308 = scmp.eq.s32.totalorder %s43, 3
      %p309 = scmp.ne.s32.totalorder %s304, %s306
      %p310 = scmp.eq.s32.totalorder %s43, 0
      %p311 = por %p309, %p310
      %p312 = scmp.ne.s32.totalorder %s304, %s306
      %p313 = scmp.eq.s32.totalorder %s48, 3
      %p314 = por %p312, %p313
      %p315 = scmp.ne.s32.totalorder %s306, %s307
      %p316 = scmp.eq.s32.totalorder %s48, 0
      %p317 = por %p315, %p316
      %p318 = scmp.ne.s32.totalorder %s306, %s307
      %p319 = scmp.eq.s32.totalorder %s49, 3
      %p320 = por %p318, %p319
      %p322 = scmp.ne.s32.totalorder %s307, %s321
      %p323 = scmp.eq.s32.totalorder %s49, 0
      %p324 = por %p322, %p323
      %s326 = sadd.s32 %s325, 1
      %p329 = scmp.eq.s32.totalorder %s43, 3
      %p330 = scmp.ne.s32.totalorder %s325, %s327
      %p331 = scmp.eq.s32.totalorder %s43, 0
      %p332 = por %p330, %p331
      %p333 = scmp.ne.s32.totalorder %s325, %s327
      %p334 = scmp.eq.s32.totalorder %s48, 3
      %p335 = por %p333, %p334
      %p336 = scmp.ne.s32.totalorder %s327, %s328
      %p337 = scmp.eq.s32.totalorder %s48, 0
      %p338 = por %p336, %p337
      %p339 = scmp.ne.s32.totalorder %s327, %s328
      %p340 = scmp.eq.s32.totalorder %s49, 3
      %p341 = por %p339, %p340
      %p343 = scmp.ne.s32.totalorder %s328, %s342
      %p344 = scmp.eq.s32.totalorder %s49, 0
      %p345 = por %p343, %p344
      %s347 = sadd.s32 %s346, 1
      %p350 = scmp.eq.s32.totalorder %s43, 3
      %p351 = scmp.ne.s32.totalorder %s346, %s348
      %p352 = scmp.eq.s32.totalorder %s43, 0
      %p353 = por %p351, %p352
      %p354 = scmp.ne.s32.totalorder %s346, %s348
      %p355 = scmp.eq.s32.totalorder %s48, 3
      %p356 = por %p354, %p355
      %p357 = scmp.ne.s32.totalorder %s348, %s349
      %p358 = scmp.eq.s32.totalorder %s48, 0
      %p359 = por %p357, %p358
      %p360 = scmp.ne.s32.totalorder %s348, %s349
      %p361 = scmp.eq.s32.totalorder %s49, 3
      %p362 = por %p360, %p361
      %p364 = scmp.ne.s32.totalorder %s349, %s363
      %p365 = scmp.eq.s32.totalorder %s49, 0
      %p366 = por %p364, %p365
      %s368 = sadd.s32 %s367, 1
      %p371 = scmp.eq.s32.totalorder %s43, 3
      %p372 = scmp.ne.s32.totalorder %s367, %s369
      %p373 = scmp.eq.s32.totalorder %s43, 0
      %p374 = por %p372, %p373
      %p375 = scmp.ne.s32.totalorder %s367, %s369
      %p376 = scmp.eq.s32.totalorder %s48, 3
      %p377 = por %p375, %p376
      %p378 = scmp.ne.s32.totalorder %s369, %s370
      %p379 = scmp.eq.s32.totalorder %s48, 0
      %p380 = por %p378, %p379
      %p381 = scmp.ne.s32.totalorder %s369, %s370
      %p382 = scmp.eq.s32.totalorder %s49, 3
      %p383 = por %p381, %p382
      %p385 = scmp.ne.s32.totalorder %s370, %s384
      %p386 = scmp.eq.s32.totalorder %s49, 0
      %p387 = por %p385, %p386
      %s389 = sadd.s32 %s388, 1
      %p392 = scmp.eq.s32.totalorder %s43, 3
      %p393 = scmp.ne.s32.totalorder %s388, %s390
      %p394 = scmp.eq.s32.totalorder %s43, 0
      %p395 = por %p393, %p394
      %p396 = scmp.ne.s32.totalorder %s388, %s390
      %p397 = scmp.eq.s32.totalorder %s48, 3
      %p398 = por %p396, %p397
      %p399 = scmp.ne.s32.totalorder %s390, %s391
      %p400 = scmp.eq.s32.totalorder %s48, 0
      %p401 = por %p399, %p400
      %p402 = scmp.ne.s32.totalorder %s390, %s391
      %p403 = scmp.eq.s32.totalorder %s49, 3
      %p404 = por %p402, %p403
      %p406 = scmp.ne.s32.totalorder %s391, %s405
      %p407 = scmp.eq.s32.totalorder %s49, 0
      %p408 = por %p406, %p407
      %s410 = sadd.s32 %s409, 1
      %p413 = scmp.eq.s32.totalorder %s43, 3
      %p414 = scmp.ne.s32.totalorder %s409, %s411
      %p415 = scmp.eq.s32.totalorder %s43, 0
      %p416 = por %p414, %p415
      %p417 = scmp.ne.s32.totalorder %s409, %s411
      %p418 = scmp.eq.s32.totalorder %s48, 3
      %p419 = por %p417, %p418
      %p420 = scmp.ne.s32.totalorder %s411, %s412
      %p421 = scmp.eq.s32.totalorder %s48, 0
      %p422 = por %p420, %p421
      %p423 = scmp.ne.s32.totalorder %s411, %s412
      %p424 = scmp.eq.s32.totalorder %s49, 3
      %p425 = por %p423, %p424
      %p427 = scmp.ne.s32.totalorder %s412, %s426
      %p428 = scmp.eq.s32.totalorder %s49, 0
      %p429 = por %p427, %p428
      %s431 = sadd.s32 %s430, 1
      %p434 = scmp.eq.s32.totalorder %s43, 3
      %p435 = scmp.ne.s32.totalorder %s430, %s432
      %p436 = scmp.eq.s32.totalorder %s43, 0
      %p437 = por %p435, %p436
      %p438 = scmp.ne.s32.totalorder %s430, %s432
      %p439 = scmp.eq.s32.totalorder %s48, 3
      %p440 = por %p438, %p439
      %p441 = scmp.ne.s32.totalorder %s432, %s433
      %p442 = scmp.eq.s32.totalorder %s48, 0
      %p443 = por %p441, %p442
      %p444 = scmp.ne.s32.totalorder %s432, %s433
      %p445 = scmp.eq.s32.totalorder %s49, 3
      %p446 = por %p444, %p445
      %p448 = scmp.ne.s32.totalorder %s433, %s447
      %p449 = scmp.eq.s32.totalorder %s49, 0
      %p450 = por %p448, %p449
      %s452 = sadd.s32 %s451, 1
      %p455 = scmp.eq.s32.totalorder %s43, 3
      %p456 = scmp.ne.s32.totalorder %s451, %s453
      %p457 = scmp.eq.s32.totalorder %s43, 0
      %p458 = por %p456, %p457
      %p459 = scmp.ne.s32.totalorder %s451, %s453
      %p460 = scmp.eq.s32.totalorder %s48, 3
      %p461 = por %p459, %p460
      %p462 = scmp.ne.s32.totalorder %s453, %s454
      %p463 = scmp.eq.s32.totalorder %s48, 0
      %p464 = por %p462, %p463
      %p465 = scmp.ne.s32.totalorder %s453, %s454
      %p466 = scmp.eq.s32.totalorder %s49, 3
      %p467 = por %p465, %p466
      %p469 = scmp.ne.s32.totalorder %s454, %s468
      %p470 = scmp.eq.s32.totalorder %s49, 0
      %p471 = por %p469, %p470
      %s473 = sadd.s32 %s472, 1
      %p476 = scmp.eq.s32.totalorder %s43, 3
      %p477 = scmp.ne.s32.totalorder %s472, %s474
      %p478 = scmp.eq.s32.totalorder %s43, 0
      %p479 = por %p477, %p478
      %p480 = scmp.ne.s32.totalorder %s472, %s474
      %p481 = scmp.eq.s32.totalorder %s48, 3
      %p482 = por %p480, %p481
      %p483 = scmp.ne.s32.totalorder %s474, %s475
      %p484 = scmp.eq.s32.totalorder %s48, 0
      %p485 = por %p483, %p484
      %p486 = scmp.ne.s32.totalorder %s474, %s475
      %p487 = scmp.eq.s32.totalorder %s49, 3
      %p488 = por %p486, %p487
      %p490 = scmp.ne.s32.totalorder %s475, %s489
      %p491 = scmp.eq.s32.totalorder %s49, 0
      %p492 = por %p490, %p491
      %s494 = sadd.s32 %s493, 1
      %p497 = scmp.eq.s32.totalorder %s43, 3
      %p498 = scmp.ne.s32.totalorder %s493, %s495
      %p499 = scmp.eq.s32.totalorder %s43, 0
      %p500 = por %p498, %p499
      %p501 = scmp.ne.s32.totalorder %s493, %s495
      %p502 = scmp.eq.s32.totalorder %s48, 3
      %p503 = por %p501, %p502
      %p504 = scmp.ne.s32.totalorder %s495, %s496
      %p505 = scmp.eq.s32.totalorder %s48, 0
      %p506 = por %p504, %p505
      %p507 = scmp.ne.s32.totalorder %s495, %s496
      %p508 = scmp.eq.s32.totalorder %s49, 3
      %p509 = por %p507, %p508
      %p511 = scmp.ne.s32.totalorder %s496, %s510
      %p512 = scmp.eq.s32.totalorder %s49, 0
      %p513 = por %p511, %p512
      %s515 = sadd.s32 %s514, 1
      %p518 = scmp.eq.s32.totalorder %s43, 3
      %p519 = scmp.ne.s32.totalorder %s514, %s516
      %p520 = scmp.eq.s32.totalorder %s43, 0
      %p521 = por %p519, %p520
      %p522 = scmp.ne.s32.totalorder %s514, %s516
      %p523 = scmp.eq.s32.totalorder %s48, 3
      %p524 = por %p522, %p523
      %p525 = scmp.ne.s32.totalorder %s516, %s517
      %p526 = scmp.eq.s32.totalorder %s48, 0
      %p527 = por %p525, %p526
      %p528 = scmp.ne.s32.totalorder %s516, %s517
      %p529 = scmp.eq.s32.totalorder %s49, 3
      %p530 = por %p528, %p529
      %p532 = scmp.ne.s32.totalorder %s517, %s531
      %p533 = scmp.eq.s32.totalorder %s49, 0
      %p534 = por %p532, %p533
      %s535 = ssub.s32 %s50, %s62
      %s536 = ssub.s32 %s51, %s58
      %s537 = sor.u32 %s535, %s536
      %p538 = scmp.eq.s32.totalorder %s537, 0
      %s540 = sadd.s32 %s539, 1
      %s541 = scalar_select %p538, %s539, %s540
      %p544 = pneg %p538
      %p545 = scmp.eq.s32.totalorder %s43, 3
      %p546 = por %p544, %p545
      %p547 = scmp.ne.s32.totalorder %s539, %s542
      %p548 = scmp.eq.s32.totalorder %s43, 0
      %p549 = por %p547, %p548
      %p550 = scmp.ne.s32.totalorder %s539, %s542
      %p551 = scmp.eq.s32.totalorder %s48, 3
      %p552 = por %p550, %p551
      %p553 = scmp.ne.s32.totalorder %s542, %s543
      %p554 = scmp.eq.s32.totalorder %s48, 0
      %p555 = por %p553, %p554
      %p556 = scmp.ne.s32.totalorder %s542, %s543
      %p557 = scmp.eq.s32.totalorder %s49, 3
      %p558 = por %p556, %p557
      %p560 = scmp.ne.s32.totalorder %s543, %s559
      %p561 = scmp.eq.s32.totalorder %s49, 0
      %p562 = por %p560, %p561
      %p563 = scmp.le.s32.totalorder 1, %s43
      %p564 = scmp.lt.s32.totalorder %s43, 5
      %p565 = pnand %p563, %p564
      %p566 = pneg %p565
      // Predicated region
      $region9: #{tpu_custom_call.1} parent=5 // pred_check
        _
      $region10: #{tpu_custom_call.1} parent=5 // pred_check_branch
        %568 = sbr.rel (%p565) target = $region12
      $region11: #{tpu_custom_call.1} parent=5 // pred_region
        %s569 = ssub.s32 %s43, 1
        // Predicated region
        $region13: #{tpu_custom_call.1} parent=11 // pred_check
          %p570 = pneg %p212
        $region14: #{tpu_custom_call.1} parent=11 // pred_check_branch
          %572 = sbr.rel (%p570) target = $region16
        $region15: #{tpu_custom_call.1} parent=11 // pred_region
          %s574 = ssub.s32 128, 128
          %575 = vsyncadd [#allocation6], %s574
          %s576 = sshll.u32 [#allocation7], 4
          %s577 = int_to_ptr.vmem [resolvable:$true] %s576
          %582 = dma.hbm_to_vmem [thread:$0]  %s5, 128, %s577, [#allocation6], 64, 64, 4
        $region16: #{tpu_custom_call.1} parent=11 // pred_fallthru
          _
        // Predicated region
        $region17: #{tpu_custom_call.1} parent=11 // pred_check
          %p583 = pneg %p233
        $region18: #{tpu_custom_call.1} parent=11 // pred_check_branch
          %585 = sbr.rel (%p583) target = $region20
        $region19: #{tpu_custom_call.1} parent=11 // pred_region
          %s587 = ssub.s32 128, 128
          %588 = vsyncadd [#allocation9], %s587
          %s589 = sshll.u32 [#allocation8], 4
          %s590 = int_to_ptr.vmem [resolvable:$true] %s589
          %595 = dma.hbm_to_vmem [thread:$0]  %s6, 128, %s590, [#allocation9], 64, 64, 4
        $region20: #{tpu_custom_call.1} parent=11 // pred_fallthru
          _
        // Predicated region
        $region21: #{tpu_custom_call.1} parent=11 // pred_check
          %p596 = pneg %p254
        $region22: #{tpu_custom_call.1} parent=11 // pred_check_branch
          %598 = sbr.rel (%p596) target = $region24
        $region23: #{tpu_custom_call.1} parent=11 // pred_region
          %s600 = ssub.s32 128, 128
          %601 = vsyncadd [#allocation9], %s600
          %s602 = sshll.u32 [#allocation10], 4
          %s603 = int_to_ptr.vmem [resolvable:$true] %s602
          %608 = dma.hbm_to_vmem [thread:$0]  %s7, 128, %s603, [#allocation9], 64, 64, 4
        $region24: #{tpu_custom_call.1} parent=11 // pred_fallthru
          _
        // Predicated region
        $region25: #{tpu_custom_call.1} parent=11 // pred_check
          %p609 = pneg %p275
        $region26: #{tpu_custom_call.1} parent=11 // pred_check_branch
          %611 = sbr.rel (%p609) target = $region28
        $region27: #{tpu_custom_call.1} parent=11 // pred_region
          %s613 = ssub.s32 128, 128
          %614 = vsyncadd [#allocation12], %s613
          %s615 = sshll.u32 [#allocation11], 4
          %s616 = int_to_ptr.vmem [resolvable:$true] %s615
          %621 = dma.hbm_to_vmem [thread:$0]  %s8, 128, %s616, [#allocation12], 64, 64, 4
        $region28: #{tpu_custom_call.1} parent=11 // pred_fallthru
          _
        // Predicated region
        $region29: #{tpu_custom_call.1} parent=11 // pred_check
          %p622 = pneg %p296
        $region30: #{tpu_custom_call.1} parent=11 // pred_check_branch
          %624 = sbr.rel (%p622) target = $region32
        $region31: #{tpu_custom_call.1} parent=11 // pred_region
          %s626 = ssub.s32 512, 512
          %627 = vsyncadd [#allocation12], %s626
          %s628 = sshll.u32 [#allocation13], 4
          %s629 = int_to_ptr.vmem [resolvable:$true] %s628
          %634 = dma.hbm_to_vmem [thread:$0]  %s9, 512, %s629, [#allocation12], 64, 64, 4
        $region32: #{tpu_custom_call.1} parent=11 // pred_fallthru
          _
        // Predicated region
        $region33: #{tpu_custom_call.1} parent=11 // pred_check
          %p635 = pneg %p317
        $region34: #{tpu_custom_call.1} parent=11 // pred_check_branch
          %637 = sbr.rel (%p635) target = $region36
        $region35: #{tpu_custom_call.1} parent=11 // pred_region
          %s639 = ssub.s32 512, 512
          %640 = vsyncadd [#allocation15], %s639
          %s641 = sshll.u32 [#allocation14], 4
          %s642 = int_to_ptr.vmem [resolvable:$true] %s641
          %647 = dma.hbm_to_vmem [thread:$0]  %s10, 512, %s642, [#allocation15], 64, 64, 4
        $region36: #{tpu_custom_call.1} parent=11 // pred_fallthru
          _
        // Predicated region
        $region37: #{tpu_custom_call.1} parent=11 // pred_check
          %p648 = pneg %p338
        $region38: #{tpu_custom_call.1} parent=11 // pred_check_branch
          %650 = sbr.rel (%p648) target = $region40
        $region39: #{tpu_custom_call.1} parent=11 // pred_region
          %s652 = ssub.s32 512, 512
          %653 = vsyncadd [#allocation15], %s652
          %s654 = sshll.u32 [#allocation16], 4
          %s655 = int_to_ptr.vmem [resolvable:$true] %s654
          %660 = dma.hbm_to_vmem [thread:$0]  %s11, 512, %s655, [#allocation15], 64, 64, 4
        $region40: #{tpu_custom_call.1} parent=11 // pred_fallthru
          _
        // Predicated region
        $region41: #{tpu_custom_call.1} parent=11 // pred_check
          %p661 = pneg %p359
        $region42: #{tpu_custom_call.1} parent=11 // pred_check_branch
          %663 = sbr.rel (%p661) target = $region44
        $region43: #{tpu_custom_call.1} parent=11 // pred_region
          %s665 = ssub.s32 512, 512
          %666 = vsyncadd [#allocation18], %s665
          %s667 = sshll.u32 [#allocation17], 4
          %s668 = int_to_ptr.vmem [resolvable:$true] %s667
          %673 = dma.hbm_to_vmem [thread:$0]  %s12, 512, %s668, [#allocation18], 64, 64, 4
        $region44: #{tpu_custom_call.1} parent=11 // pred_fallthru
          _
        // Predicated region
        $region45: #{tpu_custom_call.1} parent=11 // pred_check
          %p674 = pneg %p380
        $region46: #{tpu_custom_call.1} parent=11 // pred_check_branch
          %676 = sbr.rel (%p674) target = $region48
        $region47: #{tpu_custom_call.1} parent=11 // pred_region
          %s678 = ssub.s32 512, 512
          %679 = vsyncadd [#allocation18], %s678
          %s680 = sshll.u32 [#allocation19], 4
          %s681 = int_to_ptr.vmem [resolvable:$true] %s680
          %686 = dma.hbm_to_vmem [thread:$0]  %s13, 512, %s681, [#allocation18], 64, 64, 4
        $region48: #{tpu_custom_call.1} parent=11 // pred_fallthru
          _
        // Predicated region
        $region49: #{tpu_custom_call.1} parent=11 // pred_check
          %p687 = pneg %p401
        $region50: #{tpu_custom_call.1} parent=11 // pred_check_branch
          %689 = sbr.rel (%p687) target = $region52
        $region51: #{tpu_custom_call.1} parent=11 // pred_region
          %s691 = ssub.s32 512, 512
          %692 = vsyncadd [#allocation21], %s691
          %s693 = sshll.u32 [#allocation20], 4
          %s694 = int_to_ptr.vmem [resolvable:$true] %s693
          %699 = dma.hbm_to_vmem [thread:$0]  %s14, 512, %s694, [#allocation21], 64, 64, 4
        $region52: #{tpu_custom_call.1} parent=11 // pred_fallthru
          _
        // Predicated region
        $region53: #{tpu_custom_call.1} parent=11 // pred_check
          %p700 = pneg %p422
        $region54: #{tpu_custom_call.1} parent=11 // pred_check_branch
          %702 = sbr.rel (%p700) target = $region56
        $region55: #{tpu_custom_call.1} parent=11 // pred_region
          %s704 = ssub.s32 512, 512
          %705 = vsyncadd [#allocation21], %s704
          %s706 = sshll.u32 [#allocation22], 4
          %s707 = int_to_ptr.vmem [resolvable:$true] %s706
          %712 = dma.hbm_to_vmem [thread:$0]  %s15, 512, %s707, [#allocation21], 64, 64, 4
        $region56: #{tpu_custom_call.1} parent=11 // pred_fallthru
          _
        // Predicated region
        $region57: #{tpu_custom_call.1} parent=11 // pred_check
          %p713 = pneg %p443
        $region58: #{tpu_custom_call.1} parent=11 // pred_check_branch
          %715 = sbr.rel (%p713) target = $region60
        $region59: #{tpu_custom_call.1} parent=11 // pred_region
          %s717 = ssub.s32 512, 512
          %718 = vsyncadd [#allocation24], %s717
          %s719 = sshll.u32 [#allocation23], 4
          %s720 = int_to_ptr.vmem [resolvable:$true] %s719
          %725 = dma.hbm_to_vmem [thread:$0]  %s16, 512, %s720, [#allocation24], 64, 64, 4
        $region60: #{tpu_custom_call.1} parent=11 // pred_fallthru
          _
        // Predicated region
        $region61: #{tpu_custom_call.1} parent=11 // pred_check
          %p726 = pneg %p464
        $region62: #{tpu_custom_call.1} parent=11 // pred_check_branch
          %728 = sbr.rel (%p726) target = $region64
        $region63: #{tpu_custom_call.1} parent=11 // pred_region
          %s730 = ssub.s32 512, 512
          %731 = vsyncadd [#allocation24], %s730
          %s732 = sshll.u32 [#allocation25], 4
          %s733 = int_to_ptr.vmem [resolvable:$true] %s732
          %738 = dma.hbm_to_vmem [thread:$0]  %s17, 512, %s733, [#allocation24], 64, 64, 4
        $region64: #{tpu_custom_call.1} parent=11 // pred_fallthru
          _
        // Predicated region
        $region65: #{tpu_custom_call.1} parent=11 // pred_check
          %p739 = pneg %p485
        $region66: #{tpu_custom_call.1} parent=11 // pred_check_branch
          %741 = sbr.rel (%p739) target = $region68
        $region67: #{tpu_custom_call.1} parent=11 // pred_region
          _
        $region68: #{tpu_custom_call.1} parent=11 // pred_fallthru
          _
        // Predicated region
        $region69: #{tpu_custom_call.1} parent=11 // pred_check
          %p742 = pneg %p506
        $region70: #{tpu_custom_call.1} parent=11 // pred_check_branch
          %744 = sbr.rel (%p742) target = $region72
        $region71: #{tpu_custom_call.1} parent=11 // pred_region
          %s746 = ssub.s32 256, 256
          %747 = vsyncadd [#allocation27], %s746
          %s748 = sshll.u32 [#allocation26], 4
          %s749 = int_to_ptr.vmem [resolvable:$true] %s748
          %754 = dma.hbm_to_vmem [thread:$0]  %s19, 256, %s749, [#allocation27], 128, 128, 8
        $region72: #{tpu_custom_call.1} parent=11 // pred_fallthru
          _
        // Predicated region
        $region73: #{tpu_custom_call.1} parent=11 // pred_check
          %p755 = pneg %p527
        $region74: #{tpu_custom_call.1} parent=11 // pred_check_branch
          %757 = sbr.rel (%p755) target = $region76
        $region75: #{tpu_custom_call.1} parent=11 // pred_region
          _
        $region76: #{tpu_custom_call.1} parent=11 // pred_fallthru
          _
      $region12: #{tpu_custom_call.1} parent=5 // pred_fallthru
        _
      %p758 = scmp.lt.s32.totalorder %s43, 4
      // Predicated region
      $region77: #{tpu_custom_call.1} parent=5 // pred_check
        %p759 = pneg %p758
      $region78: #{tpu_custom_call.1} parent=5 // pred_check_branch
        %761 = sbr.rel (%p759) target = $region80
      $region79: #{tpu_custom_call.1} parent=5 // pred_region
        // Predicated region
        $region81: #{tpu_custom_call.1} parent=79 // pred_check
          %p762 = pneg %p77
        $region82: #{tpu_custom_call.1} parent=79 // pred_check_branch
          %764 = sbr.rel (%p762) target = $region84
        $region83: #{tpu_custom_call.1} parent=79 // pred_region
          %p765 = scmp.lt.s32.totalorder %s50, 1
          %s766 = scalar_select %p765, %s50, 1
          %p767 = scmp.lt.s32.totalorder %s51, 1
          %s768 = scalar_select %p767, %s51, 1
          %s769 = smul.addr %s766, 2
          %s770 = sadd.s32 %s768, %s769
          %s771 = smul.addr %s770, 8
          %s772 = scalar_lea.vmem %s0, %s771
        $region84: #{tpu_custom_call.1} parent=79 // pred_fallthru
          _
        // Predicated region
        $region85: #{tpu_custom_call.1} parent=79 // pred_check
          %p773 = pneg %p103
        $region86: #{tpu_custom_call.1} parent=79 // pred_check_branch
          %775 = sbr.rel (%p773) target = $region88
        $region87: #{tpu_custom_call.1} parent=79 // pred_region
          %p776 = scmp.lt.s32.totalorder %s50, 1
          %s777 = scalar_select %p776, %s50, 1
          %s778 = smul.addr %s777, 2
          %s779 = smul.addr %s778, 8
          %s780 = scalar_lea.vmem %s1, %s779
        $region88: #{tpu_custom_call.1} parent=79 // pred_fallthru
          _
        // Predicated region
        $region89: #{tpu_custom_call.1} parent=79 // pred_check
          %p781 = pneg %p129
        $region90: #{tpu_custom_call.1} parent=79 // pred_check_branch
          %783 = sbr.rel (%p781) target = $region92
        $region91: #{tpu_custom_call.1} parent=79 // pred_region
          %p784 = scmp.lt.s32.totalorder %s50, 1
          %s785 = scalar_select %p784, %s50, 1
          %s786 = smul.addr %s785, 2
          %s787 = smul.addr %s786, 8
          %s788 = scalar_lea.vmem %s2, %s787
        $region92: #{tpu_custom_call.1} parent=79 // pred_fallthru
          _
        // Predicated region
        $region93: #{tpu_custom_call.1} parent=79 // pred_check
          %p789 = pneg %p157
        $region94: #{tpu_custom_call.1} parent=79 // pred_check_branch
          %791 = sbr.rel (%p789) target = $region96
        $region95: #{tpu_custom_call.1} parent=79 // pred_region
          %s792 = sand.u32 %s147, 1
          %s793 = scalar_lea.sflag [#allocation3], %s792
          %s794 = sand.u32 %s147, 1
          %s795 = smul.addr %s794, 8
          %s796 = scalar_lea.vmem [#allocation2], %s795
          %s798 = ssub.s32 128, 128
          %799 = vsyncadd %s793, %s798
          %s800 = smul.addr %s50, 2
          %s801 = sadd.s32 %s51, %s800
          %s802 = smul.addr %s801, 128
          %s803 = scalar_lea.hbm %s3, %s802
          %s805 = sshll.u32 %s796, 4
          %s806 = int_to_ptr.vmem [resolvable:$true] %s805
          %808 = dma.hbm_to_vmem [thread:$0]  %s803, 128, %s806, %s793
        $region96: #{tpu_custom_call.1} parent=79 // pred_fallthru
          _
        // Predicated region
        $region97: #{tpu_custom_call.1} parent=79 // pred_check
          %p809 = pneg %p185
        $region98: #{tpu_custom_call.1} parent=79 // pred_check_branch
          %811 = sbr.rel (%p809) target = $region100
        $region99: #{tpu_custom_call.1} parent=79 // pred_region
          %s812 = sand.u32 %s43, 1
          %s813 = scalar_lea.sflag [#allocation6], %s812
          %s814 = sand.u32 %s175, 1
          %s815 = smul.addr %s814, 8
          %s816 = scalar_lea.vmem [#allocation5], %s815
          %s818 = ssub.s32 128, 128
          %819 = vsyncadd %s813, %s818
          %s820 = smul.addr %s50, 2
          %s821 = sadd.s32 %s51, %s820
          %s822 = smul.addr %s821, 128
          %s823 = scalar_lea.hbm %s4, %s822
          %s825 = sshll.u32 %s816, 4
          %s826 = int_to_ptr.vmem [resolvable:$true] %s825
          %828 = dma.hbm_to_vmem [thread:$0]  %s823, 128, %s826, %s813
        $region100: #{tpu_custom_call.1} parent=79 // pred_fallthru
          _
      $region80: #{tpu_custom_call.1} parent=5 // pred_fallthru
        _
      %p829 = scmp.le.s32.totalorder 1, %s43
      %p830 = scmp.lt.s32.totalorder %s43, 5
      %p831 = pnand %p829, %p830
      %p832 = pneg %p831
      // Predicated region
      $region101: #{tpu_custom_call.1} parent=5 // pred_check
        _
      $region102: #{tpu_custom_call.1} parent=5 // pred_check_branch
        %834 = sbr.rel (%p831) target = $region104
      $region103: #{tpu_custom_call.1} parent=5 // pred_region
        %s835 = ssub.s32 %s43, 1
        %s836 = sand.u32 %s150, 1
        %s837 = scalar_lea.sflag [#allocation3], %s836
        %s838 = sand.u32 %s150, 1
        %s839 = smul.addr %s838, 8
        %s840 = scalar_lea.vmem [#allocation2], %s839
        // Predicated region
        $region105: #{tpu_custom_call.1} parent=103 // pred_check
          %p841 = pneg %p163
        $region106: #{tpu_custom_call.1} parent=103 // pred_check_branch
          %843 = sbr.rel (%p841) target = $region108
        $region107: #{tpu_custom_call.1} parent=103 // pred_region
          %844 = dma.done %s837, 128
        $region108: #{tpu_custom_call.1} parent=103 // pred_fallthru
          _
        %s845 = sand.u32 %s48, 1
        %s846 = scalar_lea.sflag [#allocation6], %s845
        %s847 = sand.u32 %s178, 1
        %s848 = smul.addr %s847, 8
        %s849 = scalar_lea.vmem [#allocation5], %s848
        // Predicated region
        $region109: #{tpu_custom_call.1} parent=103 // pred_check
          %p850 = pneg %p191
        $region110: #{tpu_custom_call.1} parent=103 // pred_check_branch
          %852 = sbr.rel (%p850) target = $region112
        $region111: #{tpu_custom_call.1} parent=103 // pred_region
          %853 = dma.done %s846, 128
        $region112: #{tpu_custom_call.1} parent=103 // pred_fallthru
          _
        // Predicated region
        $region113: #{tpu_custom_call.1} parent=103 // pred_check
          %p854 = pneg %p212
        $region114: #{tpu_custom_call.1} parent=103 // pred_check_branch
          %856 = sbr.rel (%p854) target = $region116
        $region115: #{tpu_custom_call.1} parent=103 // pred_region
          %857 = dma.done [#allocation6], 128
        $region116: #{tpu_custom_call.1} parent=103 // pred_fallthru
          _
        // Predicated region
        $region117: #{tpu_custom_call.1} parent=103 // pred_check
          %p858 = pneg %p233
        $region118: #{tpu_custom_call.1} parent=103 // pred_check_branch
          %860 = sbr.rel (%p858) target = $region120
        $region119: #{tpu_custom_call.1} parent=103 // pred_region
          %861 = dma.done [#allocation9], 128
        $region120: #{tpu_custom_call.1} parent=103 // pred_fallthru
          _
        // Predicated region
        $region121: #{tpu_custom_call.1} parent=103 // pred_check
          %p862 = pneg %p254
        $region122: #{tpu_custom_call.1} parent=103 // pred_check_branch
          %864 = sbr.rel (%p862) target = $region124
        $region123: #{tpu_custom_call.1} parent=103 // pred_region
          %865 = dma.done [#allocation9], 128
        $region124: #{tpu_custom_call.1} parent=103 // pred_fallthru
          _
        // Predicated region
        $region125: #{tpu_custom_call.1} parent=103 // pred_check
          %p866 = pneg %p275
        $region126: #{tpu_custom_call.1} parent=103 // pred_check_branch
          %868 = sbr.rel (%p866) target = $region128
        $region127: #{tpu_custom_call.1} parent=103 // pred_region
          %869 = dma.done [#allocation12], 128
        $region128: #{tpu_custom_call.1} parent=103 // pred_fallthru
          _
        // Predicated region
        $region129: #{tpu_custom_call.1} parent=103 // pred_check
          %p870 = pneg %p296
        $region130: #{tpu_custom_call.1} parent=103 // pred_check_branch
          %872 = sbr.rel (%p870) target = $region132
        $region131: #{tpu_custom_call.1} parent=103 // pred_region
          %873 = dma.done [#allocation12], 512
        $region132: #{tpu_custom_call.1} parent=103 // pred_fallthru
          _
        // Predicated region
        $region133: #{tpu_custom_call.1} parent=103 // pred_check
          %p874 = pneg %p317
        $region134: #{tpu_custom_call.1} parent=103 // pred_check_branch
          %876 = sbr.rel (%p874) target = $region136
        $region135: #{tpu_custom_call.1} parent=103 // pred_region
          %877 = dma.done [#allocation15], 512
        $region136: #{tpu_custom_call.1} parent=103 // pred_fallthru
          _
        // Predicated region
        $region137: #{tpu_custom_call.1} parent=103 // pred_check
          %p878 = pneg %p338
        $region138: #{tpu_custom_call.1} parent=103 // pred_check_branch
          %880 = sbr.rel (%p878) target = $region140
        $region139: #{tpu_custom_call.1} parent=103 // pred_region
          %881 = dma.done [#allocation15], 512
        $region140: #{tpu_custom_call.1} parent=103 // pred_fallthru
          _
        // Predicated region
        $region141: #{tpu_custom_call.1} parent=103 // pred_check
          %p882 = pneg %p359
        $region142: #{tpu_custom_call.1} parent=103 // pred_check_branch
          %884 = sbr.rel (%p882) target = $region144
        $region143: #{tpu_custom_call.1} parent=103 // pred_region
          %885 = dma.done [#allocation18], 512
        $region144: #{tpu_custom_call.1} parent=103 // pred_fallthru
          _
        // Predicated region
        $region145: #{tpu_custom_call.1} parent=103 // pred_check
          %p886 = pneg %p380
        $region146: #{tpu_custom_call.1} parent=103 // pred_check_branch
          %888 = sbr.rel (%p886) target = $region148
        $region147: #{tpu_custom_call.1} parent=103 // pred_region
          %889 = dma.done [#allocation18], 512
        $region148: #{tpu_custom_call.1} parent=103 // pred_fallthru
          _
        // Predicated region
        $region149: #{tpu_custom_call.1} parent=103 // pred_check
          %p890 = pneg %p401
        $region150: #{tpu_custom_call.1} parent=103 // pred_check_branch
          %892 = sbr.rel (%p890) target = $region152
        $region151: #{tpu_custom_call.1} parent=103 // pred_region
          %893 = dma.done [#allocation21], 512
        $region152: #{tpu_custom_call.1} parent=103 // pred_fallthru
          _
        // Predicated region
        $region153: #{tpu_custom_call.1} parent=103 // pred_check
          %p894 = pneg %p422
        $region154: #{tpu_custom_call.1} parent=103 // pred_check_branch
          %896 = sbr.rel (%p894) target = $region156
        $region155: #{tpu_custom_call.1} parent=103 // pred_region
          %897 = dma.done [#allocation21], 512
        $region156: #{tpu_custom_call.1} parent=103 // pred_fallthru
          _
        // Predicated region
        $region157: #{tpu_custom_call.1} parent=103 // pred_check
          %p898 = pneg %p443
        $region158: #{tpu_custom_call.1} parent=103 // pred_check_branch
          %900 = sbr.rel (%p898) target = $region160
        $region159: #{tpu_custom_call.1} parent=103 // pred_region
          %901 = dma.done [#allocation24], 512
        $region160: #{tpu_custom_call.1} parent=103 // pred_fallthru
          _
        // Predicated region
        $region161: #{tpu_custom_call.1} parent=103 // pred_check
          %p902 = pneg %p464
        $region162: #{tpu_custom_call.1} parent=103 // pred_check_branch
          %904 = sbr.rel (%p902) target = $region164
        $region163: #{tpu_custom_call.1} parent=103 // pred_region
          %905 = dma.done [#allocation24], 512
        $region164: #{tpu_custom_call.1} parent=103 // pred_fallthru
          _
        // Predicated region
        $region165: #{tpu_custom_call.1} parent=103 // pred_check
          %p906 = pneg %p506
        $region166: #{tpu_custom_call.1} parent=103 // pred_check_branch
          %908 = sbr.rel (%p906) target = $region168
        $region167: #{tpu_custom_call.1} parent=103 // pred_region
          %909 = dma.done [#allocation27], 256
        $region168: #{tpu_custom_call.1} parent=103 // pred_fallthru
          _
        %p910 = scmp.lt.s32.totalorder %s52, 1
        %s911 = scalar_select %p910, %s52, 1
        %p912 = scmp.lt.s32.totalorder %s53, 1
        %s913 = scalar_select %p912, %s53, 1
        %s914 = smul.addr %s911, 2
        %s915 = sadd.s32 %s913, %s914
        %s916 = smul.addr %s915, 8
        %s917 = scalar_lea.vmem %s0, %s916
        %p918 = pneg %p83
        %p919 = pneg %p80
        %p920 = scmp.lt.s32.totalorder %s52, 1
        %s921 = scalar_select %p920, %s52, 1
        %s922 = smul.addr %s921, 2
        %s923 = smul.addr %s922, 8
        %s924 = scalar_lea.vmem %s1, %s923
        %p925 = pneg %p109
        %p926 = pneg %p106
        %p927 = scmp.lt.s32.totalorder %s52, 1
        %s928 = scalar_select %p927, %s52, 1
        %s929 = smul.addr %s928, 2
        %s930 = smul.addr %s929, 8
        %s931 = scalar_lea.vmem %s2, %s930
        %p932 = pneg %p135
        %p933 = pneg %p132
        %s934 = sand.u32 %s150, 1
        %s935 = scalar_lea.sflag [#allocation3], %s934
        %s936 = sand.u32 %s150, 1
        %s937 = smul.addr %s936, 8
        %s938 = scalar_lea.vmem [#allocation2], %s937
        %p939 = pneg %p163
        %p940 = pneg %p160
        %s941 = sand.u32 %s48, 1
        %s942 = scalar_lea.sflag [#allocation6], %s941
        %s943 = sand.u32 %s178, 1
        %s944 = smul.addr %s943, 8
        %s945 = scalar_lea.vmem [#allocation5], %s944
        %p946 = pneg %p191
        %p947 = pneg %p188
        %p948 = pneg %p212
        %p949 = pneg %p209
        %p950 = pneg %p233
        %p951 = pneg %p230
        %p952 = pneg %p254
        %p953 = pneg %p251
        %p954 = pneg %p275
        %p955 = pneg %p272
        %p956 = pneg %p296
        %p957 = pneg %p293
        %p958 = pneg %p317
        %p959 = pneg %p314
        %p960 = pneg %p338
        %p961 = pneg %p335
        %p962 = pneg %p359
        %p963 = pneg %p356
        %p964 = pneg %p380
        %p965 = pneg %p377
        %p966 = pneg %p401
        %p967 = pneg %p398
        %p968 = pneg %p422
        %p969 = pneg %p419
        %p970 = pneg %p443
        %p971 = pneg %p440
        %p972 = pneg %p464
        %p973 = pneg %p461
        %p974 = pneg %p485
        %p975 = pneg %p482
        %p976 = pneg %p506
        %p977 = pneg %p503
        %p978 = pneg %p527
        %p979 = pneg %p524
        %p980 = pneg %p555
        %p981 = pneg %p552
        %s982 = sand.u32 %s542, 1
        %s983 = scalar_lea.sflag [#allocation4], %s982
        %s984 = sand.u32 %s542, 1
        %s985 = smul.addr %s984, 8
        %s986 = scalar_lea.vmem [#allocation28], %s985
        %p987 = scmp.lt.s32.totalorder %s52, 1
        %s988 = scalar_select %p987, %s52, 1
        %p989 = scmp.lt.s32.totalorder %s53, 1
        %s990 = scalar_select %p989, %s53, 1
        %s991 = smul.addr %s988, 2
        %s992 = sadd.s32 %s990, %s991
        %s993 = smul.addr %s992, 8
        %s994 = scalar_lea.vmem %s0, %s993
        %p995 = scmp.lt.s32.totalorder %s52, 1
        %s996 = scalar_select %p995, %s52, 1
        %s997 = smul.addr %s996, 2
        %s998 = smul.addr %s997, 8
        %s999 = scalar_lea.vmem %s1, %s998
        %p1000 = scmp.lt.s32.totalorder %s52, 1
        %s1001 = scalar_select %p1000, %s52, 1
        %s1002 = smul.addr %s1001, 2
        %s1003 = smul.addr %s1002, 8
        %s1004 = scalar_lea.vmem %s2, %s1003
        %s1006 = smul.u32 %s53, 8
        %v1007 = vld [vmem:[%s994] sm:$0xff]
        %v1008 = vld [vmem:[%s999] sm:$0xff]
        %v1009 = vld [vmem:[%s999 + $0x8] sm:$0xff]
        %v1010 = vld [vmem:[%s1004] sm:$0xff]
        %v1011 = vld [vmem:[%s1004 + $0x8] sm:$0xff]
        %v1012 = vld [vmem:[%s840] sm:$0xff]
        %vm1013 = vcmp.gt.f32.partialorder %v1012, 0.0
        %v1014 = vsel %vm1013, 0.0, -1e+09
        %v1015 = vld [vmem:[%s849] sm:$0xff]
        %vm1016 = vcmp.gt.f32.partialorder %v1015, 0.0
        %v1017 = vsel %vm1016, 0.0, -1e+09
        %v1018 = vld [vmem:[#allocation26] sm:$0xff]
        %v1019 = vld [vmem:[#allocation26 + $0x8] sm:$0xff]
        %v1020 = vld [vmem:[#allocation13] sm:$0xf]
        %v1021 = vld [vmem:[#allocation13 + $0x4] sm:$0xf]
        %v1022 = vld [vmem:[#allocation13 + $0x8] sm:$0xf]
        %v1023 = vld [vmem:[#allocation13 + $0xc] sm:$0xf]
        %v1024 = vld [vmem:[#allocation13 + $0x10] sm:$0xf]
        %v1025 = vld [vmem:[#allocation13 + $0x14] sm:$0xf]
        %v1026 = vld [vmem:[#allocation13 + $0x18] sm:$0xf]
        %v1027 = vld [vmem:[#allocation13 + $0x1c] sm:$0xf]
        %v1028 = vld [vmem:[#allocation14] sm:$0xf]
        %v1029 = vld [vmem:[#allocation14 + $0x4] sm:$0xf]
        %v1030 = vld [vmem:[#allocation14 + $0x8] sm:$0xf]
        %v1031 = vld [vmem:[#allocation14 + $0xc] sm:$0xf]
        %v1032 = vld [vmem:[#allocation14 + $0x10] sm:$0xf]
        %v1033 = vld [vmem:[#allocation14 + $0x14] sm:$0xf]
        %v1034 = vld [vmem:[#allocation14 + $0x18] sm:$0xf]
        %v1035 = vld [vmem:[#allocation14 + $0x1c] sm:$0xf]
        %v1036 = vld [vmem:[#allocation16] sm:$0xf]
        %v1037 = vld [vmem:[#allocation16 + $0x4] sm:$0xf]
        %v1038 = vld [vmem:[#allocation16 + $0x8] sm:$0xf]
        %v1039 = vld [vmem:[#allocation16 + $0xc] sm:$0xf]
        %v1040 = vld [vmem:[#allocation16 + $0x10] sm:$0xf]
        %v1041 = vld [vmem:[#allocation16 + $0x14] sm:$0xf]
        %v1042 = vld [vmem:[#allocation16 + $0x18] sm:$0xf]
        %v1043 = vld [vmem:[#allocation16 + $0x1c] sm:$0xf]
        %v1044 = vld [vmem:[#allocation17] sm:$0xf]
        %v1045 = vld [vmem:[#allocation17 + $0x4] sm:$0xf]
        %v1046 = vld [vmem:[#allocation17 + $0x8] sm:$0xf]
        %v1047 = vld [vmem:[#allocation17 + $0xc] sm:$0xf]
        %v1048 = vld [vmem:[#allocation17 + $0x10] sm:$0xf]
        %v1049 = vld [vmem:[#allocation17 + $0x14] sm:$0xf]
        %v1050 = vld [vmem:[#allocation17 + $0x18] sm:$0xf]
        %v1051 = vld [vmem:[#allocation17 + $0x1c] sm:$0xf]
        %v1052 = vld [vmem:[#allocation7] sm:$0xf]
        %v1053 = vld [vmem:[#allocation7 + $0x4] sm:$0xf]
        %v1054 = vld [vmem:[#allocation8] sm:$0xf]
        %v1055 = vld [vmem:[#allocation8 + $0x4] sm:$0x1]
        %v1056 = vpack.c.bf16 %v1007, %v1007
        %v1057 = vlaneseq
        %v1058 = vshrl.u32 %v1057, 7
        %v1059 = vsub.s32 0, %v1058
        %v1060 = vrot.slane %v1018, %v1059
        %v1069 = vunpack.c.l.b16 %v1020
        %v1070 = vunpack.c.l.b16 %v1021
        %v1071 = vunpack.c.l.b16 %v1022
        %v1072 = vunpack.c.l.b16 %v1023
        %v1073 = vunpack.c.l.b16 %v1024
        %v1074 = vunpack.c.l.b16 %v1025
        %v1075 = vunpack.c.l.b16 %v1026
        %v1076 = vunpack.c.l.b16 %v1027
        %v1077 = vpack.c.b16 %v1070, %v1069
        %v1078 = vpack.c.b16 %v1072, %v1071
        %v1079 = vpack.c.b16 %v1074, %v1073
        %v1080 = vpack.c.b16 %v1076, %v1075
        %vm1085 = vcmask 523264
        %v1087 = vsel %vm1085, %v1056, 0
        %1089 = vmatprep.subr.bf16.mxu0 0
        %1090 = vmatpush1.bf16.msra.mxu0 0
        %1091 = vmatprep.subr.bf16.mxu0 0
        %1092 = vmatpush1.bf16.msra.mxu0 0
        %1093 = vmatprep.subr.bf16.mxu0 0
        %1094 = vmatpush1.bf16.msra.mxu0 0
        %1095 = vmatprep.subr.bf16.mxu0 0
        %1096 = vmatpush1.bf16.msra.mxu0 0
        %1097 = vmatprep.subr.bf16.mxu0 0
        %1098 = vmatpush1.bf16.msra.mxu0 %v1080
        %1099 = vmatprep.subr.bf16.mxu0 0
        %1100 = vmatpush1.bf16.msra.mxu0 %v1079
        %1101 = vmatprep.subr.bf16.mxu0 0
        %1102 = vmatpush1.bf16.msra.mxu0 %v1078
        %1103 = vmatprep.subr.bf16.mxu0 0
        %1104 = vmatpush1.bf16.msra.mxu0 %v1077
        %1105 = vmatprep.subr.bf16.mxu0 0
        %1106 = vmatpush2.bf16.msra.mxu0 0
        %1107 = vmatprep.subr.bf16.mxu0 0
        %1108 = vmatpush2.bf16.msra.mxu0 0
        %1109 = vmatprep.subr.bf16.mxu0 0
        %1110 = vmatpush2.bf16.msra.mxu0 0
        %1111 = vmatprep.subr.bf16.mxu0 0
        %1112 = vmatpush2.bf16.msra.mxu0 0
        %1113 = vmatprep.subr.bf16.mxu0 0
        %1114 = vmatpush2.bf16.msra.mxu0 0
        %1115 = vmatprep.subr.bf16.mxu0 0
        %1116 = vmatpush2.bf16.msra.mxu0 0
        %1117 = vmatprep.subr.bf16.mxu0 0
        %1118 = vmatpush2.bf16.msra.mxu0 0
        %1119 = vmatprep.subr.bf16.mxu0 0
        %1120 = vmatpush2.bf16.msra.mxu0 0
        %1121 = vmatprep.mubr.bf16.mxu0 0
        %1122 = vmatmul.mubr.bf16.gmra.mxu0 %v1087
        %v1123 = vpop.f32.mrf.mxu0
        %v1124 = vadd.f32 %v1060, %v1123
        %v1125 = vpop.f32.mrf.mxu0
        %v1126 = vpop.f32.mrf.mxu0
        %v1127 = vpop.f32.mrf.mxu0
        %1128 = vdwg.mxu0
        %v1129 = vpack.c.bf16 %v1009, %v1008
        %v1130 = vlaneseq
        %v1131 = vshrl.u32 %v1130, 7
        %v1132 = vsub.s32 1, %v1131
        %v1133 = vrot.slane %v1018, %v1132
        %v1142 = vunpack.c.l.b16 %v1028
        %v1143 = vunpack.c.l.b16 %v1029
        %v1144 = vunpack.c.l.b16 %v1030
        %v1145 = vunpack.c.l.b16 %v1031
        %v1146 = vunpack.c.l.b16 %v1032
        %v1147 = vunpack.c.l.b16 %v1033
        %v1148 = vunpack.c.l.b16 %v1034
        %v1149 = vunpack.c.l.b16 %v1035
        %v1150 = vpack.c.b16 %v1143, %v1142
        %v1151 = vpack.c.b16 %v1145, %v1144
        %v1152 = vpack.c.b16 %v1147, %v1146
        %v1153 = vpack.c.b16 %v1149, %v1148
        %v1159 = vsel %vm1085, %v1129, 0
        %1161 = vmatprep.subr.bf16.mxu0 0
        %1162 = vmatpush1.bf16.msra.mxu0 0
        %1163 = vmatprep.subr.bf16.mxu0 0
        %1164 = vmatpush1.bf16.msra.mxu0 0
        %1165 = vmatprep.subr.bf16.mxu0 0
        %1166 = vmatpush1.bf16.msra.mxu0 0
        %1167 = vmatprep.subr.bf16.mxu0 0
        %1168 = vmatpush1.bf16.msra.mxu0 0
        %1169 = vmatprep.subr.bf16.mxu0 0
        %1170 = vmatpush1.bf16.msra.mxu0 %v1153
        %1171 = vmatprep.subr.bf16.mxu0 0
        %1172 = vmatpush1.bf16.msra.mxu0 %v1152
        %1173 = vmatprep.subr.bf16.mxu0 0
        %1174 = vmatpush1.bf16.msra.mxu0 %v1151
        %1175 = vmatprep.subr.bf16.mxu0 0
        %1176 = vmatpush1.bf16.msra.mxu0 %v1150
        %1177 = vmatprep.subr.bf16.mxu0 0
        %1178 = vmatpush2.bf16.msra.mxu0 0
        %1179 = vmatprep.subr.bf16.mxu0 0
        %1180 = vmatpush2.bf16.msra.mxu0 0
        %1181 = vmatprep.subr.bf16.mxu0 0
        %1182 = vmatpush2.bf16.msra.mxu0 0
        %1183 = vmatprep.subr.bf16.mxu0 0
        %1184 = vmatpush2.bf16.msra.mxu0 0
        %1185 = vmatprep.subr.bf16.mxu0 0
        %1186 = vmatpush2.bf16.msra.mxu0 0
        %1187 = vmatprep.subr.bf16.mxu0 0
        %1188 = vmatpush2.bf16.msra.mxu0 0
        %1189 = vmatprep.subr.bf16.mxu0 0
        %1190 = vmatpush2.bf16.msra.mxu0 0
        %1191 = vmatprep.subr.bf16.mxu0 0
        %1192 = vmatpush2.bf16.msra.mxu0 0
        %1193 = vmatprep.mubr.bf16.mxu0 0
        %1194 = vmatmul.mubr.bf16.gmra.mxu0 %v1159
        %v1195 = vpop.f32.mrf.mxu0
        %v1196 = vadd.f32 %v1133, %v1195
        %v1197 = vpop.f32.mrf.mxu0
        %v1198 = vpop.f32.mrf.mxu0
        %v1199 = vadd.f32 %v1133, %v1198
        %v1200 = vpop.f32.mrf.mxu0
        %1201 = vdwg.mxu0
        %v1202 = vlaneseq
        %v1203 = vshrl.u32 %v1202, 7
        %v1204 = vsub.s32 2, %v1203
        %v1205 = vrot.slane %v1018, %v1204
        %v1214 = vunpack.c.l.b16 %v1036
        %v1215 = vunpack.c.l.b16 %v1037
        %v1216 = vunpack.c.l.b16 %v1038
        %v1217 = vunpack.c.l.b16 %v1039
        %v1218 = vunpack.c.l.b16 %v1040
        %v1219 = vunpack.c.l.b16 %v1041
        %v1220 = vunpack.c.l.b16 %v1042
        %v1221 = vunpack.c.l.b16 %v1043
        %v1222 = vpack.c.b16 %v1215, %v1214
        %v1223 = vpack.c.b16 %v1217, %v1216
        %v1224 = vpack.c.b16 %v1219, %v1218
        %v1225 = vpack.c.b16 %v1221, %v1220
        %1230 = vmatprep.subr.bf16.mxu0 0
        %1231 = vmatpush1.bf16.msra.mxu0 0
        %1232 = vmatprep.subr.bf16.mxu0 0
        %1233 = vmatpush1.bf16.msra.mxu0 0
        %1234 = vmatprep.subr.bf16.mxu0 0
        %1235 = vmatpush1.bf16.msra.mxu0 0
        %1236 = vmatprep.subr.bf16.mxu0 0
        %1237 = vmatpush1.bf16.msra.mxu0 0
        %1238 = vmatprep.subr.bf16.mxu0 0
        %1239 = vmatpush1.bf16.msra.mxu0 %v1225
        %1240 = vmatprep.subr.bf16.mxu0 0
        %1241 = vmatpush1.bf16.msra.mxu0 %v1224
        %1242 = vmatprep.subr.bf16.mxu0 0
        %1243 = vmatpush1.bf16.msra.mxu0 %v1223
        %1244 = vmatprep.subr.bf16.mxu0 0
        %1245 = vmatpush1.bf16.msra.mxu0 %v1222
        %1246 = vmatprep.subr.bf16.mxu0 0
        %1247 = vmatpush2.bf16.msra.mxu0 0
        %1248 = vmatprep.subr.bf16.mxu0 0
        %1249 = vmatpush2.bf16.msra.mxu0 0
        %1250 = vmatprep.subr.bf16.mxu0 0
        %1251 = vmatpush2.bf16.msra.mxu0 0
        %1252 = vmatprep.subr.bf16.mxu0 0
        %1253 = vmatpush2.bf16.msra.mxu0 0
        %1254 = vmatprep.subr.bf16.mxu0 0
        %1255 = vmatpush2.bf16.msra.mxu0 0
        %1256 = vmatprep.subr.bf16.mxu0 0
        %1257 = vmatpush2.bf16.msra.mxu0 0
        %1258 = vmatprep.subr.bf16.mxu0 0
        %1259 = vmatpush2.bf16.msra.mxu0 0
        %1260 = vmatprep.subr.bf16.mxu0 0
        %1261 = vmatpush2.bf16.msra.mxu0 0
        %1262 = vmatprep.mubr.bf16.mxu0 0
        %1263 = vmatmul.mubr.bf16.gmra.mxu0 %v1159
        %v1264 = vpop.f32.mrf.mxu0
        %v1265 = vadd.f32 %v1205, %v1264
        %v1266 = vpop.f32.mrf.mxu0
        %v1267 = vpop.f32.mrf.mxu0
        %v1268 = vadd.f32 %v1205, %v1267
        %v1269 = vpop.f32.mrf.mxu0
        %1270 = vdwg.mxu0
        %v1271 = vmul.f32 %v1124, 0.25
        %v1272 = vpack.c.bf16 %v1271, %v1271
        %1274 = vrot.lane.b32.xlu0 %v1272, 112
        %v1275 = vpop.permute.xlu0 %1274
        %1276 = vrot.lane.b32.xlu0 %v1272, 96
        %v1277 = vpop.permute.xlu0 %1276
        %1278 = vrot.lane.b32.xlu0 %v1272, 80
        %v1279 = vpop.permute.xlu0 %1278
        %v1280 = vpack.c.bf16 %v1199, %v1196
        %1282 = vrot.lane.b32.xlu0 %v1280, 112
        %v1283 = vpop.permute.xlu0 %1282
        %1284 = vrot.lane.b32.xlu0 %v1280, 96
        %v1285 = vpop.permute.xlu0 %1284
        %1286 = vrot.lane.b32.xlu0 %v1280, 80
        %v1287 = vpop.permute.xlu0 %1286
        %v1288 = vpack.c.bf16 %v1268, %v1265
        %1290 = vrot.lane.b32.xlu0 %v1288, 112
        %v1291 = vpop.permute.xlu0 %1290
        %1293 = vrot.lane.b32.xlu0 %v1288, 96
        %v1294 = vpop.permute.xlu0 %1293
        %1296 = vrot.lane.b32.xlu0 %v1288, 80
        %v1297 = vpop.permute.xlu0 %1296
        %v1301 = vunpack.c.l.b16 %v1052
        %v1302 = vunpack.c.l.b16 %v1053
        %v1303 = vpack.c.b16 %v1302, %v1301
        %vm1305 = vcmask 130048
        %v1307 = vsel %vm1305, %v1272, 0
        %1309 = vmatprep.subr.bf16.mxu0 0
        %1310 = vmatpush1.bf16.msra.mxu0 0
        %1311 = vmatprep.subr.bf16.mxu0 0
        %1312 = vmatpush1.bf16.msra.mxu0 0
        %1313 = vmatprep.subr.bf16.mxu0 0
        %1314 = vmatpush1.bf16.msra.mxu0 0
        %1315 = vmatprep.subr.bf16.mxu0 0
        %1316 = vmatpush1.bf16.msra.mxu0 0
        %1317 = vmatprep.subr.bf16.mxu0 0
        %1318 = vmatpush1.bf16.msra.mxu0 0
        %1319 = vmatprep.subr.bf16.mxu0 0
        %1320 = vmatpush1.bf16.msra.mxu0 0
        %1321 = vmatprep.subr.bf16.mxu0 0
        %1322 = vmatpush1.bf16.msra.mxu0 0
        %1323 = vmatprep.subr.bf16.mxu0 0
        %1324 = vmatpush1.bf16.msra.mxu0 %v1303
        %1325 = vmatprep.subr.bf16.mxu0 0
        %1326 = vmatpush2.bf16.msra.mxu0 0
        %1327 = vmatprep.subr.bf16.mxu0 0
        %1328 = vmatpush2.bf16.msra.mxu0 0
        %1329 = vmatprep.subr.bf16.mxu0 0
        %1330 = vmatpush2.bf16.msra.mxu0 0
        %1331 = vmatprep.subr.bf16.mxu0 0
        %1332 = vmatpush2.bf16.msra.mxu0 0
        %1333 = vmatprep.subr.bf16.mxu0 0
        %1334 = vmatpush2.bf16.msra.mxu0 0
        %1335 = vmatprep.subr.bf16.mxu0 0
        %1336 = vmatpush2.bf16.msra.mxu0 0
        %1337 = vmatprep.subr.bf16.mxu0 0
        %1338 = vmatpush2.bf16.msra.mxu0 0
        %1339 = vmatprep.subr.bf16.mxu0 0
        %1340 = vmatpush2.bf16.msra.mxu0 0
        %1341 = vmatprep.mubr.bf16.mxu0 0
        %1342 = vmatmul.mubr.bf16.gmra.mxu0 %v1307
        %v1343 = vpop.f32.mrf.mxu0
        %v1344 = vadd.f32 0.0, %v1343
        %v1345 = vpop.f32.mrf.mxu0
        %v1346 = vpop.f32.mrf.mxu0
        %v1347 = vpop.f32.mrf.mxu0
        %1348 = vdwg.mxu0
        %v1350 = vsel %vm1305, %v1275, 0
        %1352 = vmatprep.subr.bf16.mxu0 0
        %1353 = vmatpush1.bf16.msra.mxu0 0
        %1354 = vmatprep.subr.bf16.mxu0 0
        %1355 = vmatpush1.bf16.msra.mxu0 0
        %1356 = vmatprep.subr.bf16.mxu0 0
        %1357 = vmatpush1.bf16.msra.mxu0 0
        %1358 = vmatprep.subr.bf16.mxu0 0
        %1359 = vmatpush1.bf16.msra.mxu0 0
        %1360 = vmatprep.subr.bf16.mxu0 0
        %1361 = vmatpush1.bf16.msra.mxu0 0
        %1362 = vmatprep.subr.bf16.mxu0 0
        %1363 = vmatpush1.bf16.msra.mxu0 0
        %1364 = vmatprep.subr.bf16.mxu0 0
        %1365 = vmatpush1.bf16.msra.mxu0 0
        %1366 = vmatprep.subr.bf16.mxu0 0
        %1367 = vmatpush1.bf16.msra.mxu0 %v1303
        %1368 = vmatprep.subr.bf16.mxu0 0
        %1369 = vmatpush2.bf16.msra.mxu0 0
        %1370 = vmatprep.subr.bf16.mxu0 0
        %1371 = vmatpush2.bf16.msra.mxu0 0
        %1372 = vmatprep.subr.bf16.mxu0 0
        %1373 = vmatpush2.bf16.msra.mxu0 0
        %1374 = vmatprep.subr.bf16.mxu0 0
        %1375 = vmatpush2.bf16.msra.mxu0 0
        %1376 = vmatprep.subr.bf16.mxu0 0
        %1377 = vmatpush2.bf16.msra.mxu0 0
        %1378 = vmatprep.subr.bf16.mxu0 0
        %1379 = vmatpush2.bf16.msra.mxu0 0
        %1380 = vmatprep.subr.bf16.mxu0 0
        %1381 = vmatpush2.bf16.msra.mxu0 0
        %1382 = vmatprep.subr.bf16.mxu0 0
        %1383 = vmatpush2.bf16.msra.mxu0 0
        %1384 = vmatprep.mubr.bf16.mxu0 0
        %1385 = vmatmul.mubr.bf16.gmra.mxu0 %v1350
        %v1386 = vpop.f32.mrf.mxu0
        %v1387 = vadd.f32 0.0, %v1386
        %v1388 = vpop.f32.mrf.mxu0
        %v1389 = vpop.f32.mrf.mxu0
        %v1390 = vpop.f32.mrf.mxu0
        %1391 = vdwg.mxu0
        %v1393 = vsel %vm1305, %v1277, 0
        %1395 = vmatprep.subr.bf16.mxu0 0
        %1396 = vmatpush1.bf16.msra.mxu0 0
        %1397 = vmatprep.subr.bf16.mxu0 0
        %1398 = vmatpush1.bf16.msra.mxu0 0
        %1399 = vmatprep.subr.bf16.mxu0 0
        %1400 = vmatpush1.bf16.msra.mxu0 0
        %1401 = vmatprep.subr.bf16.mxu0 0
        %1402 = vmatpush1.bf16.msra.mxu0 0
        %1403 = vmatprep.subr.bf16.mxu0 0
        %1404 = vmatpush1.bf16.msra.mxu0 0
        %1405 = vmatprep.subr.bf16.mxu0 0
        %1406 = vmatpush1.bf16.msra.mxu0 0
        %1407 = vmatprep.subr.bf16.mxu0 0
        %1408 = vmatpush1.bf16.msra.mxu0 0
        %1409 = vmatprep.subr.bf16.mxu0 0
        %1410 = vmatpush1.bf16.msra.mxu0 %v1303
        %1411 = vmatprep.subr.bf16.mxu0 0
        %1412 = vmatpush2.bf16.msra.mxu0 0
        %1413 = vmatprep.subr.bf16.mxu0 0
        %1414 = vmatpush2.bf16.msra.mxu0 0
        %1415 = vmatprep.subr.bf16.mxu0 0
        %1416 = vmatpush2.bf16.msra.mxu0 0
        %1417 = vmatprep.subr.bf16.mxu0 0
        %1418 = vmatpush2.bf16.msra.mxu0 0
        %1419 = vmatprep.subr.bf16.mxu0 0
        %1420 = vmatpush2.bf16.msra.mxu0 0
        %1421 = vmatprep.subr.bf16.mxu0 0
        %1422 = vmatpush2.bf16.msra.mxu0 0
        %1423 = vmatprep.subr.bf16.mxu0 0
        %1424 = vmatpush2.bf16.msra.mxu0 0
        %1425 = vmatprep.subr.bf16.mxu0 0
        %1426 = vmatpush2.bf16.msra.mxu0 0
        %1427 = vmatprep.mubr.bf16.mxu0 0
        %1428 = vmatmul.mubr.bf16.gmra.mxu0 %v1393
        %v1429 = vpop.f32.mrf.mxu0
        %v1430 = vadd.f32 0.0, %v1429
        %v1431 = vpop.f32.mrf.mxu0
        %v1432 = vpop.f32.mrf.mxu0
        %v1433 = vpop.f32.mrf.mxu0
        %1434 = vdwg.mxu0
        %v1436 = vsel %vm1305, %v1279, 0
        %1438 = vmatprep.subr.bf16.mxu0 0
        %1439 = vmatpush1.bf16.msra.mxu0 0
        %1440 = vmatprep.subr.bf16.mxu0 0
        %1441 = vmatpush1.bf16.msra.mxu0 0
        %1442 = vmatprep.subr.bf16.mxu0 0
        %1443 = vmatpush1.bf16.msra.mxu0 0
        %1444 = vmatprep.subr.bf16.mxu0 0
        %1445 = vmatpush1.bf16.msra.mxu0 0
        %1446 = vmatprep.subr.bf16.mxu0 0
        %1447 = vmatpush1.bf16.msra.mxu0 0
        %1448 = vmatprep.subr.bf16.mxu0 0
        %1449 = vmatpush1.bf16.msra.mxu0 0
        %1450 = vmatprep.subr.bf16.mxu0 0
        %1451 = vmatpush1.bf16.msra.mxu0 0
        %1452 = vmatprep.subr.bf16.mxu0 0
        %1453 = vmatpush1.bf16.msra.mxu0 %v1303
        %1454 = vmatprep.subr.bf16.mxu0 0
        %1455 = vmatpush2.bf16.msra.mxu0 0
        %1456 = vmatprep.subr.bf16.mxu0 0
        %1457 = vmatpush2.bf16.msra.mxu0 0
        %1458 = vmatprep.subr.bf16.mxu0 0
        %1459 = vmatpush2.bf16.msra.mxu0 0
        %1460 = vmatprep.subr.bf16.mxu0 0
        %1461 = vmatpush2.bf16.msra.mxu0 0
        %1462 = vmatprep.subr.bf16.mxu0 0
        %1463 = vmatpush2.bf16.msra.mxu0 0
        %1464 = vmatprep.subr.bf16.mxu0 0
        %1465 = vmatpush2.bf16.msra.mxu0 0
        %1466 = vmatprep.subr.bf16.mxu0 0
        %1467 = vmatpush2.bf16.msra.mxu0 0
        %1468 = vmatprep.subr.bf16.mxu0 0
        %1469 = vmatpush2.bf16.msra.mxu0 0
        %1470 = vmatprep.mubr.bf16.mxu0 0
        %1471 = vmatmul.mubr.bf16.gmra.mxu0 %v1436
        %v1472 = vpop.f32.mrf.mxu0
        %v1473 = vadd.f32 0.0, %v1472
        %v1474 = vpop.f32.mrf.mxu0
        %v1475 = vpop.f32.mrf.mxu0
        %v1476 = vpop.f32.mrf.mxu0
        %1477 = vdwg.mxu0
        %v1478 = vlaneseq
        %v1479 = vshrl.u32 %v1478, 7
        %v1480 = vstv %s1006
        %v1481 = vadd.s32 %v1479, %v1480
        %v1482 = vlaneseq
        %v1483 = vand.u32 %v1482, 127
        %v1484 = vsub.s32 %v1483, %v1481
        %vm1485 = vcmp.gt.s32.totalorder %v1484, 4294967292
        %v1486 = vsel %vm1485, %v1484, 4294967292
        %vm1487 = vcmp.lt.s32.totalorder %v1486, 4
        %v1488 = vsel %vm1487, %v1486, 4
        %v1489 = vadd.s32 %v1488, 4
        %vm1490 = vcmp.eq.s32.totalorder %v1489, 0
        %vm1491 = vcmp.eq.s32.totalorder %v1489, 1
        %vm1492 = vcmp.eq.s32.totalorder %v1489, 2
        %vm1493 = vcmp.eq.s32.totalorder %v1489, 3
        %vm1494 = vcmp.eq.s32.totalorder %v1489, 4
        %vm1495 = vcmp.eq.s32.totalorder %v1489, 5
        %vm1496 = vcmp.eq.s32.totalorder %v1489, 6
        %vm1497 = vcmp.eq.s32.totalorder %v1489, 7
        %vm1498 = vcmp.eq.s32.totalorder %v1489, 8
        %v1499 = vsel %vm1490, 1, 0
        %vm1500 = vcmp.eq.s32.totalorder %v1499, 1
        %1502 = vset.pattern.permute.xlu0 0
        %1503 = vperm.xlu0 %1502, %v1344
        %v1504 = vpop.permute.xlu0 %1503
        %1507 = vset.pattern.permute.xlu0 0
        %1508 = vperm.xlu0 %1507, %v1387
        %v1509 = vpop.permute.xlu0 %1508
        %1512 = vset.pattern.permute.xlu0 0
        %1513 = vperm.xlu0 %1512, %v1430
        %v1514 = vpop.permute.xlu0 %1513
        %1517 = vset.pattern.permute.xlu0 0
        %1518 = vperm.xlu0 %1517, %v1473
        %v1519 = vpop.permute.xlu0 %1518
        %v1521 = vsel %vm1500, %v1504, 0.0
        %v1522 = vsel %vm1500, %v1509, 0.0
        %v1523 = vsel %vm1500, %v1514, 0.0
        %v1524 = vsel %vm1500, %v1519, 0.0
        %v1526 = vsel %vm1305, %v1280, 0
        %1528 = vmatprep.subr.bf16.mxu0 0
        %1529 = vmatpush1.bf16.xpose.msra.mxu0 0
        %1530 = vmatprep.subr.bf16.mxu0 0
        %1531 = vmatpush1.bf16.xpose.msra.mxu0 0
        %1532 = vmatprep.subr.bf16.mxu0 0
        %1533 = vmatpush1.bf16.xpose.msra.mxu0 0
        %1534 = vmatprep.subr.bf16.mxu0 0
        %1535 = vmatpush1.bf16.xpose.msra.mxu0 0
        %1536 = vmatprep.subr.bf16.mxu0 0
        %1537 = vmatpush1.bf16.xpose.msra.mxu0 0
        %1538 = vmatprep.subr.bf16.mxu0 0
        %1539 = vmatpush1.bf16.xpose.msra.mxu0 0
        %1540 = vmatprep.subr.bf16.mxu0 0
        %1541 = vmatpush1.bf16.xpose.msra.mxu0 0
        %1542 = vmatprep.subr.bf16.mxu0 0
        %1543 = vmatpush1.bf16.xpose.msra.mxu0 %v1526
        %1544 = vmatprep.subr.bf16.mxu0 0
        %1545 = vmatpush2.bf16.xpose.msra.mxu0 0
        %1546 = vmatprep.subr.bf16.mxu0 0
        %1547 = vmatpush2.bf16.xpose.msra.mxu0 0
        %1548 = vmatprep.subr.bf16.mxu0 0
        %1549 = vmatpush2.bf16.xpose.msra.mxu0 0
        %1550 = vmatprep.subr.bf16.mxu0 0
        %1551 = vmatpush2.bf16.xpose.msra.mxu0 0
        %1552 = vmatprep.subr.bf16.mxu0 0
        %1553 = vmatpush2.bf16.xpose.msra.mxu0 0
        %1554 = vmatprep.subr.bf16.mxu0 0
        %1555 = vmatpush2.bf16.xpose.msra.mxu0 0
        %1556 = vmatprep.subr.bf16.mxu0 0
        %1557 = vmatpush2.bf16.xpose.msra.mxu0 0
        %1558 = vmatprep.subr.bf16.mxu0 0
        %1559 = vmatpush2.bf16.xpose.msra.mxu0 0
        %1560 = vmatprep.mubr.bf16.mxu0 0
        %1561 = vmatmul.mubr.bf16.gmra.mxu0 %v1307
        %v1562 = vpop.f32.mrf.mxu0
        %v1563 = vadd.f32 %v1521, %v1562
        %v1564 = vpop.f32.mrf.mxu0
        %v1565 = vpop.f32.mrf.mxu0
        %v1566 = vpop.f32.mrf.mxu0
        %1567 = vdwg.mxu0
        %v1569 = vsel %vm1305, %v1283, 0
        %1571 = vmatprep.subr.bf16.mxu0 0
        %1572 = vmatpush1.bf16.xpose.msra.mxu0 0
        %1573 = vmatprep.subr.bf16.mxu0 0
        %1574 = vmatpush1.bf16.xpose.msra.mxu0 0
        %1575 = vmatprep.subr.bf16.mxu0 0
        %1576 = vmatpush1.bf16.xpose.msra.mxu0 0
        %1577 = vmatprep.subr.bf16.mxu0 0
        %1578 = vmatpush1.bf16.xpose.msra.mxu0 0
        %1579 = vmatprep.subr.bf16.mxu0 0
        %1580 = vmatpush1.bf16.xpose.msra.mxu0 0
        %1581 = vmatprep.subr.bf16.mxu0 0
        %1582 = vmatpush1.bf16.xpose.msra.mxu0 0
        %1583 = vmatprep.subr.bf16.mxu0 0
        %1584 = vmatpush1.bf16.xpose.msra.mxu0 0
        %1585 = vmatprep.subr.bf16.mxu0 0
        %1586 = vmatpush1.bf16.xpose.msra.mxu0 %v1569
        %1587 = vmatprep.subr.bf16.mxu0 0
        %1588 = vmatpush2.bf16.xpose.msra.mxu0 0
        %1589 = vmatprep.subr.bf16.mxu0 0
        %1590 = vmatpush2.bf16.xpose.msra.mxu0 0
        %1591 = vmatprep.subr.bf16.mxu0 0
        %1592 = vmatpush2.bf16.xpose.msra.mxu0 0
        %1593 = vmatprep.subr.bf16.mxu0 0
        %1594 = vmatpush2.bf16.xpose.msra.mxu0 0
        %1595 = vmatprep.subr.bf16.mxu0 0
        %1596 = vmatpush2.bf16.xpose.msra.mxu0 0
        %1597 = vmatprep.subr.bf16.mxu0 0
        %1598 = vmatpush2.bf16.xpose.msra.mxu0 0
        %1599 = vmatprep.subr.bf16.mxu0 0
        %1600 = vmatpush2.bf16.xpose.msra.mxu0 0
        %1601 = vmatprep.subr.bf16.mxu0 0
        %1602 = vmatpush2.bf16.xpose.msra.mxu0 0
        %1603 = vmatprep.mubr.bf16.mxu0 0
        %1604 = vmatmul.mubr.bf16.gmra.mxu0 %v1350
        %v1605 = vpop.f32.mrf.mxu0
        %v1606 = vadd.f32 %v1522, %v1605
        %v1607 = vpop.f32.mrf.mxu0
        %v1608 = vpop.f32.mrf.mxu0
        %v1609 = vpop.f32.mrf.mxu0
        %1610 = vdwg.mxu0
        %v1612 = vsel %vm1305, %v1285, 0
        %1614 = vmatprep.subr.bf16.mxu0 0
        %1615 = vmatpush1.bf16.xpose.msra.mxu0 0
        %1616 = vmatprep.subr.bf16.mxu0 0
        %1617 = vmatpush1.bf16.xpose.msra.mxu0 0
        %1618 = vmatprep.subr.bf16.mxu0 0
        %1619 = vmatpush1.bf16.xpose.msra.mxu0 0
        %1620 = vmatprep.subr.bf16.mxu0 0
        %1621 = vmatpush1.bf16.xpose.msra.mxu0 0
        %1622 = vmatprep.subr.bf16.mxu0 0
        %1623 = vmatpush1.bf16.xpose.msra.mxu0 0
        %1624 = vmatprep.subr.bf16.mxu0 0
        %1625 = vmatpush1.bf16.xpose.msra.mxu0 0
        %1626 = vmatprep.subr.bf16.mxu0 0
        %1627 = vmatpush1.bf16.xpose.msra.mxu0 0
        %1628 = vmatprep.subr.bf16.mxu0 0
        %1629 = vmatpush1.bf16.xpose.msra.mxu0 %v1612
        %1630 = vmatprep.subr.bf16.mxu0 0
        %1631 = vmatpush2.bf16.xpose.msra.mxu0 0
        %1632 = vmatprep.subr.bf16.mxu0 0
        %1633 = vmatpush2.bf16.xpose.msra.mxu0 0
        %1634 = vmatprep.subr.bf16.mxu0 0
        %1635 = vmatpush2.bf16.xpose.msra.mxu0 0
        %1636 = vmatprep.subr.bf16.mxu0 0
        %1637 = vmatpush2.bf16.xpose.msra.mxu0 0
        %1638 = vmatprep.subr.bf16.mxu0 0
        %1639 = vmatpush2.bf16.xpose.msra.mxu0 0
        %1640 = vmatprep.subr.bf16.mxu0 0
        %1641 = vmatpush2.bf16.xpose.msra.mxu0 0
        %1642 = vmatprep.subr.bf16.mxu0 0
        %1643 = vmatpush2.bf16.xpose.msra.mxu0 0
        %1644 = vmatprep.subr.bf16.mxu0 0
        %1645 = vmatpush2.bf16.xpose.msra.mxu0 0
        %1646 = vmatprep.mubr.bf16.mxu0 0
        %1647 = vmatmul.mubr.bf16.gmra.mxu0 %v1393
        %v1648 = vpop.f32.mrf.mxu0
        %v1649 = vadd.f32 %v1523, %v1648
        %v1650 = vpop.f32.mrf.mxu0
        %v1651 = vpop.f32.mrf.mxu0
        %v1652 = vpop.f32.mrf.mxu0
        %1653 = vdwg.mxu0
        %v1655 = vsel %vm1305, %v1287, 0
        %1657 = vmatprep.subr.bf16.mxu0 0
        %1658 = vmatpush1.bf16.xpose.msra.mxu0 0
        %1659 = vmatprep.subr.bf16.mxu0 0
        %1660 = vmatpush1.bf16.xpose.msra.mxu0 0
        %1661 = vmatprep.subr.bf16.mxu0 0
        %1662 = vmatpush1.bf16.xpose.msra.mxu0 0
        %1663 = vmatprep.subr.bf16.mxu0 0
        %1664 = vmatpush1.bf16.xpose.msra.mxu0 0
        %1665 = vmatprep.subr.bf16.mxu0 0
        %1666 = vmatpush1.bf16.xpose.msra.mxu0 0
        %1667 = vmatprep.subr.bf16.mxu0 0
        %1668 = vmatpush1.bf16.xpose.msra.mxu0 0
        %1669 = vmatprep.subr.bf16.mxu0 0
        %1670 = vmatpush1.bf16.xpose.msra.mxu0 0
        %1671 = vmatprep.subr.bf16.mxu0 0
        %1672 = vmatpush1.bf16.xpose.msra.mxu0 %v1655
        %1673 = vmatprep.subr.bf16.mxu0 0
        %1674 = vmatpush2.bf16.xpose.msra.mxu0 0
        %1675 = vmatprep.subr.bf16.mxu0 0
        %1676 = vmatpush2.bf16.xpose.msra.mxu0 0
        %1677 = vmatprep.subr.bf16.mxu0 0
        %1678 = vmatpush2.bf16.xpose.msra.mxu0 0
        %1679 = vmatprep.subr.bf16.mxu0 0
        %1680 = vmatpush2.bf16.xpose.msra.mxu0 0
        %1681 = vmatprep.subr.bf16.mxu0 0
        %1682 = vmatpush2.bf16.xpose.msra.mxu0 0
        %1683 = vmatprep.subr.bf16.mxu0 0
        %1684 = vmatpush2.bf16.xpose.msra.mxu0 0
        %1685 = vmatprep.subr.bf16.mxu0 0
        %1686 = vmatpush2.bf16.xpose.msra.mxu0 0
        %1687 = vmatprep.subr.bf16.mxu0 0
        %1688 = vmatpush2.bf16.xpose.msra.mxu0 0
        %1689 = vmatprep.mubr.bf16.mxu0 0
        %1690 = vmatmul.mubr.bf16.gmra.mxu0 %v1436
        %v1691 = vpop.f32.mrf.mxu0
        %v1692 = vadd.f32 %v1524, %v1691
        %v1693 = vpop.f32.mrf.mxu0
        %v1694 = vpop.f32.mrf.mxu0
        %v1695 = vpop.f32.mrf.mxu0
        %1696 = vdwg.mxu0
        %v1697 = vsel %vm1491, 1, 0
        %vm1698 = vcmp.eq.s32.totalorder %v1697, 1
        %1699 = vset.pattern.permute.xlu0 1
        %1700 = vperm.xlu0 %1699, %v1344
        %v1701 = vpop.permute.xlu0 %1700
        %1703 = vset.pattern.permute.xlu0 1
        %1704 = vperm.xlu0 %1703, %v1387
        %v1705 = vpop.permute.xlu0 %1704
        %1707 = vset.pattern.permute.xlu0 1
        %1708 = vperm.xlu0 %1707, %v1430
        %v1709 = vpop.permute.xlu0 %1708
        %1711 = vset.pattern.permute.xlu0 1
        %1712 = vperm.xlu0 %1711, %v1473
        %v1713 = vpop.permute.xlu0 %1712
        %v1715 = vsel %vm1698, %v1701, 0.0
        %v1716 = vsel %vm1698, %v1705, 0.0
        %v1717 = vsel %vm1698, %v1709, 0.0
        %v1718 = vsel %vm1698, %v1713, 0.0
        %v1719 = vadd.f32 %v1563, %v1715
        %v1720 = vadd.f32 %v1606, %v1716
        %v1721 = vadd.f32 %v1649, %v1717
        %v1722 = vadd.f32 %v1692, %v1718
        %v1723 = vsel %vm1492, 1, 0
        %vm1724 = vcmp.eq.s32.totalorder %v1723, 1
        %1725 = vset.pattern.permute.xlu0 2
        %1726 = vperm.xlu0 %1725, %v1344
        %v1727 = vpop.permute.xlu0 %1726
        %1729 = vset.pattern.permute.xlu0 2
        %1730 = vperm.xlu0 %1729, %v1387
        %v1731 = vpop.permute.xlu0 %1730
        %1733 = vset.pattern.permute.xlu0 2
        %1734 = vperm.xlu0 %1733, %v1430
        %v1735 = vpop.permute.xlu0 %1734
        %1737 = vset.pattern.permute.xlu0 2
        %1738 = vperm.xlu0 %1737, %v1473
        %v1739 = vpop.permute.xlu0 %1738
        %v1741 = vsel %vm1724, %v1727, 0.0
        %v1742 = vsel %vm1724, %v1731, 0.0
        %v1743 = vsel %vm1724, %v1735, 0.0
        %v1744 = vsel %vm1724, %v1739, 0.0
        %v1745 = vadd.f32 %v1719, %v1741
        %v1746 = vadd.f32 %v1720, %v1742
        %v1747 = vadd.f32 %v1721, %v1743
        %v1748 = vadd.f32 %v1722, %v1744
        %v1749 = vsel %vm1493, 1, 0
        %vm1750 = vcmp.eq.s32.totalorder %v1749, 1
        %1751 = vset.pattern.permute.xlu0 3
        %1752 = vperm.xlu0 %1751, %v1344
        %v1753 = vpop.permute.xlu0 %1752
        %1755 = vset.pattern.permute.xlu0 3
        %1756 = vperm.xlu0 %1755, %v1387
        %v1757 = vpop.permute.xlu0 %1756
        %1759 = vset.pattern.permute.xlu0 3
        %1760 = vperm.xlu0 %1759, %v1430
        %v1761 = vpop.permute.xlu0 %1760
        %1763 = vset.pattern.permute.xlu0 3
        %1764 = vperm.xlu0 %1763, %v1473
        %v1765 = vpop.permute.xlu0 %1764
        %v1767 = vsel %vm1750, %v1753, 0.0
        %v1768 = vsel %vm1750, %v1757, 0.0
        %v1769 = vsel %vm1750, %v1761, 0.0
        %v1770 = vsel %vm1750, %v1765, 0.0
        %v1771 = vadd.f32 %v1745, %v1767
        %v1772 = vadd.f32 %v1746, %v1768
        %v1773 = vadd.f32 %v1747, %v1769
        %v1774 = vadd.f32 %v1748, %v1770
        %v1775 = vsel %vm1494, 1, 0
        %vm1776 = vcmp.eq.s32.totalorder %v1775, 1
        %1777 = vset.pattern.permute.xlu0 4
        %1778 = vperm.xlu0 %1777, %v1344
        %v1779 = vpop.permute.xlu0 %1778
        %1781 = vset.pattern.permute.xlu0 4
        %1782 = vperm.xlu0 %1781, %v1387
        %v1783 = vpop.permute.xlu0 %1782
        %1785 = vset.pattern.permute.xlu0 4
        %1786 = vperm.xlu0 %1785, %v1430
        %v1787 = vpop.permute.xlu0 %1786
        %1789 = vset.pattern.permute.xlu0 4
        %1790 = vperm.xlu0 %1789, %v1473
        %v1791 = vpop.permute.xlu0 %1790
        %v1793 = vsel %vm1776, %v1779, 0.0
        %v1794 = vsel %vm1776, %v1783, 0.0
        %v1795 = vsel %vm1776, %v1787, 0.0
        %v1796 = vsel %vm1776, %v1791, 0.0
        %v1797 = vadd.f32 %v1771, %v1793
        %v1798 = vadd.f32 %v1772, %v1794
        %v1799 = vadd.f32 %v1773, %v1795
        %v1800 = vadd.f32 %v1774, %v1796
        %v1801 = vsel %vm1495, 1, 0
        %vm1802 = vcmp.eq.s32.totalorder %v1801, 1
        %1803 = vset.pattern.permute.xlu0 5
        %1804 = vperm.xlu0 %1803, %v1344
        %v1805 = vpop.permute.xlu0 %1804
        %1807 = vset.pattern.permute.xlu0 5
        %1808 = vperm.xlu0 %1807, %v1387
        %v1809 = vpop.permute.xlu0 %1808
        %1811 = vset.pattern.permute.xlu0 5
        %1812 = vperm.xlu0 %1811, %v1430
        %v1813 = vpop.permute.xlu0 %1812
        %1815 = vset.pattern.permute.xlu0 5
        %1816 = vperm.xlu0 %1815, %v1473
        %v1817 = vpop.permute.xlu0 %1816
        %v1819 = vsel %vm1802, %v1805, 0.0
        %v1820 = vsel %vm1802, %v1809, 0.0
        %v1821 = vsel %vm1802, %v1813, 0.0
        %v1822 = vsel %vm1802, %v1817, 0.0
        %v1823 = vadd.f32 %v1797, %v1819
        %v1824 = vadd.f32 %v1798, %v1820
        %v1825 = vadd.f32 %v1799, %v1821
        %v1826 = vadd.f32 %v1800, %v1822
        %v1827 = vsel %vm1496, 1, 0
        %vm1828 = vcmp.eq.s32.totalorder %v1827, 1
        %1829 = vset.pattern.permute.xlu0 6
        %1830 = vperm.xlu0 %1829, %v1344
        %v1831 = vpop.permute.xlu0 %1830
        %1833 = vset.pattern.permute.xlu0 6
        %1834 = vperm.xlu0 %1833, %v1387
        %v1835 = vpop.permute.xlu0 %1834
        %1837 = vset.pattern.permute.xlu0 6
        %1838 = vperm.xlu0 %1837, %v1430
        %v1839 = vpop.permute.xlu0 %1838
        %1841 = vset.pattern.permute.xlu0 6
        %1842 = vperm.xlu0 %1841, %v1473
        %v1843 = vpop.permute.xlu0 %1842
        %v1845 = vsel %vm1828, %v1831, 0.0
        %v1846 = vsel %vm1828, %v1835, 0.0
        %v1847 = vsel %vm1828, %v1839, 0.0
        %v1848 = vsel %vm1828, %v1843, 0.0
        %v1849 = vadd.f32 %v1823, %v1845
        %v1850 = vadd.f32 %v1824, %v1846
        %v1851 = vadd.f32 %v1825, %v1847
        %v1852 = vadd.f32 %v1826, %v1848
        %v1853 = vsel %vm1497, 1, 0
        %vm1854 = vcmp.eq.s32.totalorder %v1853, 1
        %1855 = vset.pattern.permute.xlu0 7
        %1856 = vperm.xlu0 %1855, %v1344
        %v1857 = vpop.permute.xlu0 %1856
        %1859 = vset.pattern.permute.xlu0 7
        %1860 = vperm.xlu0 %1859, %v1387
        %v1861 = vpop.permute.xlu0 %1860
        %1863 = vset.pattern.permute.xlu0 7
        %1864 = vperm.xlu0 %1863, %v1430
        %v1865 = vpop.permute.xlu0 %1864
        %1867 = vset.pattern.permute.xlu0 7
        %1868 = vperm.xlu0 %1867, %v1473
        %v1869 = vpop.permute.xlu0 %1868
        %v1871 = vsel %vm1854, %v1857, 0.0
        %v1872 = vsel %vm1854, %v1861, 0.0
        %v1873 = vsel %vm1854, %v1865, 0.0
        %v1874 = vsel %vm1854, %v1869, 0.0
        %v1875 = vadd.f32 %v1849, %v1871
        %v1876 = vadd.f32 %v1850, %v1872
        %v1877 = vadd.f32 %v1851, %v1873
        %v1878 = vadd.f32 %v1852, %v1874
        %v1879 = vsel %vm1498, 1, 0
        %vm1880 = vcmp.eq.s32.totalorder %v1879, 1
        %1881 = vset.pattern.permute.xlu0 8
        %1882 = vperm.xlu0 %1881, %v1344
        %v1883 = vpop.permute.xlu0 %1882
        %1885 = vset.pattern.permute.xlu0 8
        %1886 = vperm.xlu0 %1885, %v1387
        %v1887 = vpop.permute.xlu0 %1886
        %1889 = vset.pattern.permute.xlu0 8
        %1890 = vperm.xlu0 %1889, %v1430
        %v1891 = vpop.permute.xlu0 %1890
        %1893 = vset.pattern.permute.xlu0 8
        %1894 = vperm.xlu0 %1893, %v1473
        %v1895 = vpop.permute.xlu0 %1894
        %v1897 = vsel %vm1880, %v1883, 0.0
        %v1898 = vsel %vm1880, %v1887, 0.0
        %v1899 = vsel %vm1880, %v1891, 0.0
        %v1900 = vsel %vm1880, %v1895, 0.0
        %v1901 = vadd.f32 %v1875, %v1897
        %v1902 = vadd.f32 %v1876, %v1898
        %v1903 = vadd.f32 %v1877, %v1899
        %v1904 = vadd.f32 %v1878, %v1900
        %v1905 = vadd.f32 %v1901, %v1014
        %v1906 = vadd.f32 %v1902, %v1014
        %v1907 = vadd.f32 %v1903, %v1014
        %v1908 = vadd.f32 %v1904, %v1014
        %v1909 = vsel %vm1305, %v1905, -inf
        %1910 = vmax.xlane.f32.xlu0 %v1909
        %v1911 = vpop.xlane.xlu0 %1910
        %v1912 = vsel %vm1305, %v1906, -inf
        %1913 = vmax.xlane.f32.xlu0 %v1912
        %v1914 = vpop.xlane.xlu0 %1913
        %v1915 = vsel %vm1305, %v1907, -inf
        %1916 = vmax.xlane.f32.xlu0 %v1915
        %v1917 = vpop.xlane.xlu0 %1916
        %v1918 = vsel %vm1305, %v1908, -inf
        %1919 = vmax.xlane.f32.xlu0 %v1918
        %v1920 = vpop.xlane.xlu0 %1919
        %v1921 = vsub.f32 %v1905, %v1911
        %v1922 = vsub.f32 %v1906, %v1914
        %v1923 = vsub.f32 %v1907, %v1917
        %v1924 = vsub.f32 %v1908, %v1920
        %v1925 = vmul.f32 %v1921, 1.442695
        %v1926 = vpow.pop %v1925
        %v1927 = vmul.f32 %v1922, 1.442695
        %v1928 = vpow.pop %v1927
        %v1929 = vmul.f32 %v1923, 1.442695
        %v1930 = vpow.pop %v1929
        %v1931 = vmul.f32 %v1924, 1.442695
        %v1932 = vpow.pop %v1931
        %v1933 = vsel %vm1305, %v1926, 0.0
        %1934 = vadd.xlane.f32.xlu0 %v1933
        %v1935 = vpop.xlane.xlu0 %1934
        %v1936 = vsel %vm1305, %v1928, 0.0
        %1937 = vadd.xlane.f32.xlu0 %v1936
        %v1938 = vpop.xlane.xlu0 %1937
        %v1939 = vsel %vm1305, %v1930, 0.0
        %1940 = vadd.xlane.f32.xlu0 %v1939
        %v1941 = vpop.xlane.xlu0 %1940
        %v1942 = vsel %vm1305, %v1932, 0.0
        %1943 = vadd.xlane.f32.xlu0 %v1942
        %v1944 = vpop.xlane.xlu0 %1943
        %v1945 = vrcp.pop %v1935
        %v1946 = vrcp.pop %v1938
        %v1947 = vrcp.pop %v1941
        %v1948 = vrcp.pop %v1944
        %v1949 = vmul.f32 %v1926, %v1945
        %v1950 = vmul.f32 %v1928, %v1946
        %v1951 = vmul.f32 %v1930, %v1947
        %v1952 = vmul.f32 %v1932, %v1948
        %v1953 = vpack.c.bf16 %v1949, %v1949
        %v1954 = vpack.c.bf16 %v1950, %v1950
        %v1955 = vpack.c.bf16 %v1951, %v1951
        %v1956 = vpack.c.bf16 %v1952, %v1952
        %v1957 = vunpack.c.l.bf16 %v1054
        %v1958 = vunpack.c.l.bf16 %v1055
        %v1959 = vsel %vm1500, %v1949, 0.0
        %v1960 = vsel %vm1500, %v1950, 0.0
        %v1961 = vsel %vm1500, %v1951, 0.0
        %v1962 = vsel %vm1500, %v1952, 0.0
        %v1963 = vsel %vm1305, %v1959, 0.0
        %1964 = vadd.xlane.f32.xlu0 %v1963
        %v1965 = vpop.xlane.xlu0 %1964
        %v1966 = vsel %vm1305, %v1960, 0.0
        %1967 = vadd.xlane.f32.xlu0 %v1966
        %v1968 = vpop.xlane.xlu0 %1967
        %v1969 = vsel %vm1305, %v1961, 0.0
        %1970 = vadd.xlane.f32.xlu0 %v1969
        %v1971 = vpop.xlane.xlu0 %1970
        %v1972 = vsel %vm1305, %v1962, 0.0
        %1973 = vadd.xlane.f32.xlu0 %v1972
        %v1974 = vpop.xlane.xlu0 %1973
        %v1975 = vlaneseq
        %v1976 = vshrl.u32 %v1975, 7
        %v1977 = vsub.s32 0, %v1976
        %v1978 = vrot.slane %v1957, %v1977
        %v1979 = vmul.f32 %v1965, %v1978
        %v1980 = vmul.f32 %v1968, %v1978
        %v1981 = vmul.f32 %v1971, %v1978
        %v1982 = vmul.f32 %v1974, %v1978
        %v1984 = vsel %vm1305, %v1953, 0
        %1986 = vmatprep.subr.bf16.mxu0 0
        %1987 = vmatpush1.bf16.msra.mxu0 0
        %1988 = vmatprep.subr.bf16.mxu0 0
        %1989 = vmatpush1.bf16.msra.mxu0 0
        %1990 = vmatprep.subr.bf16.mxu0 0
        %1991 = vmatpush1.bf16.msra.mxu0 0
        %1992 = vmatprep.subr.bf16.mxu0 0
        %1993 = vmatpush1.bf16.msra.mxu0 0
        %1994 = vmatprep.subr.bf16.mxu0 0
        %1995 = vmatpush1.bf16.msra.mxu0 0
        %1996 = vmatprep.subr.bf16.mxu0 0
        %1997 = vmatpush1.bf16.msra.mxu0 0
        %1998 = vmatprep.subr.bf16.mxu0 0
        %1999 = vmatpush1.bf16.msra.mxu0 0
        %2000 = vmatprep.subr.bf16.mxu0 0
        %2001 = vmatpush1.bf16.msra.mxu0 %v1288
        %2002 = vmatprep.subr.bf16.mxu0 0
        %2003 = vmatpush2.bf16.msra.mxu0 0
        %2004 = vmatprep.subr.bf16.mxu0 0
        %2005 = vmatpush2.bf16.msra.mxu0 0
        %2006 = vmatprep.subr.bf16.mxu0 0
        %2007 = vmatpush2.bf16.msra.mxu0 0
        %2008 = vmatprep.subr.bf16.mxu0 0
        %2009 = vmatpush2.bf16.msra.mxu0 0
        %2010 = vmatprep.subr.bf16.mxu0 0
        %2011 = vmatpush2.bf16.msra.mxu0 0
        %2012 = vmatprep.subr.bf16.mxu0 0
        %2013 = vmatpush2.bf16.msra.mxu0 0
        %2014 = vmatprep.subr.bf16.mxu0 0
        %2015 = vmatpush2.bf16.msra.mxu0 0
        %2016 = vmatprep.subr.bf16.mxu0 0
        %2017 = vmatpush2.bf16.msra.mxu0 0
        %2018 = vmatprep.mubr.bf16.mxu0 0
        %2019 = vmatmul.mubr.bf16.gmra.mxu0 %v1984
        %v2020 = vpop.f32.mrf.mxu0
        %v2021 = vadd.f32 %v1979, %v2020
        %v2022 = vpop.f32.mrf.mxu0
        %v2023 = vpop.f32.mrf.mxu0
        %v2024 = vpop.f32.mrf.mxu0
        %2025 = vdwg.mxu0
        %v2027 = vsel %vm1305, %v1954, 0
        %2029 = vmatprep.subr.bf16.mxu0 0
        %2030 = vmatpush1.bf16.msra.mxu0 0
        %2031 = vmatprep.subr.bf16.mxu0 0
        %2032 = vmatpush1.bf16.msra.mxu0 0
        %2033 = vmatprep.subr.bf16.mxu0 0
        %2034 = vmatpush1.bf16.msra.mxu0 0
        %2035 = vmatprep.subr.bf16.mxu0 0
        %2036 = vmatpush1.bf16.msra.mxu0 0
        %2037 = vmatprep.subr.bf16.mxu0 0
        %2038 = vmatpush1.bf16.msra.mxu0 0
        %2039 = vmatprep.subr.bf16.mxu0 0
        %2040 = vmatpush1.bf16.msra.mxu0 0
        %2041 = vmatprep.subr.bf16.mxu0 0
        %2042 = vmatpush1.bf16.msra.mxu0 0
        %2043 = vmatprep.subr.bf16.mxu0 0
        %2044 = vmatpush1.bf16.msra.mxu0 %v1291
        %2045 = vmatprep.subr.bf16.mxu0 0
        %2046 = vmatpush2.bf16.msra.mxu0 0
        %2047 = vmatprep.subr.bf16.mxu0 0
        %2048 = vmatpush2.bf16.msra.mxu0 0
        %2049 = vmatprep.subr.bf16.mxu0 0
        %2050 = vmatpush2.bf16.msra.mxu0 0
        %2051 = vmatprep.subr.bf16.mxu0 0
        %2052 = vmatpush2.bf16.msra.mxu0 0
        %2053 = vmatprep.subr.bf16.mxu0 0
        %2054 = vmatpush2.bf16.msra.mxu0 0
        %2055 = vmatprep.subr.bf16.mxu0 0
        %2056 = vmatpush2.bf16.msra.mxu0 0
        %2057 = vmatprep.subr.bf16.mxu0 0
        %2058 = vmatpush2.bf16.msra.mxu0 0
        %2059 = vmatprep.subr.bf16.mxu0 0
        %2060 = vmatpush2.bf16.msra.mxu0 0
        %2061 = vmatprep.mubr.bf16.mxu0 0
        %2062 = vmatmul.mubr.bf16.gmra.mxu0 %v2027
        %v2063 = vpop.f32.mrf.mxu0
        %v2064 = vadd.f32 %v1980, %v2063
        %v2065 = vpop.f32.mrf.mxu0
        %v2066 = vpop.f32.mrf.mxu0
        %v2067 = vpop.f32.mrf.mxu0
        %2068 = vdwg.mxu0
        %v2070 = vsel %vm1305, %v1955, 0
        %2072 = vmatprep.subr.bf16.mxu0 0
        %2073 = vmatpush1.bf16.msra.mxu0 0
        %2074 = vmatprep.subr.bf16.mxu0 0
        %2075 = vmatpush1.bf16.msra.mxu0 0
        %2076 = vmatprep.subr.bf16.mxu0 0
        %2077 = vmatpush1.bf16.msra.mxu0 0
        %2078 = vmatprep.subr.bf16.mxu0 0
        %2079 = vmatpush1.bf16.msra.mxu0 0
        %2080 = vmatprep.subr.bf16.mxu0 0
        %2081 = vmatpush1.bf16.msra.mxu0 0
        %2082 = vmatprep.subr.bf16.mxu0 0
        %2083 = vmatpush1.bf16.msra.mxu0 0
        %2084 = vmatprep.subr.bf16.mxu0 0
        %2085 = vmatpush1.bf16.msra.mxu0 0
        %2086 = vmatprep.subr.bf16.mxu0 0
        %2087 = vmatpush1.bf16.msra.mxu0 %v1294
        %2088 = vmatprep.subr.bf16.mxu0 0
        %2089 = vmatpush2.bf16.msra.mxu0 0
        %2090 = vmatprep.subr.bf16.mxu0 0
        %2091 = vmatpush2.bf16.msra.mxu0 0
        %2092 = vmatprep.subr.bf16.mxu0 0
        %2093 = vmatpush2.bf16.msra.mxu0 0
        %2094 = vmatprep.subr.bf16.mxu0 0
        %2095 = vmatpush2.bf16.msra.mxu0 0
        %2096 = vmatprep.subr.bf16.mxu0 0
        %2097 = vmatpush2.bf16.msra.mxu0 0
        %2098 = vmatprep.subr.bf16.mxu0 0
        %2099 = vmatpush2.bf16.msra.mxu0 0
        %2100 = vmatprep.subr.bf16.mxu0 0
        %2101 = vmatpush2.bf16.msra.mxu0 0
        %2102 = vmatprep.subr.bf16.mxu0 0
        %2103 = vmatpush2.bf16.msra.mxu0 0
        %2104 = vmatprep.mubr.bf16.mxu0 0
        %2105 = vmatmul.mubr.bf16.gmra.mxu0 %v2070
        %v2106 = vpop.f32.mrf.mxu0
        %v2107 = vadd.f32 %v1981, %v2106
        %v2108 = vpop.f32.mrf.mxu0
        %v2109 = vpop.f32.mrf.mxu0
        %v2110 = vpop.f32.mrf.mxu0
        %2111 = vdwg.mxu0
        %v2113 = vsel %vm1305, %v1956, 0
        %2115 = vmatprep.subr.bf16.mxu0 0
        %2116 = vmatpush1.bf16.msra.mxu0 0
        %2117 = vmatprep.subr.bf16.mxu0 0
        %2118 = vmatpush1.bf16.msra.mxu0 0
        %2119 = vmatprep.subr.bf16.mxu0 0
        %2120 = vmatpush1.bf16.msra.mxu0 0
        %2121 = vmatprep.subr.bf16.mxu0 0
        %2122 = vmatpush1.bf16.msra.mxu0 0
        %2123 = vmatprep.subr.bf16.mxu0 0
        %2124 = vmatpush1.bf16.msra.mxu0 0
        %2125 = vmatprep.subr.bf16.mxu0 0
        %2126 = vmatpush1.bf16.msra.mxu0 0
        %2127 = vmatprep.subr.bf16.mxu0 0
        %2128 = vmatpush1.bf16.msra.mxu0 0
        %2129 = vmatprep.subr.bf16.mxu0 0
        %2130 = vmatpush1.bf16.msra.mxu0 %v1297
        %2131 = vmatprep.subr.bf16.mxu0 0
        %2132 = vmatpush2.bf16.msra.mxu0 0
        %2133 = vmatprep.subr.bf16.mxu0 0
        %2134 = vmatpush2.bf16.msra.mxu0 0
        %2135 = vmatprep.subr.bf16.mxu0 0
        %2136 = vmatpush2.bf16.msra.mxu0 0
        %2137 = vmatprep.subr.bf16.mxu0 0
        %2138 = vmatpush2.bf16.msra.mxu0 0
        %2139 = vmatprep.subr.bf16.mxu0 0
        %2140 = vmatpush2.bf16.msra.mxu0 0
        %2141 = vmatprep.subr.bf16.mxu0 0
        %2142 = vmatpush2.bf16.msra.mxu0 0
        %2143 = vmatprep.subr.bf16.mxu0 0
        %2144 = vmatpush2.bf16.msra.mxu0 0
        %2145 = vmatprep.subr.bf16.mxu0 0
        %2146 = vmatpush2.bf16.msra.mxu0 0
        %2147 = vmatprep.mubr.bf16.mxu0 0
        %2148 = vmatmul.mubr.bf16.gmra.mxu0 %v2113
        %v2149 = vpop.f32.mrf.mxu0
        %v2150 = vadd.f32 %v1982, %v2149
        %v2151 = vpop.f32.mrf.mxu0
        %v2152 = vpop.f32.mrf.mxu0
        %v2153 = vpop.f32.mrf.mxu0
        %2154 = vdwg.mxu0
        %v2155 = vsel %vm1698, %v1949, 0.0
        %v2156 = vsel %vm1698, %v1950, 0.0
        %v2157 = vsel %vm1698, %v1951, 0.0
        %v2158 = vsel %vm1698, %v1952, 0.0
        %v2159 = vsel %vm1305, %v2155, 0.0
        %2160 = vadd.xlane.f32.xlu0 %v2159
        %v2161 = vpop.xlane.xlu0 %2160
        %v2162 = vsel %vm1305, %v2156, 0.0
        %2163 = vadd.xlane.f32.xlu0 %v2162
        %v2164 = vpop.xlane.xlu0 %2163
        %v2165 = vsel %vm1305, %v2157, 0.0
        %2166 = vadd.xlane.f32.xlu0 %v2165
        %v2167 = vpop.xlane.xlu0 %2166
        %v2168 = vsel %vm1305, %v2158, 0.0
        %2169 = vadd.xlane.f32.xlu0 %v2168
        %v2170 = vpop.xlane.xlu0 %2169
        %v2171 = vlaneseq
        %v2172 = vshrl.u32 %v2171, 7
        %v2173 = vsub.s32 1, %v2172
        %v2174 = vrot.slane %v1957, %v2173
        %v2175 = vmul.f32 %v2161, %v2174
        %v2176 = vmul.f32 %v2164, %v2174
        %v2177 = vmul.f32 %v2167, %v2174
        %v2178 = vmul.f32 %v2170, %v2174
        %v2179 = vadd.f32 %v2021, %v2175
        %v2180 = vadd.f32 %v2064, %v2176
        %v2181 = vadd.f32 %v2107, %v2177
        %v2182 = vadd.f32 %v2150, %v2178
        %v2183 = vsel %vm1724, %v1949, 0.0
        %v2184 = vsel %vm1724, %v1950, 0.0
        %v2185 = vsel %vm1724, %v1951, 0.0
        %v2186 = vsel %vm1724, %v1952, 0.0
        %v2187 = vsel %vm1305, %v2183, 0.0
        %2188 = vadd.xlane.f32.xlu0 %v2187
        %v2189 = vpop.xlane.xlu0 %2188
        %v2190 = vsel %vm1305, %v2184, 0.0
        %2191 = vadd.xlane.f32.xlu0 %v2190
        %v2192 = vpop.xlane.xlu0 %2191
        %v2193 = vsel %vm1305, %v2185, 0.0
        %2194 = vadd.xlane.f32.xlu0 %v2193
        %v2195 = vpop.xlane.xlu0 %2194
        %v2196 = vsel %vm1305, %v2186, 0.0
        %2197 = vadd.xlane.f32.xlu0 %v2196
        %v2198 = vpop.xlane.xlu0 %2197
        %v2199 = vlaneseq
        %v2200 = vshrl.u32 %v2199, 7
        %v2201 = vsub.s32 2, %v2200
        %v2202 = vrot.slane %v1957, %v2201
        %v2203 = vmul.f32 %v2189, %v2202
        %v2204 = vmul.f32 %v2192, %v2202
        %v2205 = vmul.f32 %v2195, %v2202
        %v2206 = vmul.f32 %v2198, %v2202
        %v2207 = vadd.f32 %v2179, %v2203
        %v2208 = vadd.f32 %v2180, %v2204
        %v2209 = vadd.f32 %v2181, %v2205
        %v2210 = vadd.f32 %v2182, %v2206
        %v2211 = vsel %vm1750, %v1949, 0.0
        %v2212 = vsel %vm1750, %v1950, 0.0
        %v2213 = vsel %vm1750, %v1951, 0.0
        %v2214 = vsel %vm1750, %v1952, 0.0
        %v2215 = vsel %vm1305, %v2211, 0.0
        %2216 = vadd.xlane.f32.xlu0 %v2215
        %v2217 = vpop.xlane.xlu0 %2216
        %v2218 = vsel %vm1305, %v2212, 0.0
        %2219 = vadd.xlane.f32.xlu0 %v2218
        %v2220 = vpop.xlane.xlu0 %2219
        %v2221 = vsel %vm1305, %v2213, 0.0
        %2222 = vadd.xlane.f32.xlu0 %v2221
        %v2223 = vpop.xlane.xlu0 %2222
        %v2224 = vsel %vm1305, %v2214, 0.0
        %2225 = vadd.xlane.f32.xlu0 %v2224
        %v2226 = vpop.xlane.xlu0 %2225
        %v2227 = vlaneseq
        %v2228 = vshrl.u32 %v2227, 7
        %v2229 = vsub.s32 3, %v2228
        %v2230 = vrot.slane %v1957, %v2229
        %v2231 = vmul.f32 %v2217, %v2230
        %v2232 = vmul.f32 %v2220, %v2230
        %v2233 = vmul.f32 %v2223, %v2230
        %v2234 = vmul.f32 %v2226, %v2230
        %v2235 = vadd.f32 %v2207, %v2231
        %v2236 = vadd.f32 %v2208, %v2232
        %v2237 = vadd.f32 %v2209, %v2233
        %v2238 = vadd.f32 %v2210, %v2234
        %v2239 = vsel %vm1776, %v1949, 0.0
        %v2240 = vsel %vm1776, %v1950, 0.0
        %v2241 = vsel %vm1776, %v1951, 0.0
        %v2242 = vsel %vm1776, %v1952, 0.0
        %v2243 = vsel %vm1305, %v2239, 0.0
        %2244 = vadd.xlane.f32.xlu0 %v2243
        %v2245 = vpop.xlane.xlu0 %2244
        %v2246 = vsel %vm1305, %v2240, 0.0
        %2247 = vadd.xlane.f32.xlu0 %v2246
        %v2248 = vpop.xlane.xlu0 %2247
        %v2249 = vsel %vm1305, %v2241, 0.0
        %2250 = vadd.xlane.f32.xlu0 %v2249
        %v2251 = vpop.xlane.xlu0 %2250
        %v2252 = vsel %vm1305, %v2242, 0.0
        %2253 = vadd.xlane.f32.xlu0 %v2252
        %v2254 = vpop.xlane.xlu0 %2253
        %v2255 = vlaneseq
        %v2256 = vshrl.u32 %v2255, 7
        %v2257 = vsub.s32 4, %v2256
        %v2258 = vrot.slane %v1957, %v2257
        %v2259 = vmul.f32 %v2245, %v2258
        %v2260 = vmul.f32 %v2248, %v2258
        %v2261 = vmul.f32 %v2251, %v2258
        %v2262 = vmul.f32 %v2254, %v2258
        %v2263 = vadd.f32 %v2235, %v2259
        %v2264 = vadd.f32 %v2236, %v2260
        %v2265 = vadd.f32 %v2237, %v2261
        %v2266 = vadd.f32 %v2238, %v2262
        %v2267 = vsel %vm1802, %v1949, 0.0
        %v2268 = vsel %vm1802, %v1950, 0.0
        %v2269 = vsel %vm1802, %v1951, 0.0
        %v2270 = vsel %vm1802, %v1952, 0.0
        %v2271 = vsel %vm1305, %v2267, 0.0
        %2272 = vadd.xlane.f32.xlu0 %v2271
        %v2273 = vpop.xlane.xlu0 %2272
        %v2274 = vsel %vm1305, %v2268, 0.0
        %2275 = vadd.xlane.f32.xlu0 %v2274
        %v2276 = vpop.xlane.xlu0 %2275
        %v2277 = vsel %vm1305, %v2269, 0.0
        %2278 = vadd.xlane.f32.xlu0 %v2277
        %v2279 = vpop.xlane.xlu0 %2278
        %v2280 = vsel %vm1305, %v2270, 0.0
        %2281 = vadd.xlane.f32.xlu0 %v2280
        %v2282 = vpop.xlane.xlu0 %2281
        %v2283 = vlaneseq
        %v2284 = vshrl.u32 %v2283, 7
        %v2285 = vsub.s32 5, %v2284
        %v2286 = vrot.slane %v1957, %v2285
        %v2287 = vmul.f32 %v2273, %v2286
        %v2288 = vmul.f32 %v2276, %v2286
        %v2289 = vmul.f32 %v2279, %v2286
        %v2290 = vmul.f32 %v2282, %v2286
        %v2291 = vadd.f32 %v2263, %v2287
        %v2292 = vadd.f32 %v2264, %v2288
        %v2293 = vadd.f32 %v2265, %v2289
        %v2294 = vadd.f32 %v2266, %v2290
        %v2295 = vsel %vm1828, %v1949, 0.0
        %v2296 = vsel %vm1828, %v1950, 0.0
        %v2297 = vsel %vm1828, %v1951, 0.0
        %v2298 = vsel %vm1828, %v1952, 0.0
        %v2299 = vsel %vm1305, %v2295, 0.0
        %2300 = vadd.xlane.f32.xlu0 %v2299
        %v2301 = vpop.xlane.xlu0 %2300
        %v2302 = vsel %vm1305, %v2296, 0.0
        %2303 = vadd.xlane.f32.xlu0 %v2302
        %v2304 = vpop.xlane.xlu0 %2303
        %v2305 = vsel %vm1305, %v2297, 0.0
        %2306 = vadd.xlane.f32.xlu0 %v2305
        %v2307 = vpop.xlane.xlu0 %2306
        %v2308 = vsel %vm1305, %v2298, 0.0
        %2309 = vadd.xlane.f32.xlu0 %v2308
        %v2310 = vpop.xlane.xlu0 %2309
        %v2311 = vlaneseq
        %v2312 = vshrl.u32 %v2311, 7
        %v2313 = vsub.s32 6, %v2312
        %v2314 = vrot.slane %v1957, %v2313
        %v2315 = vmul.f32 %v2301, %v2314
        %v2316 = vmul.f32 %v2304, %v2314
        %v2317 = vmul.f32 %v2307, %v2314
        %v2318 = vmul.f32 %v2310, %v2314
        %v2319 = vadd.f32 %v2291, %v2315
        %v2320 = vadd.f32 %v2292, %v2316
        %v2321 = vadd.f32 %v2293, %v2317
        %v2322 = vadd.f32 %v2294, %v2318
        %v2323 = vsel %vm1854, %v1949, 0.0
        %v2324 = vsel %vm1854, %v1950, 0.0
        %v2325 = vsel %vm1854, %v1951, 0.0
        %v2326 = vsel %vm1854, %v1952, 0.0
        %v2327 = vsel %vm1305, %v2323, 0.0
        %2328 = vadd.xlane.f32.xlu0 %v2327
        %v2329 = vpop.xlane.xlu0 %2328
        %v2330 = vsel %vm1305, %v2324, 0.0
        %2331 = vadd.xlane.f32.xlu0 %v2330
        %v2332 = vpop.xlane.xlu0 %2331
        %v2333 = vsel %vm1305, %v2325, 0.0
        %2334 = vadd.xlane.f32.xlu0 %v2333
        %v2335 = vpop.xlane.xlu0 %2334
        %v2336 = vsel %vm1305, %v2326, 0.0
        %2337 = vadd.xlane.f32.xlu0 %v2336
        %v2338 = vpop.xlane.xlu0 %2337
        %v2339 = vlaneseq
        %v2340 = vshrl.u32 %v2339, 7
        %v2341 = vsub.s32 7, %v2340
        %v2342 = vrot.slane %v1957, %v2341
        %v2343 = vmul.f32 %v2329, %v2342
        %v2344 = vmul.f32 %v2332, %v2342
        %v2345 = vmul.f32 %v2335, %v2342
        %v2346 = vmul.f32 %v2338, %v2342
        %v2347 = vadd.f32 %v2319, %v2343
        %v2348 = vadd.f32 %v2320, %v2344
        %v2349 = vadd.f32 %v2321, %v2345
        %v2350 = vadd.f32 %v2322, %v2346
        %v2351 = vsel %vm1880, %v1949, 0.0
        %v2352 = vsel %vm1880, %v1950, 0.0
        %v2353 = vsel %vm1880, %v1951, 0.0
        %v2354 = vsel %vm1880, %v1952, 0.0
        %v2355 = vsel %vm1305, %v2351, 0.0
        %2356 = vadd.xlane.f32.xlu0 %v2355
        %v2357 = vpop.xlane.xlu0 %2356
        %v2358 = vsel %vm1305, %v2352, 0.0
        %2359 = vadd.xlane.f32.xlu0 %v2358
        %v2360 = vpop.xlane.xlu0 %2359
        %v2361 = vsel %vm1305, %v2353, 0.0
        %2362 = vadd.xlane.f32.xlu0 %v2361
        %v2363 = vpop.xlane.xlu0 %2362
        %v2364 = vsel %vm1305, %v2354, 0.0
        %2365 = vadd.xlane.f32.xlu0 %v2364
        %v2366 = vpop.xlane.xlu0 %2365
        %v2367 = vlaneseq
        %v2368 = vshrl.u32 %v2367, 7
        %v2369 = vsub.s32 0, %v2368
        %v2370 = vrot.slane %v1958, %v2369
        %v2371 = vmul.f32 %v2357, %v2370
        %v2372 = vmul.f32 %v2360, %v2370
        %v2373 = vmul.f32 %v2363, %v2370
        %v2374 = vmul.f32 %v2366, %v2370
        %v2375 = vadd.f32 %v2347, %v2371
        %v2376 = vadd.f32 %v2348, %v2372
        %v2377 = vadd.f32 %v2349, %v2373
        %v2378 = vadd.f32 %v2350, %v2374
        %2380 = vrot.lane.b32.xlu0 %v2376, 16
        %v2381 = vpop.permute.xlu0 %2380
        %2384 = vrot.lane.b32.xlu0 %v2377, 32
        %v2385 = vpop.permute.xlu0 %2384
        %2388 = vrot.lane.b32.xlu0 %v2378, 48
        %v2389 = vpop.permute.xlu0 %2388
        %v2391 = vsel %vm1305, %v2375, %v2381
        %vm2392 = vcmask 261120
        %v2393 = vsel %vm2392, %v2391, %v2385
        %vm2394 = vcmask 392192
        %v2395 = vsel %vm2394, %v2393, %v2389
        %v2396 = vpack.c.bf16 %v2395, %v2395
        %v2397 = vlaneseq
        %v2398 = vshrl.u32 %v2397, 7
        %v2399 = vsub.s32 3, %v2398
        %v2400 = vrot.slane %v1018, %v2399
        %v2409 = vunpack.c.l.b16 %v1044
        %v2410 = vunpack.c.l.b16 %v1045
        %v2411 = vunpack.c.l.b16 %v1046
        %v2412 = vunpack.c.l.b16 %v1047
        %v2413 = vunpack.c.l.b16 %v1048
        %v2414 = vunpack.c.l.b16 %v1049
        %v2415 = vunpack.c.l.b16 %v1050
        %v2416 = vunpack.c.l.b16 %v1051
        %v2417 = vpack.c.b16 %v2410, %v2409
        %v2418 = vpack.c.b16 %v2412, %v2411
        %v2419 = vpack.c.b16 %v2414, %v2413
        %v2420 = vpack.c.b16 %v2416, %v2415
        %v2426 = vsel %vm1085, %v2396, 0
        %2428 = vmatprep.subr.bf16.mxu0 0
        %2429 = vmatpush1.bf16.msra.mxu0 0
        %2430 = vmatprep.subr.bf16.mxu0 0
        %2431 = vmatpush1.bf16.msra.mxu0 0
        %2432 = vmatprep.subr.bf16.mxu0 0
        %2433 = vmatpush1.bf16.msra.mxu0 0
        %2434 = vmatprep.subr.bf16.mxu0 0
        %2435 = vmatpush1.bf16.msra.mxu0 0
        %2436 = vmatprep.subr.bf16.mxu0 0
        %2437 = vmatpush1.bf16.msra.mxu0 %v2420
        %2438 = vmatprep.subr.bf16.mxu0 0
        %2439 = vmatpush1.bf16.msra.mxu0 %v2419
        %2440 = vmatprep.subr.bf16.mxu0 0
        %2441 = vmatpush1.bf16.msra.mxu0 %v2418
        %2442 = vmatprep.subr.bf16.mxu0 0
        %2443 = vmatpush1.bf16.msra.mxu0 %v2417
        %2444 = vmatprep.subr.bf16.mxu0 0
        %2445 = vmatpush2.bf16.msra.mxu0 0
        %2446 = vmatprep.subr.bf16.mxu0 0
        %2447 = vmatpush2.bf16.msra.mxu0 0
        %2448 = vmatprep.subr.bf16.mxu0 0
        %2449 = vmatpush2.bf16.msra.mxu0 0
        %2450 = vmatprep.subr.bf16.mxu0 0
        %2451 = vmatpush2.bf16.msra.mxu0 0
        %2452 = vmatprep.subr.bf16.mxu0 0
        %2453 = vmatpush2.bf16.msra.mxu0 0
        %2454 = vmatprep.subr.bf16.mxu0 0
        %2455 = vmatpush2.bf16.msra.mxu0 0
        %2456 = vmatprep.subr.bf16.mxu0 0
        %2457 = vmatpush2.bf16.msra.mxu0 0
        %2458 = vmatprep.subr.bf16.mxu0 0
        %2459 = vmatpush2.bf16.msra.mxu0 0
        %2460 = vmatprep.mubr.bf16.mxu0 0
        %2461 = vmatmul.mubr.bf16.gmra.mxu0 %v2426
        %v2462 = vpop.f32.mrf.mxu0
        %v2463 = vadd.f32 %v2400, %v2462
        %v2464 = vpop.f32.mrf.mxu0
        %v2465 = vpop.f32.mrf.mxu0
        %v2466 = vpop.f32.mrf.mxu0
        %2467 = vdwg.mxu0
        %v2468 = vadd.f32 %v1007, %v2463
        %v2469 = vsel %vm1085, %v2468, 0.0
        %2470 = vadd.xlane.f32.xlu0 %v2469
        %v2471 = vpop.xlane.xlu0 %2470
        %v2472 = vrcp.pop 64.0
        %v2473 = vmul.f32 %v2471, %v2472
        %v2474 = vsub.f32 %v2468, %v2473
        %v2475 = vmul.f32 %v2474, %v2474
        %v2476 = vsel %vm1085, %v2475, 0.0
        %2477 = vadd.xlane.f32.xlu0 %v2476
        %v2478 = vpop.xlane.xlu0 %2477
        %v2479 = vmul.f32 %v2478, %v2472
        %v2480 = vadd.f32 %v2479, 1e-05
        %v2481 = vrsqrt.pop %v2480
        %v2482 = vmul.f32 %v2474, %v2481
        %v2483 = vlaneseq
        %v2484 = vshrl.u32 %v2483, 7
        %v2485 = vsub.s32 1, %v2484
        %v2486 = vrot.slane %v1019, %v2485
        %v2487 = vmul.f32 %v2482, %v2486
        %v2488 = vlaneseq
        %v2489 = vshrl.u32 %v2488, 7
        %v2490 = vsub.s32 2, %v2489
        %v2491 = vrot.slane %v1019, %v2490
        %v2492 = vadd.f32 %v2487, %v2491
        %v2493 = vld [vmem:[#allocation19] sm:$0xf]
        %v2494 = vld [vmem:[#allocation19 + $0x4] sm:$0xf]
        %v2495 = vld [vmem:[#allocation19 + $0x8] sm:$0xf]
        %v2496 = vld [vmem:[#allocation19 + $0xc] sm:$0xf]
        %v2497 = vld [vmem:[#allocation19 + $0x10] sm:$0xf]
        %v2498 = vld [vmem:[#allocation19 + $0x14] sm:$0xf]
        %v2499 = vld [vmem:[#allocation19 + $0x18] sm:$0xf]
        %v2500 = vld [vmem:[#allocation19 + $0x1c] sm:$0xf]
        %v2501 = vld [vmem:[#allocation20] sm:$0xf]
        %v2502 = vld [vmem:[#allocation20 + $0x4] sm:$0xf]
        %v2503 = vld [vmem:[#allocation20 + $0x8] sm:$0xf]
        %v2504 = vld [vmem:[#allocation20 + $0xc] sm:$0xf]
        %v2505 = vld [vmem:[#allocation20 + $0x10] sm:$0xf]
        %v2506 = vld [vmem:[#allocation20 + $0x14] sm:$0xf]
        %v2507 = vld [vmem:[#allocation20 + $0x18] sm:$0xf]
        %v2508 = vld [vmem:[#allocation20 + $0x1c] sm:$0xf]
        %v2509 = vld [vmem:[#allocation22] sm:$0xf]
        %v2510 = vld [vmem:[#allocation22 + $0x4] sm:$0xf]
        %v2511 = vld [vmem:[#allocation22 + $0x8] sm:$0xf]
        %v2512 = vld [vmem:[#allocation22 + $0xc] sm:$0xf]
        %v2513 = vld [vmem:[#allocation22 + $0x10] sm:$0xf]
        %v2514 = vld [vmem:[#allocation22 + $0x14] sm:$0xf]
        %v2515 = vld [vmem:[#allocation22 + $0x18] sm:$0xf]
        %v2516 = vld [vmem:[#allocation22 + $0x1c] sm:$0xf]
        %v2517 = vld [vmem:[#allocation23] sm:$0xf]
        %v2518 = vld [vmem:[#allocation23 + $0x4] sm:$0xf]
        %v2519 = vld [vmem:[#allocation23 + $0x8] sm:$0xf]
        %v2520 = vld [vmem:[#allocation23 + $0xc] sm:$0xf]
        %v2521 = vld [vmem:[#allocation23 + $0x10] sm:$0xf]
        %v2522 = vld [vmem:[#allocation23 + $0x14] sm:$0xf]
        %v2523 = vld [vmem:[#allocation23 + $0x18] sm:$0xf]
        %v2524 = vld [vmem:[#allocation23 + $0x1c] sm:$0xf]
        %v2525 = vld [vmem:[#allocation10] sm:$0xf]
        %v2526 = vld [vmem:[#allocation10 + $0x4] sm:$0xf]
        %v2527 = vld [vmem:[#allocation11] sm:$0xf]
        %v2528 = vld [vmem:[#allocation11 + $0x4] sm:$0x1]
        %v2529 = vpack.c.bf16 %v2492, %v2492
        %v2530 = vlaneseq
        %v2531 = vshrl.u32 %v2530, 7
        %v2532 = vsub.s32 4, %v2531
        %v2533 = vrot.slane %v1018, %v2532
        %v2542 = vunpack.c.l.b16 %v2493
        %v2543 = vunpack.c.l.b16 %v2494
        %v2544 = vunpack.c.l.b16 %v2495
        %v2545 = vunpack.c.l.b16 %v2496
        %v2546 = vunpack.c.l.b16 %v2497
        %v2547 = vunpack.c.l.b16 %v2498
        %v2548 = vunpack.c.l.b16 %v2499
        %v2549 = vunpack.c.l.b16 %v2500
        %v2550 = vpack.c.b16 %v2543, %v2542
        %v2551 = vpack.c.b16 %v2545, %v2544
        %v2552 = vpack.c.b16 %v2547, %v2546
        %v2553 = vpack.c.b16 %v2549, %v2548
        %v2559 = vsel %vm1085, %v2529, 0
        %2561 = vmatprep.subr.bf16.mxu0 0
        %2562 = vmatpush1.bf16.msra.mxu0 0
        %2563 = vmatprep.subr.bf16.mxu0 0
        %2564 = vmatpush1.bf16.msra.mxu0 0
        %2565 = vmatprep.subr.bf16.mxu0 0
        %2566 = vmatpush1.bf16.msra.mxu0 0
        %2567 = vmatprep.subr.bf16.mxu0 0
        %2568 = vmatpush1.bf16.msra.mxu0 0
        %2569 = vmatprep.subr.bf16.mxu0 0
        %2570 = vmatpush1.bf16.msra.mxu0 %v2553
        %2571 = vmatprep.subr.bf16.mxu0 0
        %2572 = vmatpush1.bf16.msra.mxu0 %v2552
        %2573 = vmatprep.subr.bf16.mxu0 0
        %2574 = vmatpush1.bf16.msra.mxu0 %v2551
        %2575 = vmatprep.subr.bf16.mxu0 0
        %2576 = vmatpush1.bf16.msra.mxu0 %v2550
        %2577 = vmatprep.subr.bf16.mxu0 0
        %2578 = vmatpush2.bf16.msra.mxu0 0
        %2579 = vmatprep.subr.bf16.mxu0 0
        %2580 = vmatpush2.bf16.msra.mxu0 0
        %2581 = vmatprep.subr.bf16.mxu0 0
        %2582 = vmatpush2.bf16.msra.mxu0 0
        %2583 = vmatprep.subr.bf16.mxu0 0
        %2584 = vmatpush2.bf16.msra.mxu0 0
        %2585 = vmatprep.subr.bf16.mxu0 0
        %2586 = vmatpush2.bf16.msra.mxu0 0
        %2587 = vmatprep.subr.bf16.mxu0 0
        %2588 = vmatpush2.bf16.msra.mxu0 0
        %2589 = vmatprep.subr.bf16.mxu0 0
        %2590 = vmatpush2.bf16.msra.mxu0 0
        %2591 = vmatprep.subr.bf16.mxu0 0
        %2592 = vmatpush2.bf16.msra.mxu0 0
        %2593 = vmatprep.mubr.bf16.mxu0 0
        %2594 = vmatmul.mubr.bf16.gmra.mxu0 %v2559
        %v2595 = vpop.f32.mrf.mxu0
        %v2596 = vadd.f32 %v2533, %v2595
        %v2597 = vpop.f32.mrf.mxu0
        %v2598 = vpop.f32.mrf.mxu0
        %v2599 = vpop.f32.mrf.mxu0
        %2600 = vdwg.mxu0
        %v2601 = vpack.c.bf16 %v1011, %v1010
        %v2602 = vlaneseq
        %v2603 = vshrl.u32 %v2602, 7
        %v2604 = vsub.s32 5, %v2603
        %v2605 = vrot.slane %v1018, %v2604
        %v2614 = vunpack.c.l.b16 %v2501
        %v2615 = vunpack.c.l.b16 %v2502
        %v2616 = vunpack.c.l.b16 %v2503
        %v2617 = vunpack.c.l.b16 %v2504
        %v2618 = vunpack.c.l.b16 %v2505
        %v2619 = vunpack.c.l.b16 %v2506
        %v2620 = vunpack.c.l.b16 %v2507
        %v2621 = vunpack.c.l.b16 %v2508
        %v2622 = vpack.c.b16 %v2615, %v2614
        %v2623 = vpack.c.b16 %v2617, %v2616
        %v2624 = vpack.c.b16 %v2619, %v2618
        %v2625 = vpack.c.b16 %v2621, %v2620
        %v2631 = vsel %vm1085, %v2601, 0
        %2633 = vmatprep.subr.bf16.mxu0 0
        %2634 = vmatpush1.bf16.msra.mxu0 0
        %2635 = vmatprep.subr.bf16.mxu0 0
        %2636 = vmatpush1.bf16.msra.mxu0 0
        %2637 = vmatprep.subr.bf16.mxu0 0
        %2638 = vmatpush1.bf16.msra.mxu0 0
        %2639 = vmatprep.subr.bf16.mxu0 0
        %2640 = vmatpush1.bf16.msra.mxu0 0
        %2641 = vmatprep.subr.bf16.mxu0 0
        %2642 = vmatpush1.bf16.msra.mxu0 %v2625
        %2643 = vmatprep.subr.bf16.mxu0 0
        %2644 = vmatpush1.bf16.msra.mxu0 %v2624
        %2645 = vmatprep.subr.bf16.mxu0 0
        %2646 = vmatpush1.bf16.msra.mxu0 %v2623
        %2647 = vmatprep.subr.bf16.mxu0 0
        %2648 = vmatpush1.bf16.msra.mxu0 %v2622
        %2649 = vmatprep.subr.bf16.mxu0 0
        %2650 = vmatpush2.bf16.msra.mxu0 0
        %2651 = vmatprep.subr.bf16.mxu0 0
        %2652 = vmatpush2.bf16.msra.mxu0 0
        %2653 = vmatprep.subr.bf16.mxu0 0
        %2654 = vmatpush2.bf16.msra.mxu0 0
        %2655 = vmatprep.subr.bf16.mxu0 0
        %2656 = vmatpush2.bf16.msra.mxu0 0
        %2657 = vmatprep.subr.bf16.mxu0 0
        %2658 = vmatpush2.bf16.msra.mxu0 0
        %2659 = vmatprep.subr.bf16.mxu0 0
        %2660 = vmatpush2.bf16.msra.mxu0 0
        %2661 = vmatprep.subr.bf16.mxu0 0
        %2662 = vmatpush2.bf16.msra.mxu0 0
        %2663 = vmatprep.subr.bf16.mxu0 0
        %2664 = vmatpush2.bf16.msra.mxu0 0
        %2665 = vmatprep.mubr.bf16.mxu0 0
        %2666 = vmatmul.mubr.bf16.gmra.mxu0 %v2631
        %v2667 = vpop.f32.mrf.mxu0
        %v2668 = vadd.f32 %v2605, %v2667
        %v2669 = vpop.f32.mrf.mxu0
        %v2670 = vpop.f32.mrf.mxu0
        %v2671 = vadd.f32 %v2605, %v2670
        %v2672 = vpop.f32.mrf.mxu0
        %2673 = vdwg.mxu0
        %v2674 = vlaneseq
        %v2675 = vshrl.u32 %v2674, 7
        %v2676 = vsub.s32 6, %v2675
        %v2677 = vrot.slane %v1018, %v2676
        %v2686 = vunpack.c.l.b16 %v2509
        %v2687 = vunpack.c.l.b16 %v2510
        %v2688 = vunpack.c.l.b16 %v2511
        %v2689 = vunpack.c.l.b16 %v2512
        %v2690 = vunpack.c.l.b16 %v2513
        %v2691 = vunpack.c.l.b16 %v2514
        %v2692 = vunpack.c.l.b16 %v2515
        %v2693 = vunpack.c.l.b16 %v2516
        %v2694 = vpack.c.b16 %v2687, %v2686
        %v2695 = vpack.c.b16 %v2689, %v2688
        %v2696 = vpack.c.b16 %v2691, %v2690
        %v2697 = vpack.c.b16 %v2693, %v2692
        %2702 = vmatprep.subr.bf16.mxu0 0
        %2703 = vmatpush1.bf16.msra.mxu0 0
        %2704 = vmatprep.subr.bf16.mxu0 0
        %2705 = vmatpush1.bf16.msra.mxu0 0
        %2706 = vmatprep.subr.bf16.mxu0 0
        %2707 = vmatpush1.bf16.msra.mxu0 0
        %2708 = vmatprep.subr.bf16.mxu0 0
        %2709 = vmatpush1.bf16.msra.mxu0 0
        %2710 = vmatprep.subr.bf16.mxu0 0
        %2711 = vmatpush1.bf16.msra.mxu0 %v2697
        %2712 = vmatprep.subr.bf16.mxu0 0
        %2713 = vmatpush1.bf16.msra.mxu0 %v2696
        %2714 = vmatprep.subr.bf16.mxu0 0
        %2715 = vmatpush1.bf16.msra.mxu0 %v2695
        %2716 = vmatprep.subr.bf16.mxu0 0
        %2717 = vmatpush1.bf16.msra.mxu0 %v2694
        %2718 = vmatprep.subr.bf16.mxu0 0
        %2719 = vmatpush2.bf16.msra.mxu0 0
        %2720 = vmatprep.subr.bf16.mxu0 0
        %2721 = vmatpush2.bf16.msra.mxu0 0
        %2722 = vmatprep.subr.bf16.mxu0 0
        %2723 = vmatpush2.bf16.msra.mxu0 0
        %2724 = vmatprep.subr.bf16.mxu0 0
        %2725 = vmatpush2.bf16.msra.mxu0 0
        %2726 = vmatprep.subr.bf16.mxu0 0
        %2727 = vmatpush2.bf16.msra.mxu0 0
        %2728 = vmatprep.subr.bf16.mxu0 0
        %2729 = vmatpush2.bf16.msra.mxu0 0
        %2730 = vmatprep.subr.bf16.mxu0 0
        %2731 = vmatpush2.bf16.msra.mxu0 0
        %2732 = vmatprep.subr.bf16.mxu0 0
        %2733 = vmatpush2.bf16.msra.mxu0 0
        %2734 = vmatprep.mubr.bf16.mxu0 0
        %2735 = vmatmul.mubr.bf16.gmra.mxu0 %v2631
        %v2736 = vpop.f32.mrf.mxu0
        %v2737 = vadd.f32 %v2677, %v2736
        %v2738 = vpop.f32.mrf.mxu0
        %v2739 = vpop.f32.mrf.mxu0
        %v2740 = vadd.f32 %v2677, %v2739
        %v2741 = vpop.f32.mrf.mxu0
        %2742 = vdwg.mxu0
        %v2743 = vmul.f32 %v2596, 0.25
        %v2744 = vpack.c.bf16 %v2743, %v2743
        %2746 = vrot.lane.b32.xlu0 %v2744, 112
        %v2747 = vpop.permute.xlu0 %2746
        %2748 = vrot.lane.b32.xlu0 %v2744, 96
        %v2749 = vpop.permute.xlu0 %2748
        %2750 = vrot.lane.b32.xlu0 %v2744, 80
        %v2751 = vpop.permute.xlu0 %2750
        %v2752 = vpack.c.bf16 %v2671, %v2668
        %2754 = vrot.lane.b32.xlu0 %v2752, 112
        %v2755 = vpop.permute.xlu0 %2754
        %2756 = vrot.lane.b32.xlu0 %v2752, 96
        %v2757 = vpop.permute.xlu0 %2756
        %2758 = vrot.lane.b32.xlu0 %v2752, 80
        %v2759 = vpop.permute.xlu0 %2758
        %v2760 = vpack.c.bf16 %v2740, %v2737
        %2762 = vrot.lane.b32.xlu0 %v2760, 112
        %v2763 = vpop.permute.xlu0 %2762
        %2765 = vrot.lane.b32.xlu0 %v2760, 96
        %v2766 = vpop.permute.xlu0 %2765
        %2768 = vrot.lane.b32.xlu0 %v2760, 80
        %v2769 = vpop.permute.xlu0 %2768
        %v2773 = vunpack.c.l.b16 %v2525
        %v2774 = vunpack.c.l.b16 %v2526
        %v2775 = vpack.c.b16 %v2774, %v2773
        %v2778 = vsel %vm1305, %v2744, 0
        %2780 = vmatprep.subr.bf16.mxu0 0
        %2781 = vmatpush1.bf16.msra.mxu0 0
        %2782 = vmatprep.subr.bf16.mxu0 0
        %2783 = vmatpush1.bf16.msra.mxu0 0
        %2784 = vmatprep.subr.bf16.mxu0 0
        %2785 = vmatpush1.bf16.msra.mxu0 0
        %2786 = vmatprep.subr.bf16.mxu0 0
        %2787 = vmatpush1.bf16.msra.mxu0 0
        %2788 = vmatprep.subr.bf16.mxu0 0
        %2789 = vmatpush1.bf16.msra.mxu0 0
        %2790 = vmatprep.subr.bf16.mxu0 0
        %2791 = vmatpush1.bf16.msra.mxu0 0
        %2792 = vmatprep.subr.bf16.mxu0 0
        %2793 = vmatpush1.bf16.msra.mxu0 0
        %2794 = vmatprep.subr.bf16.mxu0 0
        %2795 = vmatpush1.bf16.msra.mxu0 %v2775
        %2796 = vmatprep.subr.bf16.mxu0 0
        %2797 = vmatpush2.bf16.msra.mxu0 0
        %2798 = vmatprep.subr.bf16.mxu0 0
        %2799 = vmatpush2.bf16.msra.mxu0 0
        %2800 = vmatprep.subr.bf16.mxu0 0
        %2801 = vmatpush2.bf16.msra.mxu0 0
        %2802 = vmatprep.subr.bf16.mxu0 0
        %2803 = vmatpush2.bf16.msra.mxu0 0
        %2804 = vmatprep.subr.bf16.mxu0 0
        %2805 = vmatpush2.bf16.msra.mxu0 0
        %2806 = vmatprep.subr.bf16.mxu0 0
        %2807 = vmatpush2.bf16.msra.mxu0 0
        %2808 = vmatprep.subr.bf16.mxu0 0
        %2809 = vmatpush2.bf16.msra.mxu0 0
        %2810 = vmatprep.subr.bf16.mxu0 0
        %2811 = vmatpush2.bf16.msra.mxu0 0
        %2812 = vmatprep.mubr.bf16.mxu0 0
        %2813 = vmatmul.mubr.bf16.gmra.mxu0 %v2778
        %v2814 = vpop.f32.mrf.mxu0
        %v2815 = vadd.f32 0.0, %v2814
        %v2816 = vpop.f32.mrf.mxu0
        %v2817 = vpop.f32.mrf.mxu0
        %v2818 = vpop.f32.mrf.mxu0
        %2819 = vdwg.mxu0
        %v2821 = vsel %vm1305, %v2747, 0
        %2823 = vmatprep.subr.bf16.mxu0 0
        %2824 = vmatpush1.bf16.msra.mxu0 0
        %2825 = vmatprep.subr.bf16.mxu0 0
        %2826 = vmatpush1.bf16.msra.mxu0 0
        %2827 = vmatprep.subr.bf16.mxu0 0
        %2828 = vmatpush1.bf16.msra.mxu0 0
        %2829 = vmatprep.subr.bf16.mxu0 0
        %2830 = vmatpush1.bf16.msra.mxu0 0
        %2831 = vmatprep.subr.bf16.mxu0 0
        %2832 = vmatpush1.bf16.msra.mxu0 0
        %2833 = vmatprep.subr.bf16.mxu0 0
        %2834 = vmatpush1.bf16.msra.mxu0 0
        %2835 = vmatprep.subr.bf16.mxu0 0
        %2836 = vmatpush1.bf16.msra.mxu0 0
        %2837 = vmatprep.subr.bf16.mxu0 0
        %2838 = vmatpush1.bf16.msra.mxu0 %v2775
        %2839 = vmatprep.subr.bf16.mxu0 0
        %2840 = vmatpush2.bf16.msra.mxu0 0
        %2841 = vmatprep.subr.bf16.mxu0 0
        %2842 = vmatpush2.bf16.msra.mxu0 0
        %2843 = vmatprep.subr.bf16.mxu0 0
        %2844 = vmatpush2.bf16.msra.mxu0 0
        %2845 = vmatprep.subr.bf16.mxu0 0
        %2846 = vmatpush2.bf16.msra.mxu0 0
        %2847 = vmatprep.subr.bf16.mxu0 0
        %2848 = vmatpush2.bf16.msra.mxu0 0
        %2849 = vmatprep.subr.bf16.mxu0 0
        %2850 = vmatpush2.bf16.msra.mxu0 0
        %2851 = vmatprep.subr.bf16.mxu0 0
        %2852 = vmatpush2.bf16.msra.mxu0 0
        %2853 = vmatprep.subr.bf16.mxu0 0
        %2854 = vmatpush2.bf16.msra.mxu0 0
        %2855 = vmatprep.mubr.bf16.mxu0 0
        %2856 = vmatmul.mubr.bf16.gmra.mxu0 %v2821
        %v2857 = vpop.f32.mrf.mxu0
        %v2858 = vadd.f32 0.0, %v2857
        %v2859 = vpop.f32.mrf.mxu0
        %v2860 = vpop.f32.mrf.mxu0
        %v2861 = vpop.f32.mrf.mxu0
        %2862 = vdwg.mxu0
        %v2864 = vsel %vm1305, %v2749, 0
        %2866 = vmatprep.subr.bf16.mxu0 0
        %2867 = vmatpush1.bf16.msra.mxu0 0
        %2868 = vmatprep.subr.bf16.mxu0 0
        %2869 = vmatpush1.bf16.msra.mxu0 0
        %2870 = vmatprep.subr.bf16.mxu0 0
        %2871 = vmatpush1.bf16.msra.mxu0 0
        %2872 = vmatprep.subr.bf16.mxu0 0
        %2873 = vmatpush1.bf16.msra.mxu0 0
        %2874 = vmatprep.subr.bf16.mxu0 0
        %2875 = vmatpush1.bf16.msra.mxu0 0
        %2876 = vmatprep.subr.bf16.mxu0 0
        %2877 = vmatpush1.bf16.msra.mxu0 0
        %2878 = vmatprep.subr.bf16.mxu0 0
        %2879 = vmatpush1.bf16.msra.mxu0 0
        %2880 = vmatprep.subr.bf16.mxu0 0
        %2881 = vmatpush1.bf16.msra.mxu0 %v2775
        %2882 = vmatprep.subr.bf16.mxu0 0
        %2883 = vmatpush2.bf16.msra.mxu0 0
        %2884 = vmatprep.subr.bf16.mxu0 0
        %2885 = vmatpush2.bf16.msra.mxu0 0
        %2886 = vmatprep.subr.bf16.mxu0 0
        %2887 = vmatpush2.bf16.msra.mxu0 0
        %2888 = vmatprep.subr.bf16.mxu0 0
        %2889 = vmatpush2.bf16.msra.mxu0 0
        %2890 = vmatprep.subr.bf16.mxu0 0
        %2891 = vmatpush2.bf16.msra.mxu0 0
        %2892 = vmatprep.subr.bf16.mxu0 0
        %2893 = vmatpush2.bf16.msra.mxu0 0
        %2894 = vmatprep.subr.bf16.mxu0 0
        %2895 = vmatpush2.bf16.msra.mxu0 0
        %2896 = vmatprep.subr.bf16.mxu0 0
        %2897 = vmatpush2.bf16.msra.mxu0 0
        %2898 = vmatprep.mubr.bf16.mxu0 0
        %2899 = vmatmul.mubr.bf16.gmra.mxu0 %v2864
        %v2900 = vpop.f32.mrf.mxu0
        %v2901 = vadd.f32 0.0, %v2900
        %v2902 = vpop.f32.mrf.mxu0
        %v2903 = vpop.f32.mrf.mxu0
        %v2904 = vpop.f32.mrf.mxu0
        %2905 = vdwg.mxu0
        %v2907 = vsel %vm1305, %v2751, 0
        %2909 = vmatprep.subr.bf16.mxu0 0
        %2910 = vmatpush1.bf16.msra.mxu0 0
        %2911 = vmatprep.subr.bf16.mxu0 0
        %2912 = vmatpush1.bf16.msra.mxu0 0
        %2913 = vmatprep.subr.bf16.mxu0 0
        %2914 = vmatpush1.bf16.msra.mxu0 0
        %2915 = vmatprep.subr.bf16.mxu0 0
        %2916 = vmatpush1.bf16.msra.mxu0 0
        %2917 = vmatprep.subr.bf16.mxu0 0
        %2918 = vmatpush1.bf16.msra.mxu0 0
        %2919 = vmatprep.subr.bf16.mxu0 0
        %2920 = vmatpush1.bf16.msra.mxu0 0
        %2921 = vmatprep.subr.bf16.mxu0 0
        %2922 = vmatpush1.bf16.msra.mxu0 0
        %2923 = vmatprep.subr.bf16.mxu0 0
        %2924 = vmatpush1.bf16.msra.mxu0 %v2775
        %2925 = vmatprep.subr.bf16.mxu0 0
        %2926 = vmatpush2.bf16.msra.mxu0 0
        %2927 = vmatprep.subr.bf16.mxu0 0
        %2928 = vmatpush2.bf16.msra.mxu0 0
        %2929 = vmatprep.subr.bf16.mxu0 0
        %2930 = vmatpush2.bf16.msra.mxu0 0
        %2931 = vmatprep.subr.bf16.mxu0 0
        %2932 = vmatpush2.bf16.msra.mxu0 0
        %2933 = vmatprep.subr.bf16.mxu0 0
        %2934 = vmatpush2.bf16.msra.mxu0 0
        %2935 = vmatprep.subr.bf16.mxu0 0
        %2936 = vmatpush2.bf16.msra.mxu0 0
        %2937 = vmatprep.subr.bf16.mxu0 0
        %2938 = vmatpush2.bf16.msra.mxu0 0
        %2939 = vmatprep.subr.bf16.mxu0 0
        %2940 = vmatpush2.bf16.msra.mxu0 0
        %2941 = vmatprep.mubr.bf16.mxu0 0
        %2942 = vmatmul.mubr.bf16.gmra.mxu0 %v2907
        %v2943 = vpop.f32.mrf.mxu0
        %v2944 = vadd.f32 0.0, %v2943
        %v2945 = vpop.f32.mrf.mxu0
        %v2946 = vpop.f32.mrf.mxu0
        %v2947 = vpop.f32.mrf.mxu0
        %2948 = vdwg.mxu0
        %2950 = vset.pattern.permute.xlu0 0
        %2951 = vperm.xlu0 %2950, %v2815
        %v2952 = vpop.permute.xlu0 %2951
        %2955 = vset.pattern.permute.xlu0 0
        %2956 = vperm.xlu0 %2955, %v2858
        %v2957 = vpop.permute.xlu0 %2956
        %2960 = vset.pattern.permute.xlu0 0
        %2961 = vperm.xlu0 %2960, %v2901
        %v2962 = vpop.permute.xlu0 %2961
        %2965 = vset.pattern.permute.xlu0 0
        %2966 = vperm.xlu0 %2965, %v2944
        %v2967 = vpop.permute.xlu0 %2966
        %v2969 = vsel %vm1500, %v2952, 0.0
        %v2970 = vsel %vm1500, %v2957, 0.0
        %v2971 = vsel %vm1500, %v2962, 0.0
        %v2972 = vsel %vm1500, %v2967, 0.0
        %v2974 = vsel %vm1305, %v2752, 0
        %2976 = vmatprep.subr.bf16.mxu0 0
        %2977 = vmatpush1.bf16.xpose.msra.mxu0 0
        %2978 = vmatprep.subr.bf16.mxu0 0
        %2979 = vmatpush1.bf16.xpose.msra.mxu0 0
        %2980 = vmatprep.subr.bf16.mxu0 0
        %2981 = vmatpush1.bf16.xpose.msra.mxu0 0
        %2982 = vmatprep.subr.bf16.mxu0 0
        %2983 = vmatpush1.bf16.xpose.msra.mxu0 0
        %2984 = vmatprep.subr.bf16.mxu0 0
        %2985 = vmatpush1.bf16.xpose.msra.mxu0 0
        %2986 = vmatprep.subr.bf16.mxu0 0
        %2987 = vmatpush1.bf16.xpose.msra.mxu0 0
        %2988 = vmatprep.subr.bf16.mxu0 0
        %2989 = vmatpush1.bf16.xpose.msra.mxu0 0
        %2990 = vmatprep.subr.bf16.mxu0 0
        %2991 = vmatpush1.bf16.xpose.msra.mxu0 %v2974
        %2992 = vmatprep.subr.bf16.mxu0 0
        %2993 = vmatpush2.bf16.xpose.msra.mxu0 0
        %2994 = vmatprep.subr.bf16.mxu0 0
        %2995 = vmatpush2.bf16.xpose.msra.mxu0 0
        %2996 = vmatprep.subr.bf16.mxu0 0
        %2997 = vmatpush2.bf16.xpose.msra.mxu0 0
        %2998 = vmatprep.subr.bf16.mxu0 0
        %2999 = vmatpush2.bf16.xpose.msra.mxu0 0
        %3000 = vmatprep.subr.bf16.mxu0 0
        %3001 = vmatpush2.bf16.xpose.msra.mxu0 0
        %3002 = vmatprep.subr.bf16.mxu0 0
        %3003 = vmatpush2.bf16.xpose.msra.mxu0 0
        %3004 = vmatprep.subr.bf16.mxu0 0
        %3005 = vmatpush2.bf16.xpose.msra.mxu0 0
        %3006 = vmatprep.subr.bf16.mxu0 0
        %3007 = vmatpush2.bf16.xpose.msra.mxu0 0
        %3008 = vmatprep.mubr.bf16.mxu0 0
        %3009 = vmatmul.mubr.bf16.gmra.mxu0 %v2778
        %v3010 = vpop.f32.mrf.mxu0
        %v3011 = vadd.f32 %v2969, %v3010
        %v3012 = vpop.f32.mrf.mxu0
        %v3013 = vpop.f32.mrf.mxu0
        %v3014 = vpop.f32.mrf.mxu0
        %3015 = vdwg.mxu0
        %v3017 = vsel %vm1305, %v2755, 0
        %3019 = vmatprep.subr.bf16.mxu0 0
        %3020 = vmatpush1.bf16.xpose.msra.mxu0 0
        %3021 = vmatprep.subr.bf16.mxu0 0
        %3022 = vmatpush1.bf16.xpose.msra.mxu0 0
        %3023 = vmatprep.subr.bf16.mxu0 0
        %3024 = vmatpush1.bf16.xpose.msra.mxu0 0
        %3025 = vmatprep.subr.bf16.mxu0 0
        %3026 = vmatpush1.bf16.xpose.msra.mxu0 0
        %3027 = vmatprep.subr.bf16.mxu0 0
        %3028 = vmatpush1.bf16.xpose.msra.mxu0 0
        %3029 = vmatprep.subr.bf16.mxu0 0
        %3030 = vmatpush1.bf16.xpose.msra.mxu0 0
        %3031 = vmatprep.subr.bf16.mxu0 0
        %3032 = vmatpush1.bf16.xpose.msra.mxu0 0
        %3033 = vmatprep.subr.bf16.mxu0 0
        %3034 = vmatpush1.bf16.xpose.msra.mxu0 %v3017
        %3035 = vmatprep.subr.bf16.mxu0 0
        %3036 = vmatpush2.bf16.xpose.msra.mxu0 0
        %3037 = vmatprep.subr.bf16.mxu0 0
        %3038 = vmatpush2.bf16.xpose.msra.mxu0 0
        %3039 = vmatprep.subr.bf16.mxu0 0
        %3040 = vmatpush2.bf16.xpose.msra.mxu0 0
        %3041 = vmatprep.subr.bf16.mxu0 0
        %3042 = vmatpush2.bf16.xpose.msra.mxu0 0
        %3043 = vmatprep.subr.bf16.mxu0 0
        %3044 = vmatpush2.bf16.xpose.msra.mxu0 0
        %3045 = vmatprep.subr.bf16.mxu0 0
        %3046 = vmatpush2.bf16.xpose.msra.mxu0 0
        %3047 = vmatprep.subr.bf16.mxu0 0
        %3048 = vmatpush2.bf16.xpose.msra.mxu0 0
        %3049 = vmatprep.subr.bf16.mxu0 0
        %3050 = vmatpush2.bf16.xpose.msra.mxu0 0
        %3051 = vmatprep.mubr.bf16.mxu0 0
        %3052 = vmatmul.mubr.bf16.gmra.mxu0 %v2821
        %v3053 = vpop.f32.mrf.mxu0
        %v3054 = vadd.f32 %v2970, %v3053
        %v3055 = vpop.f32.mrf.mxu0
        %v3056 = vpop.f32.mrf.mxu0
        %v3057 = vpop.f32.mrf.mxu0
        %3058 = vdwg.mxu0
        %v3060 = vsel %vm1305, %v2757, 0
        %3062 = vmatprep.subr.bf16.mxu0 0
        %3063 = vmatpush1.bf16.xpose.msra.mxu0 0
        %3064 = vmatprep.subr.bf16.mxu0 0
        %3065 = vmatpush1.bf16.xpose.msra.mxu0 0
        %3066 = vmatprep.subr.bf16.mxu0 0
        %3067 = vmatpush1.bf16.xpose.msra.mxu0 0
        %3068 = vmatprep.subr.bf16.mxu0 0
        %3069 = vmatpush1.bf16.xpose.msra.mxu0 0
        %3070 = vmatprep.subr.bf16.mxu0 0
        %3071 = vmatpush1.bf16.xpose.msra.mxu0 0
        %3072 = vmatprep.subr.bf16.mxu0 0
        %3073 = vmatpush1.bf16.xpose.msra.mxu0 0
        %3074 = vmatprep.subr.bf16.mxu0 0
        %3075 = vmatpush1.bf16.xpose.msra.mxu0 0
        %3076 = vmatprep.subr.bf16.mxu0 0
        %3077 = vmatpush1.bf16.xpose.msra.mxu0 %v3060
        %3078 = vmatprep.subr.bf16.mxu0 0
        %3079 = vmatpush2.bf16.xpose.msra.mxu0 0
        %3080 = vmatprep.subr.bf16.mxu0 0
        %3081 = vmatpush2.bf16.xpose.msra.mxu0 0
        %3082 = vmatprep.subr.bf16.mxu0 0
        %3083 = vmatpush2.bf16.xpose.msra.mxu0 0
        %3084 = vmatprep.subr.bf16.mxu0 0
        %3085 = vmatpush2.bf16.xpose.msra.mxu0 0
        %3086 = vmatprep.subr.bf16.mxu0 0
        %3087 = vmatpush2.bf16.xpose.msra.mxu0 0
        %3088 = vmatprep.subr.bf16.mxu0 0
        %3089 = vmatpush2.bf16.xpose.msra.mxu0 0
        %3090 = vmatprep.subr.bf16.mxu0 0
        %3091 = vmatpush2.bf16.xpose.msra.mxu0 0
        %3092 = vmatprep.subr.bf16.mxu0 0
        %3093 = vmatpush2.bf16.xpose.msra.mxu0 0
        %3094 = vmatprep.mubr.bf16.mxu0 0
        %3095 = vmatmul.mubr.bf16.gmra.mxu0 %v2864
        %v3096 = vpop.f32.mrf.mxu0
        %v3097 = vadd.f32 %v2971, %v3096
        %v3098 = vpop.f32.mrf.mxu0
        %v3099 = vpop.f32.mrf.mxu0
        %v3100 = vpop.f32.mrf.mxu0
        %3101 = vdwg.mxu0
        %v3103 = vsel %vm1305, %v2759, 0
        %3105 = vmatprep.subr.bf16.mxu0 0
        %3106 = vmatpush1.bf16.xpose.msra.mxu0 0
        %3107 = vmatprep.subr.bf16.mxu0 0
        %3108 = vmatpush1.bf16.xpose.msra.mxu0 0
        %3109 = vmatprep.subr.bf16.mxu0 0
        %3110 = vmatpush1.bf16.xpose.msra.mxu0 0
        %3111 = vmatprep.subr.bf16.mxu0 0
        %3112 = vmatpush1.bf16.xpose.msra.mxu0 0
        %3113 = vmatprep.subr.bf16.mxu0 0
        %3114 = vmatpush1.bf16.xpose.msra.mxu0 0
        %3115 = vmatprep.subr.bf16.mxu0 0
        %3116 = vmatpush1.bf16.xpose.msra.mxu0 0
        %3117 = vmatprep.subr.bf16.mxu0 0
        %3118 = vmatpush1.bf16.xpose.msra.mxu0 0
        %3119 = vmatprep.subr.bf16.mxu0 0
        %3120 = vmatpush1.bf16.xpose.msra.mxu0 %v3103
        %3121 = vmatprep.subr.bf16.mxu0 0
        %3122 = vmatpush2.bf16.xpose.msra.mxu0 0
        %3123 = vmatprep.subr.bf16.mxu0 0
        %3124 = vmatpush2.bf16.xpose.msra.mxu0 0
        %3125 = vmatprep.subr.bf16.mxu0 0
        %3126 = vmatpush2.bf16.xpose.msra.mxu0 0
        %3127 = vmatprep.subr.bf16.mxu0 0
        %3128 = vmatpush2.bf16.xpose.msra.mxu0 0
        %3129 = vmatprep.subr.bf16.mxu0 0
        %3130 = vmatpush2.bf16.xpose.msra.mxu0 0
        %3131 = vmatprep.subr.bf16.mxu0 0
        %3132 = vmatpush2.bf16.xpose.msra.mxu0 0
        %3133 = vmatprep.subr.bf16.mxu0 0
        %3134 = vmatpush2.bf16.xpose.msra.mxu0 0
        %3135 = vmatprep.subr.bf16.mxu0 0
        %3136 = vmatpush2.bf16.xpose.msra.mxu0 0
        %3137 = vmatprep.mubr.bf16.mxu0 0
        %3138 = vmatmul.mubr.bf16.gmra.mxu0 %v2907
        %v3139 = vpop.f32.mrf.mxu0
        %v3140 = vadd.f32 %v2972, %v3139
        %v3141 = vpop.f32.mrf.mxu0
        %v3142 = vpop.f32.mrf.mxu0
        %v3143 = vpop.f32.mrf.mxu0
        %3144 = vdwg.mxu0
        %3145 = vset.pattern.permute.xlu0 1
        %3146 = vperm.xlu0 %3145, %v2815
        %v3147 = vpop.permute.xlu0 %3146
        %3149 = vset.pattern.permute.xlu0 1
        %3150 = vperm.xlu0 %3149, %v2858
        %v3151 = vpop.permute.xlu0 %3150
        %3153 = vset.pattern.permute.xlu0 1
        %3154 = vperm.xlu0 %3153, %v2901
        %v3155 = vpop.permute.xlu0 %3154
        %3157 = vset.pattern.permute.xlu0 1
        %3158 = vperm.xlu0 %3157, %v2944
        %v3159 = vpop.permute.xlu0 %3158
        %v3161 = vsel %vm1698, %v3147, 0.0
        %v3162 = vsel %vm1698, %v3151, 0.0
        %v3163 = vsel %vm1698, %v3155, 0.0
        %v3164 = vsel %vm1698, %v3159, 0.0
        %v3165 = vadd.f32 %v3011, %v3161
        %v3166 = vadd.f32 %v3054, %v3162
        %v3167 = vadd.f32 %v3097, %v3163
        %v3168 = vadd.f32 %v3140, %v3164
        %3169 = vset.pattern.permute.xlu0 2
        %3170 = vperm.xlu0 %3169, %v2815
        %v3171 = vpop.permute.xlu0 %3170
        %3173 = vset.pattern.permute.xlu0 2
        %3174 = vperm.xlu0 %3173, %v2858
        %v3175 = vpop.permute.xlu0 %3174
        %3177 = vset.pattern.permute.xlu0 2
        %3178 = vperm.xlu0 %3177, %v2901
        %v3179 = vpop.permute.xlu0 %3178
        %3181 = vset.pattern.permute.xlu0 2
        %3182 = vperm.xlu0 %3181, %v2944
        %v3183 = vpop.permute.xlu0 %3182
        %v3185 = vsel %vm1724, %v3171, 0.0
        %v3186 = vsel %vm1724, %v3175, 0.0
        %v3187 = vsel %vm1724, %v3179, 0.0
        %v3188 = vsel %vm1724, %v3183, 0.0
        %v3189 = vadd.f32 %v3165, %v3185
        %v3190 = vadd.f32 %v3166, %v3186
        %v3191 = vadd.f32 %v3167, %v3187
        %v3192 = vadd.f32 %v3168, %v3188
        %3193 = vset.pattern.permute.xlu0 3
        %3194 = vperm.xlu0 %3193, %v2815
        %v3195 = vpop.permute.xlu0 %3194
        %3197 = vset.pattern.permute.xlu0 3
        %3198 = vperm.xlu0 %3197, %v2858
        %v3199 = vpop.permute.xlu0 %3198
        %3201 = vset.pattern.permute.xlu0 3
        %3202 = vperm.xlu0 %3201, %v2901
        %v3203 = vpop.permute.xlu0 %3202
        %3205 = vset.pattern.permute.xlu0 3
        %3206 = vperm.xlu0 %3205, %v2944
        %v3207 = vpop.permute.xlu0 %3206
        %v3209 = vsel %vm1750, %v3195, 0.0
        %v3210 = vsel %vm1750, %v3199, 0.0
        %v3211 = vsel %vm1750, %v3203, 0.0
        %v3212 = vsel %vm1750, %v3207, 0.0
        %v3213 = vadd.f32 %v3189, %v3209
        %v3214 = vadd.f32 %v3190, %v3210
        %v3215 = vadd.f32 %v3191, %v3211
        %v3216 = vadd.f32 %v3192, %v3212
        %3217 = vset.pattern.permute.xlu0 4
        %3218 = vperm.xlu0 %3217, %v2815
        %v3219 = vpop.permute.xlu0 %3218
        %3221 = vset.pattern.permute.xlu0 4
        %3222 = vperm.xlu0 %3221, %v2858
        %v3223 = vpop.permute.xlu0 %3222
        %3225 = vset.pattern.permute.xlu0 4
        %3226 = vperm.xlu0 %3225, %v2901
        %v3227 = vpop.permute.xlu0 %3226
        %3229 = vset.pattern.permute.xlu0 4
        %3230 = vperm.xlu0 %3229, %v2944
        %v3231 = vpop.permute.xlu0 %3230
        %v3233 = vsel %vm1776, %v3219, 0.0
        %v3234 = vsel %vm1776, %v3223, 0.0
        %v3235 = vsel %vm1776, %v3227, 0.0
        %v3236 = vsel %vm1776, %v3231, 0.0
        %v3237 = vadd.f32 %v3213, %v3233
        %v3238 = vadd.f32 %v3214, %v3234
        %v3239 = vadd.f32 %v3215, %v3235
        %v3240 = vadd.f32 %v3216, %v3236
        %3241 = vset.pattern.permute.xlu0 5
        %3242 = vperm.xlu0 %3241, %v2815
        %v3243 = vpop.permute.xlu0 %3242
        %3245 = vset.pattern.permute.xlu0 5
        %3246 = vperm.xlu0 %3245, %v2858
        %v3247 = vpop.permute.xlu0 %3246
        %3249 = vset.pattern.permute.xlu0 5
        %3250 = vperm.xlu0 %3249, %v2901
        %v3251 = vpop.permute.xlu0 %3250
        %3253 = vset.pattern.permute.xlu0 5
        %3254 = vperm.xlu0 %3253, %v2944
        %v3255 = vpop.permute.xlu0 %3254
        %v3257 = vsel %vm1802, %v3243, 0.0
        %v3258 = vsel %vm1802, %v3247, 0.0
        %v3259 = vsel %vm1802, %v3251, 0.0
        %v3260 = vsel %vm1802, %v3255, 0.0
        %v3261 = vadd.f32 %v3237, %v3257
        %v3262 = vadd.f32 %v3238, %v3258
        %v3263 = vadd.f32 %v3239, %v3259
        %v3264 = vadd.f32 %v3240, %v3260
        %3265 = vset.pattern.permute.xlu0 6
        %3266 = vperm.xlu0 %3265, %v2815
        %v3267 = vpop.permute.xlu0 %3266
        %3269 = vset.pattern.permute.xlu0 6
        %3270 = vperm.xlu0 %3269, %v2858
        %v3271 = vpop.permute.xlu0 %3270
        %3273 = vset.pattern.permute.xlu0 6
        %3274 = vperm.xlu0 %3273, %v2901
        %v3275 = vpop.permute.xlu0 %3274
        %3277 = vset.pattern.permute.xlu0 6
        %3278 = vperm.xlu0 %3277, %v2944
        %v3279 = vpop.permute.xlu0 %3278
        %v3281 = vsel %vm1828, %v3267, 0.0
        %v3282 = vsel %vm1828, %v3271, 0.0
        %v3283 = vsel %vm1828, %v3275, 0.0
        %v3284 = vsel %vm1828, %v3279, 0.0
        %v3285 = vadd.f32 %v3261, %v3281
        %v3286 = vadd.f32 %v3262, %v3282
        %v3287 = vadd.f32 %v3263, %v3283
        %v3288 = vadd.f32 %v3264, %v3284
        %3289 = vset.pattern.permute.xlu0 7
        %3290 = vperm.xlu0 %3289, %v2815
        %v3291 = vpop.permute.xlu0 %3290
        %3293 = vset.pattern.permute.xlu0 7
        %3294 = vperm.xlu0 %3293, %v2858
        %v3295 = vpop.permute.xlu0 %3294
        %3297 = vset.pattern.permute.xlu0 7
        %3298 = vperm.xlu0 %3297, %v2901
        %v3299 = vpop.permute.xlu0 %3298
        %3301 = vset.pattern.permute.xlu0 7
        %3302 = vperm.xlu0 %3301, %v2944
        %v3303 = vpop.permute.xlu0 %3302
        %v3305 = vsel %vm1854, %v3291, 0.0
        %v3306 = vsel %vm1854, %v3295, 0.0
        %v3307 = vsel %vm1854, %v3299, 0.0
        %v3308 = vsel %vm1854, %v3303, 0.0
        %v3309 = vadd.f32 %v3285, %v3305
        %v3310 = vadd.f32 %v3286, %v3306
        %v3311 = vadd.f32 %v3287, %v3307
        %v3312 = vadd.f32 %v3288, %v3308
        %3313 = vset.pattern.permute.xlu0 8
        %3314 = vperm.xlu0 %3313, %v2815
        %v3315 = vpop.permute.xlu0 %3314
        %3317 = vset.pattern.permute.xlu0 8
        %3318 = vperm.xlu0 %3317, %v2858
        %v3319 = vpop.permute.xlu0 %3318
        %3321 = vset.pattern.permute.xlu0 8
        %3322 = vperm.xlu0 %3321, %v2901
        %v3323 = vpop.permute.xlu0 %3322
        %3325 = vset.pattern.permute.xlu0 8
        %3326 = vperm.xlu0 %3325, %v2944
        %v3327 = vpop.permute.xlu0 %3326
        %v3329 = vsel %vm1880, %v3315, 0.0
        %v3330 = vsel %vm1880, %v3319, 0.0
        %v3331 = vsel %vm1880, %v3323, 0.0
        %v3332 = vsel %vm1880, %v3327, 0.0
        %v3333 = vadd.f32 %v3309, %v3329
        %v3334 = vadd.f32 %v3310, %v3330
        %v3335 = vadd.f32 %v3311, %v3331
        %v3336 = vadd.f32 %v3312, %v3332
        %v3337 = vadd.f32 %v3333, %v1017
        %v3338 = vadd.f32 %v3334, %v1017
        %v3339 = vadd.f32 %v3335, %v1017
        %v3340 = vadd.f32 %v3336, %v1017
        %v3341 = vsel %vm1305, %v3337, -inf
        %3342 = vmax.xlane.f32.xlu0 %v3341
        %v3343 = vpop.xlane.xlu0 %3342
        %v3344 = vsel %vm1305, %v3338, -inf
        %3345 = vmax.xlane.f32.xlu0 %v3344
        %v3346 = vpop.xlane.xlu0 %3345
        %v3347 = vsel %vm1305, %v3339, -inf
        %3348 = vmax.xlane.f32.xlu0 %v3347
        %v3349 = vpop.xlane.xlu0 %3348
        %v3350 = vsel %vm1305, %v3340, -inf
        %3351 = vmax.xlane.f32.xlu0 %v3350
        %v3352 = vpop.xlane.xlu0 %3351
        %v3353 = vsub.f32 %v3337, %v3343
        %v3354 = vsub.f32 %v3338, %v3346
        %v3355 = vsub.f32 %v3339, %v3349
        %v3356 = vsub.f32 %v3340, %v3352
        %v3357 = vmul.f32 %v3353, 1.442695
        %v3358 = vpow.pop %v3357
        %v3359 = vmul.f32 %v3354, 1.442695
        %v3360 = vpow.pop %v3359
        %v3361 = vmul.f32 %v3355, 1.442695
        %v3362 = vpow.pop %v3361
        %v3363 = vmul.f32 %v3356, 1.442695
        %v3364 = vpow.pop %v3363
        %v3365 = vsel %vm1305, %v3358, 0.0
        %3366 = vadd.xlane.f32.xlu0 %v3365
        %v3367 = vpop.xlane.xlu0 %3366
        %v3368 = vsel %vm1305, %v3360, 0.0
        %3369 = vadd.xlane.f32.xlu0 %v3368
        %v3370 = vpop.xlane.xlu0 %3369
        %v3371 = vsel %vm1305, %v3362, 0.0
        %3372 = vadd.xlane.f32.xlu0 %v3371
        %v3373 = vpop.xlane.xlu0 %3372
        %v3374 = vsel %vm1305, %v3364, 0.0
        %3375 = vadd.xlane.f32.xlu0 %v3374
        %v3376 = vpop.xlane.xlu0 %3375
        %v3377 = vrcp.pop %v3367
        %v3378 = vrcp.pop %v3370
        %v3379 = vrcp.pop %v3373
        %v3380 = vrcp.pop %v3376
        %v3381 = vmul.f32 %v3358, %v3377
        %v3382 = vmul.f32 %v3360, %v3378
        %v3383 = vmul.f32 %v3362, %v3379
        %v3384 = vmul.f32 %v3364, %v3380
        %v3385 = vpack.c.bf16 %v3381, %v3381
        %v3386 = vpack.c.bf16 %v3382, %v3382
        %v3387 = vpack.c.bf16 %v3383, %v3383
        %v3388 = vpack.c.bf16 %v3384, %v3384
        %v3389 = vunpack.c.l.bf16 %v2527
        %v3390 = vunpack.c.l.bf16 %v2528
        %v3391 = vsel %vm1500, %v3381, 0.0
        %v3392 = vsel %vm1500, %v3382, 0.0
        %v3393 = vsel %vm1500, %v3383, 0.0
        %v3394 = vsel %vm1500, %v3384, 0.0
        %v3395 = vsel %vm1305, %v3391, 0.0
        %3396 = vadd.xlane.f32.xlu0 %v3395
        %v3397 = vpop.xlane.xlu0 %3396
        %v3398 = vsel %vm1305, %v3392, 0.0
        %3399 = vadd.xlane.f32.xlu0 %v3398
        %v3400 = vpop.xlane.xlu0 %3399
        %v3401 = vsel %vm1305, %v3393, 0.0
        %3402 = vadd.xlane.f32.xlu0 %v3401
        %v3403 = vpop.xlane.xlu0 %3402
        %v3404 = vsel %vm1305, %v3394, 0.0
        %3405 = vadd.xlane.f32.xlu0 %v3404
        %v3406 = vpop.xlane.xlu0 %3405
        %v3407 = vlaneseq
        %v3408 = vshrl.u32 %v3407, 7
        %v3409 = vsub.s32 0, %v3408
        %v3410 = vrot.slane %v3389, %v3409
        %v3411 = vmul.f32 %v3397, %v3410
        %v3412 = vmul.f32 %v3400, %v3410
        %v3413 = vmul.f32 %v3403, %v3410
        %v3414 = vmul.f32 %v3406, %v3410
        %v3416 = vsel %vm1305, %v3385, 0
        %3418 = vmatprep.subr.bf16.mxu0 0
        %3419 = vmatpush1.bf16.msra.mxu0 0
        %3420 = vmatprep.subr.bf16.mxu0 0
        %3421 = vmatpush1.bf16.msra.mxu0 0
        %3422 = vmatprep.subr.bf16.mxu0 0
        %3423 = vmatpush1.bf16.msra.mxu0 0
        %3424 = vmatprep.subr.bf16.mxu0 0
        %3425 = vmatpush1.bf16.msra.mxu0 0
        %3426 = vmatprep.subr.bf16.mxu0 0
        %3427 = vmatpush1.bf16.msra.mxu0 0
        %3428 = vmatprep.subr.bf16.mxu0 0
        %3429 = vmatpush1.bf16.msra.mxu0 0
        %3430 = vmatprep.subr.bf16.mxu0 0
        %3431 = vmatpush1.bf16.msra.mxu0 0
        %3432 = vmatprep.subr.bf16.mxu0 0
        %3433 = vmatpush1.bf16.msra.mxu0 %v2760
        %3434 = vmatprep.subr.bf16.mxu0 0
        %3435 = vmatpush2.bf16.msra.mxu0 0
        %3436 = vmatprep.subr.bf16.mxu0 0
        %3437 = vmatpush2.bf16.msra.mxu0 0
        %3438 = vmatprep.subr.bf16.mxu0 0
        %3439 = vmatpush2.bf16.msra.mxu0 0
        %3440 = vmatprep.subr.bf16.mxu0 0
        %3441 = vmatpush2.bf16.msra.mxu0 0
        %3442 = vmatprep.subr.bf16.mxu0 0
        %3443 = vmatpush2.bf16.msra.mxu0 0
        %3444 = vmatprep.subr.bf16.mxu0 0
        %3445 = vmatpush2.bf16.msra.mxu0 0
        %3446 = vmatprep.subr.bf16.mxu0 0
        %3447 = vmatpush2.bf16.msra.mxu0 0
        %3448 = vmatprep.subr.bf16.mxu0 0
        %3449 = vmatpush2.bf16.msra.mxu0 0
        %3450 = vmatprep.mubr.bf16.mxu0 0
        %3451 = vmatmul.mubr.bf16.gmra.mxu0 %v3416
        %v3452 = vpop.f32.mrf.mxu0
        %v3453 = vadd.f32 %v3411, %v3452
        %v3454 = vpop.f32.mrf.mxu0
        %v3455 = vpop.f32.mrf.mxu0
        %v3456 = vpop.f32.mrf.mxu0
        %3457 = vdwg.mxu0
        %v3459 = vsel %vm1305, %v3386, 0
        %3461 = vmatprep.subr.bf16.mxu0 0
        %3462 = vmatpush1.bf16.msra.mxu0 0
        %3463 = vmatprep.subr.bf16.mxu0 0
        %3464 = vmatpush1.bf16.msra.mxu0 0
        %3465 = vmatprep.subr.bf16.mxu0 0
        %3466 = vmatpush1.bf16.msra.mxu0 0
        %3467 = vmatprep.subr.bf16.mxu0 0
        %3468 = vmatpush1.bf16.msra.mxu0 0
        %3469 = vmatprep.subr.bf16.mxu0 0
        %3470 = vmatpush1.bf16.msra.mxu0 0
        %3471 = vmatprep.subr.bf16.mxu0 0
        %3472 = vmatpush1.bf16.msra.mxu0 0
        %3473 = vmatprep.subr.bf16.mxu0 0
        %3474 = vmatpush1.bf16.msra.mxu0 0
        %3475 = vmatprep.subr.bf16.mxu0 0
        %3476 = vmatpush1.bf16.msra.mxu0 %v2763
        %3477 = vmatprep.subr.bf16.mxu0 0
        %3478 = vmatpush2.bf16.msra.mxu0 0
        %3479 = vmatprep.subr.bf16.mxu0 0
        %3480 = vmatpush2.bf16.msra.mxu0 0
        %3481 = vmatprep.subr.bf16.mxu0 0
        %3482 = vmatpush2.bf16.msra.mxu0 0
        %3483 = vmatprep.subr.bf16.mxu0 0
        %3484 = vmatpush2.bf16.msra.mxu0 0
        %3485 = vmatprep.subr.bf16.mxu0 0
        %3486 = vmatpush2.bf16.msra.mxu0 0
        %3487 = vmatprep.subr.bf16.mxu0 0
        %3488 = vmatpush2.bf16.msra.mxu0 0
        %3489 = vmatprep.subr.bf16.mxu0 0
        %3490 = vmatpush2.bf16.msra.mxu0 0
        %3491 = vmatprep.subr.bf16.mxu0 0
        %3492 = vmatpush2.bf16.msra.mxu0 0
        %3493 = vmatprep.mubr.bf16.mxu0 0
        %3494 = vmatmul.mubr.bf16.gmra.mxu0 %v3459
        %v3495 = vpop.f32.mrf.mxu0
        %v3496 = vadd.f32 %v3412, %v3495
        %v3497 = vpop.f32.mrf.mxu0
        %v3498 = vpop.f32.mrf.mxu0
        %v3499 = vpop.f32.mrf.mxu0
        %3500 = vdwg.mxu0
        %v3502 = vsel %vm1305, %v3387, 0
        %3504 = vmatprep.subr.bf16.mxu0 0
        %3505 = vmatpush1.bf16.msra.mxu0 0
        %3506 = vmatprep.subr.bf16.mxu0 0
        %3507 = vmatpush1.bf16.msra.mxu0 0
        %3508 = vmatprep.subr.bf16.mxu0 0
        %3509 = vmatpush1.bf16.msra.mxu0 0
        %3510 = vmatprep.subr.bf16.mxu0 0
        %3511 = vmatpush1.bf16.msra.mxu0 0
        %3512 = vmatprep.subr.bf16.mxu0 0
        %3513 = vmatpush1.bf16.msra.mxu0 0
        %3514 = vmatprep.subr.bf16.mxu0 0
        %3515 = vmatpush1.bf16.msra.mxu0 0
        %3516 = vmatprep.subr.bf16.mxu0 0
        %3517 = vmatpush1.bf16.msra.mxu0 0
        %3518 = vmatprep.subr.bf16.mxu0 0
        %3519 = vmatpush1.bf16.msra.mxu0 %v2766
        %3520 = vmatprep.subr.bf16.mxu0 0
        %3521 = vmatpush2.bf16.msra.mxu0 0
        %3522 = vmatprep.subr.bf16.mxu0 0
        %3523 = vmatpush2.bf16.msra.mxu0 0
        %3524 = vmatprep.subr.bf16.mxu0 0
        %3525 = vmatpush2.bf16.msra.mxu0 0
        %3526 = vmatprep.subr.bf16.mxu0 0
        %3527 = vmatpush2.bf16.msra.mxu0 0
        %3528 = vmatprep.subr.bf16.mxu0 0
        %3529 = vmatpush2.bf16.msra.mxu0 0
        %3530 = vmatprep.subr.bf16.mxu0 0
        %3531 = vmatpush2.bf16.msra.mxu0 0
        %3532 = vmatprep.subr.bf16.mxu0 0
        %3533 = vmatpush2.bf16.msra.mxu0 0
        %3534 = vmatprep.subr.bf16.mxu0 0
        %3535 = vmatpush2.bf16.msra.mxu0 0
        %3536 = vmatprep.mubr.bf16.mxu0 0
        %3537 = vmatmul.mubr.bf16.gmra.mxu0 %v3502
        %v3538 = vpop.f32.mrf.mxu0
        %v3539 = vadd.f32 %v3413, %v3538
        %v3540 = vpop.f32.mrf.mxu0
        %v3541 = vpop.f32.mrf.mxu0
        %v3542 = vpop.f32.mrf.mxu0
        %3543 = vdwg.mxu0
        %v3545 = vsel %vm1305, %v3388, 0
        %3547 = vmatprep.subr.bf16.mxu0 0
        %3548 = vmatpush1.bf16.msra.mxu0 0
        %3549 = vmatprep.subr.bf16.mxu0 0
        %3550 = vmatpush1.bf16.msra.mxu0 0
        %3551 = vmatprep.subr.bf16.mxu0 0
        %3552 = vmatpush1.bf16.msra.mxu0 0
        %3553 = vmatprep.subr.bf16.mxu0 0
        %3554 = vmatpush1.bf16.msra.mxu0 0
        %3555 = vmatprep.subr.bf16.mxu0 0
        %3556 = vmatpush1.bf16.msra.mxu0 0
        %3557 = vmatprep.subr.bf16.mxu0 0
        %3558 = vmatpush1.bf16.msra.mxu0 0
        %3559 = vmatprep.subr.bf16.mxu0 0
        %3560 = vmatpush1.bf16.msra.mxu0 0
        %3561 = vmatprep.subr.bf16.mxu0 0
        %3562 = vmatpush1.bf16.msra.mxu0 %v2769
        %3563 = vmatprep.subr.bf16.mxu0 0
        %3564 = vmatpush2.bf16.msra.mxu0 0
        %3565 = vmatprep.subr.bf16.mxu0 0
        %3566 = vmatpush2.bf16.msra.mxu0 0
        %3567 = vmatprep.subr.bf16.mxu0 0
        %3568 = vmatpush2.bf16.msra.mxu0 0
        %3569 = vmatprep.subr.bf16.mxu0 0
        %3570 = vmatpush2.bf16.msra.mxu0 0
        %3571 = vmatprep.subr.bf16.mxu0 0
        %3572 = vmatpush2.bf16.msra.mxu0 0
        %3573 = vmatprep.subr.bf16.mxu0 0
        %3574 = vmatpush2.bf16.msra.mxu0 0
        %3575 = vmatprep.subr.bf16.mxu0 0
        %3576 = vmatpush2.bf16.msra.mxu0 0
        %3577 = vmatprep.subr.bf16.mxu0 0
        %3578 = vmatpush2.bf16.msra.mxu0 0
        %3579 = vmatprep.mubr.bf16.mxu0 0
        %3580 = vmatmul.mubr.bf16.gmra.mxu0 %v3545
        %v3581 = vpop.f32.mrf.mxu0
        %v3582 = vadd.f32 %v3414, %v3581
        %v3583 = vpop.f32.mrf.mxu0
        %v3584 = vpop.f32.mrf.mxu0
        %v3585 = vpop.f32.mrf.mxu0
        %3586 = vdwg.mxu0
        %v3587 = vsel %vm1698, %v3381, 0.0
        %v3588 = vsel %vm1698, %v3382, 0.0
        %v3589 = vsel %vm1698, %v3383, 0.0
        %v3590 = vsel %vm1698, %v3384, 0.0
        %v3591 = vsel %vm1305, %v3587, 0.0
        %3592 = vadd.xlane.f32.xlu0 %v3591
        %v3593 = vpop.xlane.xlu0 %3592
        %v3594 = vsel %vm1305, %v3588, 0.0
        %3595 = vadd.xlane.f32.xlu0 %v3594
        %v3596 = vpop.xlane.xlu0 %3595
        %v3597 = vsel %vm1305, %v3589, 0.0
        %3598 = vadd.xlane.f32.xlu0 %v3597
        %v3599 = vpop.xlane.xlu0 %3598
        %v3600 = vsel %vm1305, %v3590, 0.0
        %3601 = vadd.xlane.f32.xlu0 %v3600
        %v3602 = vpop.xlane.xlu0 %3601
        %v3603 = vlaneseq
        %v3604 = vshrl.u32 %v3603, 7
        %v3605 = vsub.s32 1, %v3604
        %v3606 = vrot.slane %v3389, %v3605
        %v3607 = vmul.f32 %v3593, %v3606
        %v3608 = vmul.f32 %v3596, %v3606
        %v3609 = vmul.f32 %v3599, %v3606
        %v3610 = vmul.f32 %v3602, %v3606
        %v3611 = vadd.f32 %v3453, %v3607
        %v3612 = vadd.f32 %v3496, %v3608
        %v3613 = vadd.f32 %v3539, %v3609
        %v3614 = vadd.f32 %v3582, %v3610
        %v3615 = vsel %vm1724, %v3381, 0.0
        %v3616 = vsel %vm1724, %v3382, 0.0
        %v3617 = vsel %vm1724, %v3383, 0.0
        %v3618 = vsel %vm1724, %v3384, 0.0
        %v3619 = vsel %vm1305, %v3615, 0.0
        %3620 = vadd.xlane.f32.xlu0 %v3619
        %v3621 = vpop.xlane.xlu0 %3620
        %v3622 = vsel %vm1305, %v3616, 0.0
        %3623 = vadd.xlane.f32.xlu0 %v3622
        %v3624 = vpop.xlane.xlu0 %3623
        %v3625 = vsel %vm1305, %v3617, 0.0
        %3626 = vadd.xlane.f32.xlu0 %v3625
        %v3627 = vpop.xlane.xlu0 %3626
        %v3628 = vsel %vm1305, %v3618, 0.0
        %3629 = vadd.xlane.f32.xlu0 %v3628
        %v3630 = vpop.xlane.xlu0 %3629
        %v3631 = vlaneseq
        %v3632 = vshrl.u32 %v3631, 7
        %v3633 = vsub.s32 2, %v3632
        %v3634 = vrot.slane %v3389, %v3633
        %v3635 = vmul.f32 %v3621, %v3634
        %v3636 = vmul.f32 %v3624, %v3634
        %v3637 = vmul.f32 %v3627, %v3634
        %v3638 = vmul.f32 %v3630, %v3634
        %v3639 = vadd.f32 %v3611, %v3635
        %v3640 = vadd.f32 %v3612, %v3636
        %v3641 = vadd.f32 %v3613, %v3637
        %v3642 = vadd.f32 %v3614, %v3638
        %v3643 = vsel %vm1750, %v3381, 0.0
        %v3644 = vsel %vm1750, %v3382, 0.0
        %v3645 = vsel %vm1750, %v3383, 0.0
        %v3646 = vsel %vm1750, %v3384, 0.0
        %v3647 = vsel %vm1305, %v3643, 0.0
        %3648 = vadd.xlane.f32.xlu0 %v3647
        %v3649 = vpop.xlane.xlu0 %3648
        %v3650 = vsel %vm1305, %v3644, 0.0
        %3651 = vadd.xlane.f32.xlu0 %v3650
        %v3652 = vpop.xlane.xlu0 %3651
        %v3653 = vsel %vm1305, %v3645, 0.0
        %3654 = vadd.xlane.f32.xlu0 %v3653
        %v3655 = vpop.xlane.xlu0 %3654
        %v3656 = vsel %vm1305, %v3646, 0.0
        %3657 = vadd.xlane.f32.xlu0 %v3656
        %v3658 = vpop.xlane.xlu0 %3657
        %v3659 = vlaneseq
        %v3660 = vshrl.u32 %v3659, 7
        %v3661 = vsub.s32 3, %v3660
        %v3662 = vrot.slane %v3389, %v3661
        %v3663 = vmul.f32 %v3649, %v3662
        %v3664 = vmul.f32 %v3652, %v3662
        %v3665 = vmul.f32 %v3655, %v3662
        %v3666 = vmul.f32 %v3658, %v3662
        %v3667 = vadd.f32 %v3639, %v3663
        %v3668 = vadd.f32 %v3640, %v3664
        %v3669 = vadd.f32 %v3641, %v3665
        %v3670 = vadd.f32 %v3642, %v3666
        %v3671 = vsel %vm1776, %v3381, 0.0
        %v3672 = vsel %vm1776, %v3382, 0.0
        %v3673 = vsel %vm1776, %v3383, 0.0
        %v3674 = vsel %vm1776, %v3384, 0.0
        %v3675 = vsel %vm1305, %v3671, 0.0
        %3676 = vadd.xlane.f32.xlu0 %v3675
        %v3677 = vpop.xlane.xlu0 %3676
        %v3678 = vsel %vm1305, %v3672, 0.0
        %3679 = vadd.xlane.f32.xlu0 %v3678
        %v3680 = vpop.xlane.xlu0 %3679
        %v3681 = vsel %vm1305, %v3673, 0.0
        %3682 = vadd.xlane.f32.xlu0 %v3681
        %v3683 = vpop.xlane.xlu0 %3682
        %v3684 = vsel %vm1305, %v3674, 0.0
        %3685 = vadd.xlane.f32.xlu0 %v3684
        %v3686 = vpop.xlane.xlu0 %3685
        %v3687 = vlaneseq
        %v3688 = vshrl.u32 %v3687, 7
        %v3689 = vsub.s32 4, %v3688
        %v3690 = vrot.slane %v3389, %v3689
        %v3691 = vmul.f32 %v3677, %v3690
        %v3692 = vmul.f32 %v3680, %v3690
        %v3693 = vmul.f32 %v3683, %v3690
        %v3694 = vmul.f32 %v3686, %v3690
        %v3695 = vadd.f32 %v3667, %v3691
        %v3696 = vadd.f32 %v3668, %v3692
        %v3697 = vadd.f32 %v3669, %v3693
        %v3698 = vadd.f32 %v3670, %v3694
        %v3699 = vsel %vm1802, %v3381, 0.0
        %v3700 = vsel %vm1802, %v3382, 0.0
        %v3701 = vsel %vm1802, %v3383, 0.0
        %v3702 = vsel %vm1802, %v3384, 0.0
        %v3703 = vsel %vm1305, %v3699, 0.0
        %3704 = vadd.xlane.f32.xlu0 %v3703
        %v3705 = vpop.xlane.xlu0 %3704
        %v3706 = vsel %vm1305, %v3700, 0.0
        %3707 = vadd.xlane.f32.xlu0 %v3706
        %v3708 = vpop.xlane.xlu0 %3707
        %v3709 = vsel %vm1305, %v3701, 0.0
        %3710 = vadd.xlane.f32.xlu0 %v3709
        %v3711 = vpop.xlane.xlu0 %3710
        %v3712 = vsel %vm1305, %v3702, 0.0
        %3713 = vadd.xlane.f32.xlu0 %v3712
        %v3714 = vpop.xlane.xlu0 %3713
        %v3715 = vlaneseq
        %v3716 = vshrl.u32 %v3715, 7
        %v3717 = vsub.s32 5, %v3716
        %v3718 = vrot.slane %v3389, %v3717
        %v3719 = vmul.f32 %v3705, %v3718
        %v3720 = vmul.f32 %v3708, %v3718
        %v3721 = vmul.f32 %v3711, %v3718
        %v3722 = vmul.f32 %v3714, %v3718
        %v3723 = vadd.f32 %v3695, %v3719
        %v3724 = vadd.f32 %v3696, %v3720
        %v3725 = vadd.f32 %v3697, %v3721
        %v3726 = vadd.f32 %v3698, %v3722
        %v3727 = vsel %vm1828, %v3381, 0.0
        %v3728 = vsel %vm1828, %v3382, 0.0
        %v3729 = vsel %vm1828, %v3383, 0.0
        %v3730 = vsel %vm1828, %v3384, 0.0
        %v3731 = vsel %vm1305, %v3727, 0.0
        %3732 = vadd.xlane.f32.xlu0 %v3731
        %v3733 = vpop.xlane.xlu0 %3732
        %v3734 = vsel %vm1305, %v3728, 0.0
        %3735 = vadd.xlane.f32.xlu0 %v3734
        %v3736 = vpop.xlane.xlu0 %3735
        %v3737 = vsel %vm1305, %v3729, 0.0
        %3738 = vadd.xlane.f32.xlu0 %v3737
        %v3739 = vpop.xlane.xlu0 %3738
        %v3740 = vsel %vm1305, %v3730, 0.0
        %3741 = vadd.xlane.f32.xlu0 %v3740
        %v3742 = vpop.xlane.xlu0 %3741
        %v3743 = vlaneseq
        %v3744 = vshrl.u32 %v3743, 7
        %v3745 = vsub.s32 6, %v3744
        %v3746 = vrot.slane %v3389, %v3745
        %v3747 = vmul.f32 %v3733, %v3746
        %v3748 = vmul.f32 %v3736, %v3746
        %v3749 = vmul.f32 %v3739, %v3746
        %v3750 = vmul.f32 %v3742, %v3746
        %v3751 = vadd.f32 %v3723, %v3747
        %v3752 = vadd.f32 %v3724, %v3748
        %v3753 = vadd.f32 %v3725, %v3749
        %v3754 = vadd.f32 %v3726, %v3750
        %v3755 = vsel %vm1854, %v3381, 0.0
        %v3756 = vsel %vm1854, %v3382, 0.0
        %v3757 = vsel %vm1854, %v3383, 0.0
        %v3758 = vsel %vm1854, %v3384, 0.0
        %v3759 = vsel %vm1305, %v3755, 0.0
        %3760 = vadd.xlane.f32.xlu0 %v3759
        %v3761 = vpop.xlane.xlu0 %3760
        %v3762 = vsel %vm1305, %v3756, 0.0
        %3763 = vadd.xlane.f32.xlu0 %v3762
        %v3764 = vpop.xlane.xlu0 %3763
        %v3765 = vsel %vm1305, %v3757, 0.0
        %3766 = vadd.xlane.f32.xlu0 %v3765
        %v3767 = vpop.xlane.xlu0 %3766
        %v3768 = vsel %vm1305, %v3758, 0.0
        %3769 = vadd.xlane.f32.xlu0 %v3768
        %v3770 = vpop.xlane.xlu0 %3769
        %v3771 = vlaneseq
        %v3772 = vshrl.u32 %v3771, 7
        %v3773 = vsub.s32 7, %v3772
        %v3774 = vrot.slane %v3389, %v3773
        %v3775 = vmul.f32 %v3761, %v3774
        %v3776 = vmul.f32 %v3764, %v3774
        %v3777 = vmul.f32 %v3767, %v3774
        %v3778 = vmul.f32 %v3770, %v3774
        %v3779 = vadd.f32 %v3751, %v3775
        %v3780 = vadd.f32 %v3752, %v3776
        %v3781 = vadd.f32 %v3753, %v3777
        %v3782 = vadd.f32 %v3754, %v3778
        %v3783 = vsel %vm1880, %v3381, 0.0
        %v3784 = vsel %vm1880, %v3382, 0.0
        %v3785 = vsel %vm1880, %v3383, 0.0
        %v3786 = vsel %vm1880, %v3384, 0.0
        %v3787 = vsel %vm1305, %v3783, 0.0
        %3788 = vadd.xlane.f32.xlu0 %v3787
        %v3789 = vpop.xlane.xlu0 %3788
        %v3790 = vsel %vm1305, %v3784, 0.0
        %3791 = vadd.xlane.f32.xlu0 %v3790
        %v3792 = vpop.xlane.xlu0 %3791
        %v3793 = vsel %vm1305, %v3785, 0.0
        %3794 = vadd.xlane.f32.xlu0 %v3793
        %v3795 = vpop.xlane.xlu0 %3794
        %v3796 = vsel %vm1305, %v3786, 0.0
        %3797 = vadd.xlane.f32.xlu0 %v3796
        %v3798 = vpop.xlane.xlu0 %3797
        %v3799 = vlaneseq
        %v3800 = vshrl.u32 %v3799, 7
        %v3801 = vsub.s32 0, %v3800
        %v3802 = vrot.slane %v3390, %v3801
        %v3803 = vmul.f32 %v3789, %v3802
        %v3804 = vmul.f32 %v3792, %v3802
        %v3805 = vmul.f32 %v3795, %v3802
        %v3806 = vmul.f32 %v3798, %v3802
        %v3807 = vadd.f32 %v3779, %v3803
        %v3808 = vadd.f32 %v3780, %v3804
        %v3809 = vadd.f32 %v3781, %v3805
        %v3810 = vadd.f32 %v3782, %v3806
        %3812 = vrot.lane.b32.xlu0 %v3808, 16
        %v3813 = vpop.permute.xlu0 %3812
        %3816 = vrot.lane.b32.xlu0 %v3809, 32
        %v3817 = vpop.permute.xlu0 %3816
        %3820 = vrot.lane.b32.xlu0 %v3810, 48
        %v3821 = vpop.permute.xlu0 %3820
        %v3823 = vsel %vm1305, %v3807, %v3813
        %v3824 = vsel %vm2392, %v3823, %v3817
        %v3825 = vsel %vm2394, %v3824, %v3821
        %v3826 = vpack.c.bf16 %v3825, %v3825
        %v3827 = vlaneseq
        %v3828 = vshrl.u32 %v3827, 7
        %v3829 = vsub.s32 7, %v3828
        %v3830 = vrot.slane %v1018, %v3829
        %v3839 = vunpack.c.l.b16 %v2517
        %v3840 = vunpack.c.l.b16 %v2518
        %v3841 = vunpack.c.l.b16 %v2519
        %v3842 = vunpack.c.l.b16 %v2520
        %v3843 = vunpack.c.l.b16 %v2521
        %v3844 = vunpack.c.l.b16 %v2522
        %v3845 = vunpack.c.l.b16 %v2523
        %v3846 = vunpack.c.l.b16 %v2524
        %v3847 = vpack.c.b16 %v3840, %v3839
        %v3848 = vpack.c.b16 %v3842, %v3841
        %v3849 = vpack.c.b16 %v3844, %v3843
        %v3850 = vpack.c.b16 %v3846, %v3845
        %v3856 = vsel %vm1085, %v3826, 0
        %3858 = vmatprep.subr.bf16.mxu0 0
        %3859 = vmatpush1.bf16.msra.mxu0 0
        %3860 = vmatprep.subr.bf16.mxu0 0
        %3861 = vmatpush1.bf16.msra.mxu0 0
        %3862 = vmatprep.subr.bf16.mxu0 0
        %3863 = vmatpush1.bf16.msra.mxu0 0
        %3864 = vmatprep.subr.bf16.mxu0 0
        %3865 = vmatpush1.bf16.msra.mxu0 0
        %3866 = vmatprep.subr.bf16.mxu0 0
        %3867 = vmatpush1.bf16.msra.mxu0 %v3850
        %3868 = vmatprep.subr.bf16.mxu0 0
        %3869 = vmatpush1.bf16.msra.mxu0 %v3849
        %3870 = vmatprep.subr.bf16.mxu0 0
        %3871 = vmatpush1.bf16.msra.mxu0 %v3848
        %3872 = vmatprep.subr.bf16.mxu0 0
        %3873 = vmatpush1.bf16.msra.mxu0 %v3847
        %3874 = vmatprep.subr.bf16.mxu0 0
        %3875 = vmatpush2.bf16.msra.mxu0 0
        %3876 = vmatprep.subr.bf16.mxu0 0
        %3877 = vmatpush2.bf16.msra.mxu0 0
        %3878 = vmatprep.subr.bf16.mxu0 0
        %3879 = vmatpush2.bf16.msra.mxu0 0
        %3880 = vmatprep.subr.bf16.mxu0 0
        %3881 = vmatpush2.bf16.msra.mxu0 0
        %3882 = vmatprep.subr.bf16.mxu0 0
        %3883 = vmatpush2.bf16.msra.mxu0 0
        %3884 = vmatprep.subr.bf16.mxu0 0
        %3885 = vmatpush2.bf16.msra.mxu0 0
        %3886 = vmatprep.subr.bf16.mxu0 0
        %3887 = vmatpush2.bf16.msra.mxu0 0
        %3888 = vmatprep.subr.bf16.mxu0 0
        %3889 = vmatpush2.bf16.msra.mxu0 0
        %3890 = vmatprep.mubr.bf16.mxu0 0
        %3891 = vmatmul.mubr.bf16.gmra.mxu0 %v3856
        %v3892 = vpop.f32.mrf.mxu0
        %v3893 = vadd.f32 %v3830, %v3892
        %v3894 = vpop.f32.mrf.mxu0
        %v3895 = vpop.f32.mrf.mxu0
        %v3896 = vpop.f32.mrf.mxu0
        %3897 = vdwg.mxu0
        %v3898 = vadd.f32 %v2492, %v3893
        %v3899 = vsel %vm1085, %v3898, 0.0
        %3900 = vadd.xlane.f32.xlu0 %v3899
        %v3901 = vpop.xlane.xlu0 %3900
        %v3902 = vmul.f32 %v3901, %v2472
        %v3903 = vsub.f32 %v3898, %v3902
        %v3904 = vmul.f32 %v3903, %v3903
        %v3905 = vsel %vm1085, %v3904, 0.0
        %3906 = vadd.xlane.f32.xlu0 %v3905
        %v3907 = vpop.xlane.xlu0 %3906
        %v3908 = vmul.f32 %v3907, %v2472
        %v3909 = vadd.f32 %v3908, 1e-05
        %v3910 = vrsqrt.pop %v3909
        %v3911 = vmul.f32 %v3903, %v3910
        %v3912 = vlaneseq
        %v3913 = vshrl.u32 %v3912, 7
        %v3914 = vsub.s32 3, %v3913
        %v3915 = vrot.slane %v1019, %v3914
        %v3916 = vmul.f32 %v3911, %v3915
        %v3917 = vlaneseq
        %v3918 = vshrl.u32 %v3917, 7
        %v3919 = vsub.s32 4, %v3918
        %v3920 = vrot.slane %v1019, %v3919
        %v3921 = vadd.f32 %v3916, %v3920
        %v3922 = vpack.c.bf16 %v3921, %v3921
        %v3923 = vld [vmem:[#allocation25] sm:$0xf]
        %v3924 = vld [vmem:[#allocation25 + $0x4] sm:$0xf]
        %v3925 = vld [vmem:[#allocation25 + $0x8] sm:$0xf]
        %v3926 = vld [vmem:[#allocation25 + $0xc] sm:$0xf]
        %v3927 = vld [vmem:[#allocation25 + $0x10] sm:$0xf]
        %v3928 = vld [vmem:[#allocation25 + $0x14] sm:$0xf]
        %v3929 = vld [vmem:[#allocation25 + $0x18] sm:$0xf]
        %v3930 = vld [vmem:[#allocation25 + $0x1c] sm:$0xf]
        %v3931 = vld [vmem:[%s20] sm:$0x1]
        %v3933 = vlaneseq
        %v3934 = vshrl.u32 %v3933, 7
        %v3935 = vsub.s32 0, %v3934
        %v3936 = vrot.slane %v3931, %v3935
        %v3946 = vunpack.c.l.b16 %v3923
        %v3947 = vunpack.c.l.b16 %v3924
        %v3948 = vunpack.c.l.b16 %v3925
        %v3949 = vunpack.c.l.b16 %v3926
        %v3950 = vunpack.c.l.b16 %v3927
        %v3951 = vunpack.c.l.b16 %v3928
        %v3952 = vunpack.c.l.b16 %v3929
        %v3953 = vunpack.c.l.b16 %v3930
        %v3954 = vpack.c.b16 %v3947, %v3946
        %v3955 = vpack.c.b16 %v3949, %v3948
        %v3956 = vpack.c.b16 %v3951, %v3950
        %v3957 = vpack.c.b16 %v3953, %v3952
        %v3963 = vsel %vm1085, %v3922, 0
        %3965 = vmatprep.subr.bf16.mxu0 0
        %3966 = vmatpush1.bf16.msra.mxu0 0
        %3967 = vmatprep.subr.bf16.mxu0 0
        %3968 = vmatpush1.bf16.msra.mxu0 0
        %3969 = vmatprep.subr.bf16.mxu0 0
        %3970 = vmatpush1.bf16.msra.mxu0 0
        %3971 = vmatprep.subr.bf16.mxu0 0
        %3972 = vmatpush1.bf16.msra.mxu0 0
        %3973 = vmatprep.subr.bf16.mxu0 0
        %3974 = vmatpush1.bf16.msra.mxu0 %v3957
        %3975 = vmatprep.subr.bf16.mxu0 0
        %3976 = vmatpush1.bf16.msra.mxu0 %v3956
        %3977 = vmatprep.subr.bf16.mxu0 0
        %3978 = vmatpush1.bf16.msra.mxu0 %v3955
        %3979 = vmatprep.subr.bf16.mxu0 0
        %3980 = vmatpush1.bf16.msra.mxu0 %v3954
        %3981 = vmatprep.subr.bf16.mxu0 0
        %3982 = vmatpush2.bf16.msra.mxu0 0
        %3983 = vmatprep.subr.bf16.mxu0 0
        %3984 = vmatpush2.bf16.msra.mxu0 0
        %3985 = vmatprep.subr.bf16.mxu0 0
        %3986 = vmatpush2.bf16.msra.mxu0 0
        %3987 = vmatprep.subr.bf16.mxu0 0
        %3988 = vmatpush2.bf16.msra.mxu0 0
        %3989 = vmatprep.subr.bf16.mxu0 0
        %3990 = vmatpush2.bf16.msra.mxu0 0
        %3991 = vmatprep.subr.bf16.mxu0 0
        %3992 = vmatpush2.bf16.msra.mxu0 0
        %3993 = vmatprep.subr.bf16.mxu0 0
        %3994 = vmatpush2.bf16.msra.mxu0 0
        %3995 = vmatprep.subr.bf16.mxu0 0
        %3996 = vmatpush2.bf16.msra.mxu0 0
        %3997 = vmatprep.mubr.bf16.mxu0 0
        %3998 = vmatmul.mubr.bf16.gmra.mxu0 %v3963
        %v3999 = vpop.f32.mrf.mxu0
        %v4000 = vadd.f32 %v3936, %v3999
        %v4001 = vpop.f32.mrf.mxu0
        %v4002 = vpop.f32.mrf.mxu0
        %v4003 = vpop.f32.mrf.mxu0
        %4004 = vdwg.mxu0
        %v4005 = vmax.f32 %v4000, 0.0
        %v4006 = vpack.c.bf16 %v4005, %v4005
        %v4007 = vld [vmem:[%s18] sm:$0xf]
        %v4008 = vld [vmem:[%s18 + $0x4] sm:$0xf]
        %v4009 = vld [vmem:[%s18 + $0x8] sm:$0xf]
        %v4010 = vld [vmem:[%s18 + $0xc] sm:$0xf]
        %v4011 = vld [vmem:[%s18 + $0x10] sm:$0xf]
        %v4012 = vld [vmem:[%s18 + $0x14] sm:$0xf]
        %v4013 = vld [vmem:[%s18 + $0x18] sm:$0xf]
        %v4014 = vld [vmem:[%s18 + $0x1c] sm:$0xf]
        %v4015 = vld [vmem:[%s18 + $0x20] sm:$0xf]
        %v4016 = vld [vmem:[%s18 + $0x24] sm:$0xf]
        %v4017 = vld [vmem:[%s18 + $0x28] sm:$0xf]
        %v4018 = vld [vmem:[%s18 + $0x2c] sm:$0xf]
        %v4019 = vld [vmem:[%s18 + $0x30] sm:$0xf]
        %v4020 = vld [vmem:[%s18 + $0x34] sm:$0xf]
        %v4021 = vld [vmem:[%s18 + $0x38] sm:$0xf]
        %v4022 = vld [vmem:[%s18 + $0x3c] sm:$0xf]
        %v4023 = vlaneseq
        %v4024 = vshrl.u32 %v4023, 7
        %v4025 = vsub.s32 0, %v4024
        %v4026 = vrot.slane %v1019, %v4025
        %v4043 = vunpack.c.l.b16 %v4007
        %v4044 = vunpack.c.l.b16 %v4008
        %v4045 = vunpack.c.l.b16 %v4009
        %v4046 = vunpack.c.l.b16 %v4010
        %v4047 = vunpack.c.l.b16 %v4011
        %v4048 = vunpack.c.l.b16 %v4012
        %v4049 = vunpack.c.l.b16 %v4013
        %v4050 = vunpack.c.l.b16 %v4014
        %v4051 = vunpack.c.l.b16 %v4015
        %v4052 = vunpack.c.l.b16 %v4016
        %v4053 = vunpack.c.l.b16 %v4017
        %v4054 = vunpack.c.l.b16 %v4018
        %v4055 = vunpack.c.l.b16 %v4019
        %v4056 = vunpack.c.l.b16 %v4020
        %v4057 = vunpack.c.l.b16 %v4021
        %v4058 = vunpack.c.l.b16 %v4022
        %v4059 = vpack.c.b16 %v4044, %v4043
        %v4060 = vpack.c.b16 %v4046, %v4045
        %v4061 = vpack.c.b16 %v4048, %v4047
        %v4062 = vpack.c.b16 %v4050, %v4049
        %v4063 = vpack.c.b16 %v4052, %v4051
        %v4064 = vpack.c.b16 %v4054, %v4053
        %v4065 = vpack.c.b16 %v4056, %v4055
        %v4066 = vpack.c.b16 %v4058, %v4057
        %4075 = vmatprep.subr.bf16.mxu0 0
        %4076 = vmatpush1.bf16.msra.mxu0 %v4066
        %4077 = vmatprep.subr.bf16.mxu0 0
        %4078 = vmatpush1.bf16.msra.mxu0 %v4065
        %4079 = vmatprep.subr.bf16.mxu0 0
        %4080 = vmatpush1.bf16.msra.mxu0 %v4064
        %4081 = vmatprep.subr.bf16.mxu0 0
        %4082 = vmatpush1.bf16.msra.mxu0 %v4063
        %4083 = vmatprep.subr.bf16.mxu0 0
        %4084 = vmatpush1.bf16.msra.mxu0 %v4062
        %4085 = vmatprep.subr.bf16.mxu0 0
        %4086 = vmatpush1.bf16.msra.mxu0 %v4061
        %4087 = vmatprep.subr.bf16.mxu0 0
        %4088 = vmatpush1.bf16.msra.mxu0 %v4060
        %4089 = vmatprep.subr.bf16.mxu0 0
        %4090 = vmatpush1.bf16.msra.mxu0 %v4059
        %4091 = vmatprep.subr.bf16.mxu0 0
        %4092 = vmatpush2.bf16.msra.mxu0 0
        %4093 = vmatprep.subr.bf16.mxu0 0
        %4094 = vmatpush2.bf16.msra.mxu0 0
        %4095 = vmatprep.subr.bf16.mxu0 0
        %4096 = vmatpush2.bf16.msra.mxu0 0
        %4097 = vmatprep.subr.bf16.mxu0 0
        %4098 = vmatpush2.bf16.msra.mxu0 0
        %4099 = vmatprep.subr.bf16.mxu0 0
        %4100 = vmatpush2.bf16.msra.mxu0 0
        %4101 = vmatprep.subr.bf16.mxu0 0
        %4102 = vmatpush2.bf16.msra.mxu0 0
        %4103 = vmatprep.subr.bf16.mxu0 0
        %4104 = vmatpush2.bf16.msra.mxu0 0
        %4105 = vmatprep.subr.bf16.mxu0 0
        %4106 = vmatpush2.bf16.msra.mxu0 0
        %4107 = vmatprep.mubr.bf16.mxu0 0
        %4108 = vmatmul.mubr.bf16.gmra.mxu0 %v4006
        %v4109 = vpop.f32.mrf.mxu0
        %v4110 = vadd.f32 %v4026, %v4109
        %v4111 = vpop.f32.mrf.mxu0
        %v4112 = vpop.f32.mrf.mxu0
        %v4113 = vpop.f32.mrf.mxu0
        %4114 = vdwg.mxu0
        %v4115 = vadd.f32 %v3921, %v4110
        %v4116 = vsel %vm1085, %v4115, 0.0
        %4117 = vadd.xlane.f32.xlu0 %v4116
        %v4118 = vpop.xlane.xlu0 %4117
        %v4119 = vmul.f32 %v4118, %v2472
        %v4120 = vsub.f32 %v4115, %v4119
        %v4121 = vmul.f32 %v4120, %v4120
        %v4122 = vsel %vm1085, %v4121, 0.0
        %4123 = vadd.xlane.f32.xlu0 %v4122
        %v4124 = vpop.xlane.xlu0 %4123
        %v4125 = vmul.f32 %v4124, %v2472
        %v4126 = vadd.f32 %v4125, 1e-05
        %v4127 = vrsqrt.pop %v4126
        %v4128 = vmul.f32 %v4120, %v4127
        %v4129 = vlaneseq
        %v4130 = vshrl.u32 %v4129, 7
        %v4131 = vsub.s32 5, %v4130
        %v4132 = vrot.slane %v1019, %v4131
        %v4133 = vmul.f32 %v4128, %v4132
        %v4134 = vlaneseq
        %v4135 = vshrl.u32 %v4134, 7
        %v4136 = vsub.s32 6, %v4135
        %v4137 = vrot.slane %v1019, %v4136
        %v4138 = vadd.f32 %v4133, %v4137
        %4139 = vst.msk [vmem:[%s986] sm:$0xff] %vm1085, %v4138
        %s4140 = sand.u32 %s542, 1
        %s4141 = scalar_lea.sflag [#allocation4], %s4140
        %s4142 = sand.u32 %s542, 1
        %s4143 = smul.addr %s4142, 8
        %s4144 = scalar_lea.vmem [#allocation28], %s4143
        // Predicated region
        $region169: #{tpu_custom_call.1} parent=103 // pred_check
          %p4145 = pneg %p552
        $region170: #{tpu_custom_call.1} parent=103 // pred_check_branch
          %4147 = sbr.rel (%p4145) target = $region172
        $region171: #{tpu_custom_call.1} parent=103 // pred_region
          %s4149 = ssub.s32 128, 128
          %4150 = vsyncadd %s4141, %s4149
          %s4151 = smul.addr %s52, 2
          %s4152 = sadd.s32 %s53, %s4151
          %s4153 = smul.addr %s4152, 128
          %s4154 = scalar_lea.hbm %s21, %s4153
          %s4156 = sshll.u32 %s4144, 4
          %s4157 = int_to_ptr.vmem [resolvable:$true] %s4156
          %4159 = dma.vmem_to_hbm [thread:$0]  %s4157, 128, %s4154, %s4141
        $region172: #{tpu_custom_call.1} parent=103 // pred_fallthru
          _
      $region104: #{tpu_custom_call.1} parent=5 // pred_fallthru
        _
      %p4160 = scmp.le.s32.totalorder 2, %s43
      // Predicated region
      $region173: #{tpu_custom_call.1} parent=5 // pred_check
        %p4161 = pneg %p4160
      $region174: #{tpu_custom_call.1} parent=5 // pred_check_branch
        %4163 = sbr.rel (%p4161) target = $region176
      $region175: #{tpu_custom_call.1} parent=5 // pred_region
        %s4164 = ssub.s32 %s43, 2
        // Predicated region
        $region177: #{tpu_custom_call.1} parent=175 // pred_check
          %p4165 = pneg %p558
        $region178: #{tpu_custom_call.1} parent=175 // pred_check_branch
          %4167 = sbr.rel (%p4165) target = $region180
        $region179: #{tpu_custom_call.1} parent=175 // pred_region
          %s4168 = sand.u32 %s543, 1
          %s4169 = scalar_lea.sflag [#allocation4], %s4168
          %s4170 = sand.u32 %s543, 1
          %s4171 = smul.addr %s4170, 8
          %s4172 = scalar_lea.vmem [#allocation28], %s4171
          %4173 = dma.done %s4169, 128
        $region180: #{tpu_custom_call.1} parent=175 // pred_fallthru
          _
      $region176: #{tpu_custom_call.1} parent=5 // pred_fallthru
        _
    $region6: #{tpu_custom_call.1} parent=1 // loop_footer
      %s47 = sadd.s32 1, %s43
    $region7: #{tpu_custom_call.1} parent=1 // loop_footer_branch
      %42 = sbr.rel target = $region3
    $region8: #{tpu_custom_call.1} parent=1 // loop_exit
      _
    %4174 = vsyncpa [#allocation3], 1
    %s4175 = scalar_lea.sflag [#allocation3], 1
    %4176 = vsyncpa %s4175, 1
    %4177 = vsyncpa [#allocation6], 1
    %s4178 = scalar_lea.sflag [#allocation6], 1
    %4179 = vsyncpa %s4178, 1
    %4180 = vsyncpa [#allocation9], 1
    %4181 = vsyncpa [#allocation12], 1
    %4182 = vsyncpa [#allocation15], 1
    %4183 = vsyncpa [#allocation18], 1
    %4184 = vsyncpa [#allocation21], 1
    %4185 = vsyncpa [#allocation24], 1
    %4186 = vsyncpa [#allocation27], 1
    %4187 = vsyncpa [#allocation4], 1
    %s4188 = scalar_lea.sflag [#allocation4], 1
    %4189 = vsyncpa %s4188, 1

</llo_original>
